<compile_context>
chip_gen: v5e
topology: v5e:2x2
jax: 0.10.0
libtpu: 0.0.40
codegen_flags: <defaults>
</compile_context>

<pallas_src>
import functools
import math

import numpy as np
import jax
import jax.numpy as jnp
from jax.experimental import pallas as pl
from jax.experimental.pallas import tpu as pltpu

_BF16 = jnp.bfloat16


# ----------------------------------------------------------------------------
# In-kernel helpers (traced inside Pallas kernels)
# ----------------------------------------------------------------------------

def _layernorm(x, g, b, eps):
    mu = jnp.mean(x, axis=-1, keepdims=True)
    xc = x - mu
    var = jnp.mean(xc * xc, axis=-1, keepdims=True)
    return xc * jax.lax.rsqrt(var + eps) * g + b


def _gelu_tanh(x):
    # tanh-form GELU: the transcendental lands on the EUP slot instead of a
    # long VALU polynomial on the (S, 4D) hidden activation.
    # TODO(synk): nn.GELU() default is the exact erf form; the tanh
    # approximation deviates by O(1e-3) on large |x| (fine for inference).
    c = 0.7978845608028654  # sqrt(2/pi)
    return 0.5 * x * (1.0 + jnp.tanh(c * (x + 0.044715 * x * x * x)))


def _mha_attend(q, k, v, out_w, out_b, num_heads):
    """All-heads softmax attention + ONE fused output projection.

    q: (Sq, D) f32, k/v: (Sk, D) f32, out_w: (D, D) bf16, out_b: (1, D) f32.
    Per-head attention outputs are concatenated along lanes and projected with
    a single full-contraction (Sq, D) @ (D, D) matmul, which equals
    concat(heads) @ W_out and keeps the MXU contraction dim at D (not dh).
    """
    D = q.shape[-1]
    dh = D // num_heads
    scale = 1.0 / math.sqrt(dh)
    q16, k16, v16 = q.astype(_BF16), k.astype(_BF16), v.astype(_BF16)
    heads = []
    for h in range(num_heads):
        sl = slice(h * dh, (h + 1) * dh)
        # scores = qh @ kh^T  (softmax math stays f32)
        s = jax.lax.dot_general(q16[:, sl], k16[:, sl], (((1,), (1,)), ((), ())),
                                preferred_element_type=jnp.float32) * scale
        m = jnp.max(s, axis=-1, keepdims=True)
        p = jnp.exp(s - m)
        p = p * pl.reciprocal(jnp.sum(p, axis=-1, keepdims=True), approx=True)
        heads.append(jnp.dot(p.astype(_BF16), v16[:, sl],
                             preferred_element_type=jnp.float32))
    attn = jnp.concatenate(heads, axis=-1)                        # (Sq, D)
    return jnp.dot(attn.astype(_BF16), out_w,
                   preferred_element_type=jnp.float32) + out_b


# ----------------------------------------------------------------------------
# Fused Pallas kernels
# ----------------------------------------------------------------------------

def _embed_kernel(patch_ref, w_ref, b_ref, pos_ref, o_ref):
    # patches (Np, C*ph*pw) @ (C*ph*pw, D) + bias + positional embedding
    p = patch_ref[0].astype(_BF16)
    o_ref[0] = (jnp.dot(p, w_ref[...], preferred_element_type=jnp.float32)
                + b_ref[...] + pos_ref[...])


def _encoder_layer_kernel(x_ref,
                          ln1_g, ln1_b, qkv_w, qkv_b, out_w, out_b,
                          ln2_g, ln2_b, fc1_w, fc1_b, fc2_w, fc2_b,
                          o_ref, *, num_heads, eps):
    D = x_ref.shape[-1]
    x = x_ref[0]
    # --- attention block (pre-LN) ---
    h = _layernorm(x, ln1_g[...], ln1_b[...], eps)
    qkv = jnp.dot(h.astype(_BF16), qkv_w[...],
                  preferred_element_type=jnp.float32) + qkv_b[...]
    x = x + _mha_attend(qkv[:, :D], qkv[:, D:2 * D], qkv[:, 2 * D:],
                        out_w[...], out_b[...], num_heads)
    # --- MLP block (GELU in-kernel, hidden activation never leaves VMEM) ---
    h = _layernorm(x, ln2_g[...], ln2_b[...], eps)
    h = jnp.dot(h.astype(_BF16), fc1_w[...],
                preferred_element_type=jnp.float32) + fc1_b[...]
    h = _gelu_tanh(h)
    h = jnp.dot(h.astype(_BF16), fc2_w[...],
                preferred_element_type=jnp.float32) + fc2_b[...]
    o_ref[0] = x + h


def _decoder_layer_kernel(x_ref, mem_ref,
                          ln1_g, ln1_b, cq_w, cq_b, ckv_w, ckv_b, co_w, co_b,
                          ln2_g, ln2_b, sqkv_w, sqkv_b, so_w, so_b,
                          ln3_g, ln3_b, fc1_w, fc1_b, fc2_w, fc2_b,
                          o_ref, *, num_heads, eps):
    D = x_ref.shape[-1]
    x = x_ref[0]
    mem = mem_ref[0]
    # cross-attention FIRST (matches the reference module): query = LN1(x),
    # key/value = encoder memory.
    h = _layernorm(x, ln1_g[...], ln1_b[...], eps)
    q = jnp.dot(h.astype(_BF16), cq_w[...],
                preferred_element_type=jnp.float32) + cq_b[...]
    kv = jnp.dot(mem.astype(_BF16), ckv_w[...],
                 preferred_element_type=jnp.float32) + ckv_b[...]
    x = x + _mha_attend(q, kv[:, :D], kv[:, D:], co_w[...], co_b[...], num_heads)
    # self-attention
    h = _layernorm(x, ln2_g[...], ln2_b[...], eps)
    qkv = jnp.dot(h.astype(_BF16), sqkv_w[...],
                  preferred_element_type=jnp.float32) + sqkv_b[...]
    x = x + _mha_attend(qkv[:, :D], qkv[:, D:2 * D], qkv[:, 2 * D:],
                        so_w[...], so_b[...], num_heads)
    # MLP
    h = _layernorm(x, ln3_g[...], ln3_b[...], eps)
    h = jnp.dot(h.astype(_BF16), fc1_w[...],
                preferred_element_type=jnp.float32) + fc1_b[...]
    h = _gelu_tanh(h)
    h = jnp.dot(h.astype(_BF16), fc2_w[...],
                preferred_element_type=jnp.float32) + fc2_b[...]
    o_ref[0] = x + h


def _pred_head_kernel(dec_ref, pw_ref, pb_ref, o_ref):
    # decoder_pred, computed transposed: logits^T (nc, Np)
    d = dec_ref[0].astype(_BF16)                                  # (Np, D)
    o_ref[0] = (jax.lax.dot_general(pw_ref[...], d, (((1,), (1,)), ((), ())),
                                    preferred_element_type=jnp.float32)
                + pb_ref[...])


def _upsample_kernel(l_ref, ah_ref, awt_ref, o_ref):
    # Separable bilinear upsample: out[c] = A_h @ L[c] @ A_w^T, batched over
    # classes with fully-batched dot_generals (no dense Kronecker matrix).
    L = l_ref[0]                                                  # (nc, Hp, Wp)
    nc, Hp, Wp = L.shape
    H = ah_ref.shape[0]
    W = awt_ref.shape[1]
    ah = jnp.broadcast_to(ah_ref[...][None], (nc, H, Hp))
    t = jnp.einsum('chk,ckw->chw', ah, L,
                   preferred_element_type=jnp.float32)            # (nc, H, Wp)
    awt = jnp.broadcast_to(awt_ref[...][None], (nc, Wp, W))
    o_ref[0] = jnp.einsum('chw,cwj->chj', t, awt,
                          preferred_element_type=jnp.float32)     # (nc, H, W)


# ----------------------------------------------------------------------------
# pallas_call wrapper: grid over batch ("parallel"), weights broadcast and
# single-buffered (their block index never changes across the grid).
# ----------------------------------------------------------------------------

def _per_batch_call(kernel, batched_args, shared_args, out_shape):
    B = batched_args[0].shape[0]

    def batch_spec(a):
        nrest = a.ndim - 1
        return pl.BlockSpec((1,) + a.shape[1:], lambda b: (b,) + (0,) * nrest)

    def weight_spec(a):
        nd = a.ndim
        # grid-invariant broadcast operand -> one VMEM buffer, fetched once
        return pl.BlockSpec(a.shape, lambda b: (0,) * nd,
                            pipeline_mode=pl.Buffered(1))

    in_specs = ([batch_spec(a) for a in batched_args]
                + [weight_spec(a) for a in shared_args])
    out_rest = out_shape[1:]
    n_out_rest = len(out_rest)
    return pl.pallas_call(
        kernel,
        out_shape=jax.ShapeDtypeStruct(out_shape, jnp.float32),
        grid=(B,),
        in_specs=in_specs,
        out_specs=pl.BlockSpec((1,) + out_rest,
                               lambda b: (b,) + (0,) * n_out_rest),
        compiler_params=pltpu.CompilerParams(
            dimension_semantics=("parallel",),
            vmem_limit_bytes=48 * 1024 * 1024),
    )(*batched_args, *shared_args)


# ----------------------------------------------------------------------------
# Bilinear interpolation matrix (F.interpolate, mode='bilinear',
# align_corners=False)
# ----------------------------------------------------------------------------

def bilinear_matrix(out_size, in_size):
    A = np.zeros((out_size, in_size), dtype=np.float32)
    scale = in_size / out_size
    for i in range(out_size):
        src = max((i + 0.5) * scale - 0.5, 0.0)
        i0 = min(int(np.floor(src)), in_size - 1)
        i1 = min(i0 + 1, in_size - 1)
        w1 = src - i0
        A[i, i0] += 1.0 - w1
        A[i, i1] += w1
    return A


# ----------------------------------------------------------------------------
# Forward pass
# ----------------------------------------------------------------------------

def segmentation_transformer_forward(params, x, cfg):
    B, C, H, W = x.shape
    ph, pw = cfg["patch_size"]
    D = cfg["embed_dim"]
    nc = cfg["num_classes"]
    nh = cfg["num_heads"]
    Hp = (H - ph) // ph + 1          # stride == patch_size (module default)
    Wp = (W - pw) // pw + 1
    Np = Hp * Wp

    # --- patch extraction (non-overlapping conv == patch gather + matmul) ---
    # TODO(synk): requires H, W divisible by the patch size; a Conv2d with a
    # spatial remainder would silently drop the trailing rows/cols.
    patches = (x.reshape(B, C, Hp, ph, Wp, pw)
                .transpose(0, 2, 4, 1, 3, 5)
                .reshape(B, Np, C * ph * pw))

    # --- fused patch-embed (+bias +pos-embedding) kernel ---
    tokens = _per_batch_call(
        _embed_kernel, [patches],
        [params["patch_w"], params["patch_b"], params["pos_embedding"]],
        (B, Np, D))
    # cls-token prepend kept in XLA: the (B,1,D) concat is cheaper / safer
    # than the sublane-unaligned in-kernel row store it would replace.
    cls = jnp.broadcast_to(params["cls_token"][None], (B, 1, D))
    seq = jnp.concatenate([cls, tokens], axis=1)                  # (B, Np+1, D)

    # --- encoder stack: one fused kernel per layer ---
    enc_kernel = functools.partial(_encoder_layer_kernel, num_heads=nh, eps=1e-5)
    for lp in params["encoders"]:
        seq = _per_batch_call(
            enc_kernel, [seq],
            [lp["ln1_g"], lp["ln1_b"], lp["qkv_w"], lp["qkv_b"],
             lp["out_w"], lp["out_b"],
             lp["ln2_g"], lp["ln2_b"], lp["fc1_w"], lp["fc1_b"],
             lp["fc2_w"], lp["fc2_b"]],
            seq.shape)
    memory = seq

    # --- decoder stack (cls token dropped from the decoder input) ---
    dec = memory[:, 1:, :]
    dec_kernel = functools.partial(_decoder_layer_kernel, num_heads=nh, eps=1e-5)
    for lp in params["decoders"]:
        dec = _per_batch_call(
            dec_kernel, [dec, memory],
            [lp["ln1_g"], lp["ln1_b"], lp["cq_w"], lp["cq_b"],
             lp["ckv_w"], lp["ckv_b"], lp["co_w"], lp["co_b"],
             lp["ln2_g"], lp["ln2_b"], lp["sqkv_w"], lp["sqkv_b"],
             lp["so_w"], lp["so_b"],
             lp["ln3_g"], lp["ln3_b"], lp["fc1_w"], lp["fc1_b"],
             lp["fc2_w"], lp["fc2_b"]],
            dec.shape)

    # --- prediction head (logits^T, lane dim = Np) ---
    logits_t = _per_batch_call(
        _pred_head_kernel, [dec],
        [params["pred_w_t"], params["pred_b"]],
        (B, nc, Np))

    # --- separable bilinear upsample (out = A_h @ L @ A_w^T per class) ---
    A_h = jnp.asarray(bilinear_matrix(H, Hp))                     # (H, Hp) f32
    A_w_t = jnp.asarray(bilinear_matrix(W, Wp).T)                 # (Wp, W) f32
    logits4 = logits_t.reshape(B, nc, Hp, Wp)                     # free in XLA
    out = _per_batch_call(
        _upsample_kernel, [logits4], [A_h, A_w_t], (B, nc, H, W))
    return {"out": out}


# ----------------------------------------------------------------------------
# Deterministic parameter initialization (shapes follow the module's __init__,
# stored directly in the layouts / dtypes the fused kernels consume:
# matmul weights in bf16, biases / LN params / embeddings in f32)
# ----------------------------------------------------------------------------

def init_params(key, cfg):
    D = cfg["embed_dim"]
    C = cfg["in_channels"]
    ph, pw = cfg["patch_size"]
    hidden = int(D * cfg["mlp_ratio"])
    nc = cfg["num_classes"]
    Np = cfg["num_patches"]

    keys = iter(jax.random.split(key, 256))

    def xavier(fan_in, fan_out, shape):
        bound = math.sqrt(6.0 / (fan_in + fan_out))
        w = jax.random.uniform(next(keys), shape, jnp.float32, -bound, bound)
        return w.astype(_BF16)

    def ln():
        return jnp.ones((1, D), jnp.float32), jnp.zeros((1, D), jnp.float32)

    def enc_layer():
        g1, b1 = ln()
        g2, b2 = ln()
        return {
            "ln1_g": g1, "ln1_b": b1,
            # MHA in_proj (3D, D) stored pre-transposed as (D, 3D)
            "qkv_w": xavier(D, 3 * D, (D, 3 * D)),
            "qkv_b": jnp.zeros((1, 3 * D), jnp.float32),
            "out_w": xavier(D, D, (D, D)),
            "out_b": jnp.zeros((1, D), jnp.float32),
            "ln2_g": g2, "ln2_b": b2,
            "fc1_w": xavier(D, hidden, (D, hidden)),
            "fc1_b": jnp.zeros((1, hidden), jnp.float32),
            "fc2_w": xavier(hidden, D, (hidden, D)),
            "fc2_b": jnp.zeros((1, D), jnp.float32),
        }

    def dec_layer():
        g1, b1 = ln()
        g2, b2 = ln()
        g3, b3 = ln()
        return {
            "ln1_g": g1, "ln1_b": b1,
            # cross-attention: Q from decoder tokens, K/V from encoder memory
            "cq_w": xavier(D, D, (D, D)),
            "cq_b": jnp.zeros((1, D), jnp.float32),
            "ckv_w": xavier(D, 2 * D, (D, 2 * D)),
            "ckv_b": jnp.zeros((1, 2 * D), jnp.float32),
            "co_w": xavier(D, D, (D, D)),
            "co_b": jnp.zeros((1, D), jnp.float32),
            "ln2_g": g2, "ln2_b": b2,
            "sqkv_w": xavier(D, 3 * D, (D, 3 * D)),
            "sqkv_b": jnp.zeros((1, 3 * D), jnp.float32),
            "so_w": xavier(D, D, (D, D)),
            "so_b": jnp.zeros((1, D), jnp.float32),
            "ln3_g": g3, "ln3_b": b3,
            "fc1_w": xavier(D, hidden, (D, hidden)),
            "fc1_b": jnp.zeros((1, hidden), jnp.float32),
            "fc2_w": xavier(hidden, D, (hidden, D)),
            "fc2_b": jnp.zeros((1, D), jnp.float32),
        }

    ck = C * ph * pw
    params = {
        # conv weight (D, C, ph, pw) flattened & transposed to (C*ph*pw, D)
        "patch_w": xavier(ck, D * ph * pw, (ck, D)),
        "patch_b": jnp.zeros((1, D), jnp.float32),
        # the module initializes these as zeros (nn.Parameter(torch.zeros(...)))
        "pos_embedding": jnp.zeros((Np, D), jnp.float32),
        "cls_token": jnp.zeros((1, D), jnp.float32),
        # prediction head stored transposed: (nc, D) / (nc, 1)
        "pred_w_t": xavier(D, nc, (nc, D)),
        "pred_b": jnp.zeros((nc, 1), jnp.float32),
        "encoders": [enc_layer() for _ in range(cfg["depth"])],
        "decoders": [dec_layer() for _ in range(cfg["decoder_depth"])],
    }
    return params


# ----------------------------------------------------------------------------
# Demo
# ----------------------------------------------------------------------------

if __name__ == "__main__":
    CFG = {
        "img_size": 16,
        "patch_size": (4, 4),
        "in_channels": 3,
        "num_classes": 8,
        "embed_dim": 32,
        "depth": 2,
        "decoder_depth": 1,
        "num_heads": 4,
        "mlp_ratio": 4.0,
    }
    Hp = (CFG["img_size"] - CFG["patch_size"][0]) // CFG["patch_size"][0] + 1
    Wp = (CFG["img_size"] - CFG["patch_size"][1]) // CFG["patch_size"][1] + 1
    CFG["num_patches"] = Hp * Wp

    root = jax.random.PRNGKey(0)
    k_param, k_input = jax.random.split(root)
    params = init_params(k_param, CFG)

    B = 2
    x = jax.random.normal(
        k_input, (B, CFG["in_channels"], CFG["img_size"], CFG["img_size"]),
        jnp.float32)

    fwd = jax.jit(lambda p, xx: segmentation_transformer_forward(p, xx, CFG))
    out = fwd(params, x)
    jax.block_until_ready(out)

    assert out["out"].shape == (B, CFG["num_classes"], CFG["img_size"], CFG["img_size"])
    assert bool(jnp.all(jnp.isfinite(out["out"])))
    print("KERNEL_OK")
</pallas_src>

<mosaic_0001>
module attributes {stable_mosaic.version = 11 : i64} {
  func.func @_embed_kernel(%arg0: i32, %arg1: memref<1x16x48xf32, #tpu.memory_space<vmem>>, %arg2: memref<48x32xbf16, #tpu.memory_space<vmem>>, %arg3: memref<1x32xf32, #tpu.memory_space<vmem>>, %arg4: memref<16x32xf32, #tpu.memory_space<vmem>>, %arg5: memref<1x16x32xf32, #tpu.memory_space<vmem>>) attributes {dimension_semantics = [#tpu.dimension_semantics<parallel>], iteration_bounds = array<i64: 2>, scalar_prefetch = 0 : i64, scratch_operands = 0 : i64, tpu.core_type = #tpu.core_type<tc>, window_params = [{transform_indices = @transform_0, window_bounds = array<i64: 1, 16, 48>}, {pipeline_mode = #tpu.pipeline_mode<synchronous>, transform_indices = @transform_1, window_bounds = array<i64: 48, 32>}, {pipeline_mode = #tpu.pipeline_mode<synchronous>, transform_indices = @transform_2, window_bounds = array<i64: 1, 32>}, {pipeline_mode = #tpu.pipeline_mode<synchronous>, transform_indices = @transform_3, window_bounds = array<i64: 16, 32>}, {transform_indices = @transform_4, window_bounds = array<i64: 1, 16, 32>}]} {
    %c0 = arith.constant 0 : index
    %c0_0 = arith.constant 0 : index
    %c0_1 = arith.constant 0 : index
    %0 = vector.load %arg1[%c0, %c0_0, %c0_1] : memref<1x16x48xf32, #tpu.memory_space<vmem>>, vector<1x16x48xf32>
    %1 = vector.shape_cast %0 : vector<1x16x48xf32> to vector<16x48xf32>
    %2 = arith.truncf %1 : vector<16x48xf32> to vector<16x48xbf16>
    %c0_2 = arith.constant 0 : index
    %c0_3 = arith.constant 0 : index
    %3 = vector.load %arg2[%c0_2, %c0_3] : memref<48x32xbf16, #tpu.memory_space<vmem>>, vector<48x32xbf16>
    %cst = arith.constant dense<0.000000e+00> : vector<16x32xf32>
    %4 = tpu.matmul %2, %3, %cst {dimension_numbers = #tpu.dot_dimension_numbers<[1], [0], [0], [1], [0, 0, 1, 1], [], []>} : vector<16x48xbf16>, vector<48x32xbf16>, vector<16x32xf32> -> vector<16x32xf32>
    %c0_4 = arith.constant 0 : index
    %c0_5 = arith.constant 0 : index
    %5 = vector.load %arg3[%c0_4, %c0_5] : memref<1x32xf32, #tpu.memory_space<vmem>>, vector<1x32xf32>
    %6 = vector.broadcast %5 : vector<1x32xf32> to vector<16x32xf32>
    %7 = arith.addf %4, %6 : vector<16x32xf32>
    %c0_6 = arith.constant 0 : index
    %c0_7 = arith.constant 0 : index
    %8 = vector.load %arg4[%c0_6, %c0_7] : memref<16x32xf32, #tpu.memory_space<vmem>>, vector<16x32xf32>
    %9 = arith.addf %7, %8 : vector<16x32xf32>
    %c0_8 = arith.constant 0 : index
    %c0_9 = arith.constant 0 : index
    %c0_10 = arith.constant 0 : index
    %10 = vector.load %arg5[%c0_8, %c0_9, %c0_10] : memref<1x16x32xf32, #tpu.memory_space<vmem>>, vector<1x16x32xf32>
    %11 = vector.shape_cast %10 : vector<1x16x32xf32> to vector<16x32xf32>
    %12 = vector.shape_cast %9 : vector<16x32xf32> to vector<1x16x32xf32>
    tpu.vector_store %arg5[%c0_8, %c0_9, %c0_10], %12 {strides = array<i32>} : memref<1x16x32xf32, #tpu.memory_space<vmem>>, vector<1x16x32xf32>,
    return
  }
  func.func @transform_0(%arg0: i32) -> (i32, i32, i32) {
    %c0_i32 = arith.constant 0 : i32
    %c0_i32_0 = arith.constant 0 : i32
    %c0_i32_1 = arith.constant 0 : i32
    return %arg0, %c0_i32, %c0_i32_0 : i32, i32, i32
  }
  func.func @transform_1(%arg0: i32) -> (i32, i32) {
    %c0_i32 = arith.constant 0 : i32
    %c0_i32_0 = arith.constant 0 : i32
    %c0_i32_1 = arith.constant 0 : i32
    return %c0_i32, %c0_i32_0 : i32, i32
  }
  func.func @transform_2(%arg0: i32) -> (i32, i32) {
    %c0_i32 = arith.constant 0 : i32
    %c0_i32_0 = arith.constant 0 : i32
    %c0_i32_1 = arith.constant 0 : i32
    return %c0_i32, %c0_i32_0 : i32, i32
  }
  func.func @transform_3(%arg0: i32) -> (i32, i32) {
    %c0_i32 = arith.constant 0 : i32
    %c0_i32_0 = arith.constant 0 : i32
    %c0_i32_1 = arith.constant 0 : i32
    return %c0_i32, %c0_i32_0 : i32, i32
  }
  func.func @transform_4(%arg0: i32) -> (i32, i32, i32) {
    %c0_i32 = arith.constant 0 : i32
    %c0_i32_0 = arith.constant 0 : i32
    %c0_i32_1 = arith.constant 0 : i32
    return %arg0, %c0_i32, %c0_i32_0 : i32, i32, i32
  }
}

module attributes {stable_mosaic.version = 11 : i64} {
  func.func @_decoder_layer_kernel(%arg0: i32, %arg1: memref<1x16x32xf32, #tpu.memory_space<vmem>>, %arg2: memref<1x17x32xf32, #tpu.memory_space<vmem>>, %arg3: memref<1x32xf32, #tpu.memory_space<vmem>>, %arg4: memref<1x32xf32, #tpu.memory_space<vmem>>, %arg5: memref<32x32xbf16, #tpu.memory_space<vmem>>, %arg6: memref<1x32xf32, #tpu.memory_space<vmem>>, %arg7: memref<32x64xbf16, #tpu.memory_space<vmem>>, %arg8: memref<1x64xf32, #tpu.memory_space<vmem>>, %arg9: memref<32x32xbf16, #tpu.memory_space<vmem>>, %arg10: memref<1x32xf32, #tpu.memory_space<vmem>>, %arg11: memref<1x32xf32, #tpu.memory_space<vmem>>, %arg12: memref<1x32xf32, #tpu.memory_space<vmem>>, %arg13: memref<32x96xbf16, #tpu.memory_space<vmem>>, %arg14: memref<1x96xf32, #tpu.memory_space<vmem>>, %arg15: memref<32x32xbf16, #tpu.memory_space<vmem>>, %arg16: memref<1x32xf32, #tpu.memory_space<vmem>>, %arg17: memref<1x32xf32, #tpu.memory_space<vmem>>, %arg18: memref<1x32xf32, #tpu.memory_space<vmem>>, %arg19: memref<32x128xbf16, #tpu.memory_space<vmem>>, %arg20: memref<1x128xf32, #tpu.memory_space<vmem>>, %arg21: memref<128x32xbf16, #tpu.memory_space<vmem>>, %arg22: memref<1x32xf32, #tpu.memory_space<vmem>>, %arg23: memref<1x16x32xf32, #tpu.memory_space<vmem>>) attributes {dimension_semantics = [#tpu.dimension_semantics<parallel>], iteration_bounds = array<i64: 2>, scalar_prefetch = 0 : i64, scratch_operands = 0 : i64, tpu.core_type = #tpu.core_type<tc>, window_params = [{transform_indices = @transform_0, window_bounds = array<i64: 1, 16, 32>}, {transform_indices = @transform_1, window_bounds = array<i64: 1, 17, 32>}, {pipeline_mode = #tpu.pipeline_mode<synchronous>, transform_indices = @transform_2, window_bounds = array<i64: 1, 32>}, {pipeline_mode = #tpu.pipeline_mode<synchronous>, transform_indices = @transform_3, window_bounds = array<i64: 1, 32>}, {pipeline_mode = #tpu.pipeline_mode<synchronous>, transform_indices = @transform_4, window_bounds = array<i64: 32, 32>}, {pipeline_mode = #tpu.pipeline_mode<synchronous>, transform_indices = @transform_5, window_bounds = array<i64: 1, 32>}, {pipeline_mode = #tpu.pipeline_mode<synchronous>, transform_indices = @transform_6, window_bounds = array<i64: 32, 64>}, {pipeline_mode = #tpu.pipeline_mode<synchronous>, transform_indices = @transform_7, window_bounds = array<i64: 1, 64>}, {pipeline_mode = #tpu.pipeline_mode<synchronous>, transform_indices = @transform_8, window_bounds = array<i64: 32, 32>}, {pipeline_mode = #tpu.pipeline_mode<synchronous>, transform_indices = @transform_9, window_bounds = array<i64: 1, 32>}, {pipeline_mode = #tpu.pipeline_mode<synchronous>, transform_indices = @transform_10, window_bounds = array<i64: 1, 32>}, {pipeline_mode = #tpu.pipeline_mode<synchronous>, transform_indices = @transform_11, window_bounds = array<i64: 1, 32>}, {pipeline_mode = #tpu.pipeline_mode<synchronous>, transform_indices = @transform_12, window_bounds = array<i64: 32, 96>}, {pipeline_mode = #tpu.pipeline_mode<synchronous>, transform_indices = @transform_13, window_bounds = array<i64: 1, 96>}, {pipeline_mode = #tpu.pipeline_mode<synchronous>, transform_indices = @transform_14, window_bounds = array<i64: 32, 32>}, {pipeline_mode = #tpu.pipeline_mode<synchronous>, transform_indices = @transform_15, window_bounds = array<i64: 1, 32>}, {pipeline_mode = #tpu.pipeline_mode<synchronous>, transform_indices = @transform_16, window_bounds = array<i64: 1, 32>}, {pipeline_mode = #tpu.pipeline_mode<synchronous>, transform_indices = @transform_17, window_bounds = array<i64: 1, 32>}, {pipeline_mode = #tpu.pipeline_mode<synchronous>, transform_indices = @transform_18, window_bounds = array<i64: 32, 128>}, {pipeline_mode = #tpu.pipeline_mode<synchronous>, transform_indices = @transform_19, window_bounds = array<i64: 1, 128>}, {pipeline_mode = #tpu.pipeline_mode<synchronous>, transform_indices = @transform_20, window_bounds = array<i64: 128, 32>}, {pipeline_mode = #tpu.pipeline_mode<synchronous>, transform_indices = @transform_21, window_bounds = array<i64: 1, 32>}, {transform_indices = @transform_22, window_bounds = array<i64: 1, 16, 32>}]} {
    %c0 = arith.constant 0 : index
    %c0_0 = arith.constant 0 : index
    %c0_1 = arith.constant 0 : index
    %0 = vector.load %arg1[%c0, %c0_0, %c0_1] : memref<1x16x32xf32, #tpu.memory_space<vmem>>, vector<1x16x32xf32>
    %1 = vector.shape_cast %0 : vector<1x16x32xf32> to vector<16x32xf32>
    %c0_2 = arith.constant 0 : index
    %c0_3 = arith.constant 0 : index
    %c0_4 = arith.constant 0 : index
    %2 = vector.load %arg2[%c0_2, %c0_3, %c0_4] : memref<1x17x32xf32, #tpu.memory_space<vmem>>, vector<1x17x32xf32>
    %3 = vector.shape_cast %2 : vector<1x17x32xf32> to vector<17x32xf32>
    %c0_5 = arith.constant 0 : index
    %c0_6 = arith.constant 0 : index
    %4 = vector.load %arg3[%c0_5, %c0_6] : memref<1x32xf32, #tpu.memory_space<vmem>>, vector<1x32xf32>
    %c0_7 = arith.constant 0 : index
    %c0_8 = arith.constant 0 : index
    %5 = vector.load %arg4[%c0_7, %c0_8] : memref<1x32xf32, #tpu.memory_space<vmem>>, vector<1x32xf32>
    %cst = arith.constant dense<0.000000e+00> : vector<16xf32>
    %6 = vector.multi_reduction <add>, %1, %cst [1] : vector<16x32xf32> to vector<16xf32>
    %7 = vector.shape_cast %6 : vector<16xf32> to vector<16x1xf32>
    %cst_9 = arith.constant 3.200000e+01 : f32
    %8 = vector.broadcast %cst_9 : f32 to vector<16x1xf32>
    %9 = arith.divf %7, %8 : vector<16x1xf32>
    %10 = vector.broadcast %9 : vector<16x1xf32> to vector<16x32xf32>
    %11 = arith.subf %1, %10 : vector<16x32xf32>
    %12 = arith.mulf %11, %11 : vector<16x32xf32>
    %cst_10 = arith.constant dense<0.000000e+00> : vector<16xf32>
    %13 = vector.multi_reduction <add>, %12, %cst_10 [1] : vector<16x32xf32> to vector<16xf32>
    %14 = vector.shape_cast %13 : vector<16xf32> to vector<16x1xf32>
    %cst_11 = arith.constant 3.200000e+01 : f32
    %15 = vector.broadcast %cst_11 : f32 to vector<16x1xf32>
    %16 = arith.divf %14, %15 : vector<16x1xf32>
    %cst_12 = arith.constant 9.99999974E-6 : f32
    %17 = vector.broadcast %cst_12 : f32 to vector<16x1xf32>
    %18 = arith.addf %16, %17 : vector<16x1xf32>
    %19 = math.rsqrt %18 : vector<16x1xf32>
    %20 = vector.broadcast %19 : vector<16x1xf32> to vector<16x32xf32>
    %21 = arith.mulf %11, %20 : vector<16x32xf32>
    %22 = vector.broadcast %4 : vector<1x32xf32> to vector<16x32xf32>
    %23 = arith.mulf %21, %22 : vector<16x32xf32>
    %24 = vector.broadcast %5 : vector<1x32xf32> to vector<16x32xf32>
    %25 = arith.addf %23, %24 : vector<16x32xf32>
    %26 = arith.truncf %25 : vector<16x32xf32> to vector<16x32xbf16>
    %c0_13 = arith.constant 0 : index
    %c0_14 = arith.constant 0 : index
    %27 = vector.load %arg5[%c0_13, %c0_14] : memref<32x32xbf16, #tpu.memory_space<vmem>>, vector<32x32xbf16>
    %cst_15 = arith.constant dense<0.000000e+00> : vector<16x32xf32>
    %28 = tpu.matmul %26, %27, %cst_15 {dimension_numbers = #tpu.dot_dimension_numbers<[1], [0], [0], [1], [0, 0, 1, 1], [], []>} : vector<16x32xbf16>, vector<32x32xbf16>, vector<16x32xf32> -> vector<16x32xf32>
    %c0_16 = arith.constant 0 : index
    %c0_17 = arith.constant 0 : index
    %29 = vector.load %arg6[%c0_16, %c0_17] : memref<1x32xf32, #tpu.memory_space<vmem>>, vector<1x32xf32>
    %30 = vector.broadcast %29 : vector<1x32xf32> to vector<16x32xf32>
    %31 = arith.addf %28, %30 : vector<16x32xf32>
    %32 = arith.truncf %3 : vector<17x32xf32> to vector<17x32xbf16>
    %c0_18 = arith.constant 0 : index
    %c0_19 = arith.constant 0 : index
    %33 = vector.load %arg7[%c0_18, %c0_19] : memref<32x64xbf16, #tpu.memory_space<vmem>>, vector<32x64xbf16>
    %cst_20 = arith.constant dense<0.000000e+00> : vector<17x64xf32>
    %34 = tpu.matmul %32, %33, %cst_20 {dimension_numbers = #tpu.dot_dimension_numbers<[1], [0], [0], [1], [0, 0, 1, 1], [], []>} : vector<17x32xbf16>, vector<32x64xbf16>, vector<17x64xf32> -> vector<17x64xf32>
    %c0_21 = arith.constant 0 : index
    %c0_22 = arith.constant 0 : index
    %35 = vector.load %arg8[%c0_21, %c0_22] : memref<1x64xf32, #tpu.memory_space<vmem>>, vector<1x64xf32>
    %36 = vector.broadcast %35 : vector<1x64xf32> to vector<17x64xf32>
    %37 = arith.addf %34, %36 : vector<17x64xf32>
    %38 = vector.extract_strided_slice %37 {offsets = [0, 0], sizes = [17, 32], strides = [1, 1]} : vector<17x64xf32> to vector<17x32xf32>
    %39 = vector.extract_strided_slice %37 {offsets = [0, 32], sizes = [17, 32], strides = [1, 1]} : vector<17x64xf32> to vector<17x32xf32>
    %c0_23 = arith.constant 0 : index
    %c0_24 = arith.constant 0 : index
    %40 = vector.load %arg9[%c0_23, %c0_24] : memref<32x32xbf16, #tpu.memory_space<vmem>>, vector<32x32xbf16>
    %c0_25 = arith.constant 0 : index
    %c0_26 = arith.constant 0 : index
    %41 = vector.load %arg10[%c0_25, %c0_26] : memref<1x32xf32, #tpu.memory_space<vmem>>, vector<1x32xf32>
    %42 = arith.truncf %31 : vector<16x32xf32> to vector<16x32xbf16>
    %43 = arith.truncf %38 : vector<17x32xf32> to vector<17x32xbf16>
    %44 = arith.truncf %39 : vector<17x32xf32> to vector<17x32xbf16>
    %45 = vector.extract_strided_slice %42 {offsets = [0, 0], sizes = [16, 8], strides = [1, 1]} : vector<16x32xbf16> to vector<16x8xbf16>
    %46 = vector.extract_strided_slice %43 {offsets = [0, 0], sizes = [17, 8], strides = [1, 1]} : vector<17x32xbf16> to vector<17x8xbf16>
    %cst_27 = arith.constant dense<0.000000e+00> : vector<16x17xf32>
    %47 = tpu.matmul %45, %46, %cst_27 {dimension_numbers = #tpu.dot_dimension_numbers<[1], [1], [0], [0], [0, 0, 1, 0], [], []>} : vector<16x8xbf16>, vector<17x8xbf16>, vector<16x17xf32> -> vector<16x17xf32>
    %cst_28 = arith.constant 0.353553385 : f32
    %48 = vector.broadcast %cst_28 : f32 to vector<16x17xf32>
    %49 = arith.mulf %47, %48 : vector<16x17xf32>
    %cst_29 = arith.constant dense<0xFF800000> : vector<16xf32>
    %50 = vector.multi_reduction <maximumf>, %49, %cst_29 [1] : vector<16x17xf32> to vector<16xf32>
    %51 = vector.shape_cast %50 : vector<16xf32> to vector<16x1xf32>
    %52 = vector.broadcast %51 : vector<16x1xf32> to vector<16x17xf32>
    %53 = arith.subf %49, %52 : vector<16x17xf32>
    %54 = math.exp %53 : vector<16x17xf32>
    %cst_30 = arith.constant dense<0.000000e+00> : vector<16xf32>
    %55 = vector.multi_reduction <add>, %54, %cst_30 [1] : vector<16x17xf32> to vector<16xf32>
    %56 = vector.shape_cast %55 : vector<16xf32> to vector<16x1xf32>
    %57 = tpu.reciprocal %56 {approx = true} : vector<16x1xf32> -> vector<16x1xf32>
    %58 = vector.broadcast %57 : vector<16x1xf32> to vector<16x17xf32>
    %59 = arith.mulf %54, %58 : vector<16x17xf32>
    %60 = arith.truncf %59 : vector<16x17xf32> to vector<16x17xbf16>
    %61 = vector.extract_strided_slice %44 {offsets = [0, 0], sizes = [17, 8], strides = [1, 1]} : vector<17x32xbf16> to vector<17x8xbf16>
    %cst_31 = arith.constant dense<0.000000e+00> : vector<16x8xf32>
    %62 = tpu.matmul %60, %61, %cst_31 {dimension_numbers = #tpu.dot_dimension_numbers<[1], [0], [0], [1], [0, 0, 1, 1], [], []>} : vector<16x17xbf16>, vector<17x8xbf16>, vector<16x8xf32> -> vector<16x8xf32>
    %63 = vector.extract_strided_slice %42 {offsets = [0, 8], sizes = [16, 8], strides = [1, 1]} : vector<16x32xbf16> to vector<16x8xbf16>
    %64 = vector.extract_strided_slice %43 {offsets = [0, 8], sizes = [17, 8], strides = [1, 1]} : vector<17x32xbf16> to vector<17x8xbf16>
    %cst_32 = arith.constant dense<0.000000e+00> : vector<16x17xf32>
    %65 = tpu.matmul %63, %64, %cst_32 {dimension_numbers = #tpu.dot_dimension_numbers<[1], [1], [0], [0], [0, 0, 1, 0], [], []>} : vector<16x8xbf16>, vector<17x8xbf16>, vector<16x17xf32> -> vector<16x17xf32>
    %cst_33 = arith.constant 0.353553385 : f32
    %66 = vector.broadcast %cst_33 : f32 to vector<16x17xf32>
    %67 = arith.mulf %65, %66 : vector<16x17xf32>
    %cst_34 = arith.constant dense<0xFF800000> : vector<16xf32>
    %68 = vector.multi_reduction <maximumf>, %67, %cst_34 [1] : vector<16x17xf32> to vector<16xf32>
    %69 = vector.shape_cast %68 : vector<16xf32> to vector<16x1xf32>
    %70 = vector.broadcast %69 : vector<16x1xf32> to vector<16x17xf32>
    %71 = arith.subf %67, %70 : vector<16x17xf32>
    %72 = math.exp %71 : vector<16x17xf32>
    %cst_35 = arith.constant dense<0.000000e+00> : vector<16xf32>
    %73 = vector.multi_reduction <add>, %72, %cst_35 [1] : vector<16x17xf32> to vector<16xf32>
    %74 = vector.shape_cast %73 : vector<16xf32> to vector<16x1xf32>
    %75 = tpu.reciprocal %74 {approx = true} : vector<16x1xf32> -> vector<16x1xf32>
    %76 = vector.broadcast %75 : vector<16x1xf32> to vector<16x17xf32>
    %77 = arith.mulf %72, %76 : vector<16x17xf32>
    %78 = arith.truncf %77 : vector<16x17xf32> to vector<16x17xbf16>
    %79 = vector.extract_strided_slice %44 {offsets = [0, 8], sizes = [17, 8], strides = [1, 1]} : vector<17x32xbf16> to vector<17x8xbf16>
    %cst_36 = arith.constant dense<0.000000e+00> : vector<16x8xf32>
    %80 = tpu.matmul %78, %79, %cst_36 {dimension_numbers = #tpu.dot_dimension_numbers<[1], [0], [0], [1], [0, 0, 1, 1], [], []>} : vector<16x17xbf16>, vector<17x8xbf16>, vector<16x8xf32> -> vector<16x8xf32>
    %81 = vector.extract_strided_slice %42 {offsets = [0, 16], sizes = [16, 8], strides = [1, 1]} : vector<16x32xbf16> to vector<16x8xbf16>
    %82 = vector.extract_strided_slice %43 {offsets = [0, 16], sizes = [17, 8], strides = [1, 1]} : vector<17x32xbf16> to vector<17x8xbf16>
    %cst_37 = arith.constant dense<0.000000e+00> : vector<16x17xf32>
    %83 = tpu.matmul %81, %82, %cst_37 {dimension_numbers = #tpu.dot_dimension_numbers<[1], [1], [0], [0], [0, 0, 1, 0], [], []>} : vector<16x8xbf16>, vector<17x8xbf16>, vector<16x17xf32> -> vector<16x17xf32>
    %cst_38 = arith.constant 0.353553385 : f32
    %84 = vector.broadcast %cst_38 : f32 to vector<16x17xf32>
    %85 = arith.mulf %83, %84 : vector<16x17xf32>
    %cst_39 = arith.constant dense<0xFF800000> : vector<16xf32>
    %86 = vector.multi_reduction <maximumf>, %85, %cst_39 [1] : vector<16x17xf32> to vector<16xf32>
    %87 = vector.shape_cast %86 : vector<16xf32> to vector<16x1xf32>
    %88 = vector.broadcast %87 : vector<16x1xf32> to vector<16x17xf32>
    %89 = arith.subf %85, %88 : vector<16x17xf32>
    %90 = math.exp %89 : vector<16x17xf32>
    %cst_40 = arith.constant dense<0.000000e+00> : vector<16xf32>
    %91 = vector.multi_reduction <add>, %90, %cst_40 [1] : vector<16x17xf32> to vector<16xf32>
    %92 = vector.shape_cast %91 : vector<16xf32> to vector<16x1xf32>
    %93 = tpu.reciprocal %92 {approx = true} : vector<16x1xf32> -> vector<16x1xf32>
    %94 = vector.broadcast %93 : vector<16x1xf32> to vector<16x17xf32>
    %95 = arith.mulf %90, %94 : vector<16x17xf32>
    %96 = arith.truncf %95 : vector<16x17xf32> to vector<16x17xbf16>
    %97 = vector.extract_strided_slice %44 {offsets = [0, 16], sizes = [17, 8], strides = [1, 1]} : vector<17x32xbf16> to vector<17x8xbf16>
    %cst_41 = arith.constant dense<0.000000e+00> : vector<16x8xf32>
    %98 = tpu.matmul %96, %97, %cst_41 {dimension_numbers = #tpu.dot_dimension_numbers<[1], [0], [0], [1], [0, 0, 1, 1], [], []>} : vector<16x17xbf16>, vector<17x8xbf16>, vector<16x8xf32> -> vector<16x8xf32>
    %99 = vector.extract_strided_slice %42 {offsets = [0, 24], sizes = [16, 8], strides = [1, 1]} : vector<16x32xbf16> to vector<16x8xbf16>
    %100 = vector.extract_strided_slice %43 {offsets = [0, 24], sizes = [17, 8], strides = [1, 1]} : vector<17x32xbf16> to vector<17x8xbf16>
    %cst_42 = arith.constant dense<0.000000e+00> : vector<16x17xf32>
    %101 = tpu.matmul %99, %100, %cst_42 {dimension_numbers = #tpu.dot_dimension_numbers<[1], [1], [0], [0], [0, 0, 1, 0], [], []>} : vector<16x8xbf16>, vector<17x8xbf16>, vector<16x17xf32> -> vector<16x17xf32>
    %cst_43 = arith.constant 0.353553385 : f32
    %102 = vector.broadcast %cst_43 : f32 to vector<16x17xf32>
    %103 = arith.mulf %101, %102 : vector<16x17xf32>
    %cst_44 = arith.constant dense<0xFF800000> : vector<16xf32>
    %104 = vector.multi_reduction <maximumf>, %103, %cst_44 [1] : vector<16x17xf32> to vector<16xf32>
    %105 = vector.shape_cast %104 : vector<16xf32> to vector<16x1xf32>
    %106 = vector.broadcast %105 : vector<16x1xf32> to vector<16x17xf32>
    %107 = arith.subf %103, %106 : vector<16x17xf32>
    %108 = math.exp %107 : vector<16x17xf32>
    %cst_45 = arith.constant dense<0.000000e+00> : vector<16xf32>
    %109 = vector.multi_reduction <add>, %108, %cst_45 [1] : vector<16x17xf32> to vector<16xf32>
    %110 = vector.shape_cast %109 : vector<16xf32> to vector<16x1xf32>
    %111 = tpu.reciprocal %110 {approx = true} : vector<16x1xf32> -> vector<16x1xf32>
    %112 = vector.broadcast %111 : vector<16x1xf32> to vector<16x17xf32>
    %113 = arith.mulf %108, %112 : vector<16x17xf32>
    %114 = arith.truncf %113 : vector<16x17xf32> to vector<16x17xbf16>
    %115 = vector.extract_strided_slice %44 {offsets = [0, 24], sizes = [17, 8], strides = [1, 1]} : vector<17x32xbf16> to vector<17x8xbf16>
    %cst_46 = arith.constant dense<0.000000e+00> : vector<16x8xf32>
    %116 = tpu.matmul %114, %115, %cst_46 {dimension_numbers = #tpu.dot_dimension_numbers<[1], [0], [0], [1], [0, 0, 1, 1], [], []>} : vector<16x17xbf16>, vector<17x8xbf16>, vector<16x8xf32> -> vector<16x8xf32>
    %117 = tpu.concatenate %62, %80, %98, %116 in 1 : vector<16x8xf32>, vector<16x8xf32>, vector<16x8xf32>, vector<16x8xf32> -> vector<16x32xf32>
    %118 = arith.truncf %117 : vector<16x32xf32> to vector<16x32xbf16>
    %cst_47 = arith.constant dense<0.000000e+00> : vector<16x32xf32>
    %119 = tpu.matmul %118, %40, %cst_47 {dimension_numbers = #tpu.dot_dimension_numbers<[1], [0], [0], [1], [0, 0, 1, 1], [], []>} : vector<16x32xbf16>, vector<32x32xbf16>, vector<16x32xf32> -> vector<16x32xf32>
    %120 = vector.broadcast %41 : vector<1x32xf32> to vector<16x32xf32>
    %121 = arith.addf %119, %120 : vector<16x32xf32>
    %122 = arith.addf %1, %121 : vector<16x32xf32>
    %c0_48 = arith.constant 0 : index
    %c0_49 = arith.constant 0 : index
    %123 = vector.load %arg11[%c0_48, %c0_49] : memref<1x32xf32, #tpu.memory_space<vmem>>, vector<1x32xf32>
    %c0_50 = arith.constant 0 : index
    %c0_51 = arith.constant 0 : index
    %124 = vector.load %arg12[%c0_50, %c0_51] : memref<1x32xf32, #tpu.memory_space<vmem>>, vector<1x32xf32>
    %cst_52 = arith.constant dense<0.000000e+00> : vector<16xf32>
    %125 = vector.multi_reduction <add>, %122, %cst_52 [1] : vector<16x32xf32> to vector<16xf32>
    %126 = vector.shape_cast %125 : vector<16xf32> to vector<16x1xf32>
    %cst_53 = arith.constant 3.200000e+01 : f32
    %127 = vector.broadcast %cst_53 : f32 to vector<16x1xf32>
    %128 = arith.divf %126, %127 : vector<16x1xf32>
    %129 = vector.broadcast %128 : vector<16x1xf32> to vector<16x32xf32>
    %130 = arith.subf %122, %129 : vector<16x32xf32>
    %131 = arith.mulf %130, %130 : vector<16x32xf32>
    %cst_54 = arith.constant dense<0.000000e+00> : vector<16xf32>
    %132 = vector.multi_reduction <add>, %131, %cst_54 [1] : vector<16x32xf32> to vector<16xf32>
    %133 = vector.shape_cast %132 : vector<16xf32> to vector<16x1xf32>
    %cst_55 = arith.constant 3.200000e+01 : f32
    %134 = vector.broadcast %cst_55 : f32 to vector<16x1xf32>
    %135 = arith.divf %133, %134 : vector<16x1xf32>
    %cst_56 = arith.constant 9.99999974E-6 : f32
    %136 = vector.broadcast %cst_56 : f32 to vector<16x1xf32>
    %137 = arith.addf %135, %136 : vector<16x1xf32>
    %138 = math.rsqrt %137 : vector<16x1xf32>
    %139 = vector.broadcast %138 : vector<16x1xf32> to vector<16x32xf32>
    %140 = arith.mulf %130, %139 : vector<16x32xf32>
    %141 = vector.broadcast %123 : vector<1x32xf32> to vector<16x32xf32>
    %142 = arith.mulf %140, %141 : vector<16x32xf32>
    %143 = vector.broadcast %124 : vector<1x32xf32> to vector<16x32xf32>
    %144 = arith.addf %142, %143 : vector<16x32xf32>
    %145 = arith.truncf %144 : vector<16x32xf32> to vector<16x32xbf16>
    %c0_57 = arith.constant 0 : index
    %c0_58 = arith.constant 0 : index
    %146 = vector.load %arg13[%c0_57, %c0_58] : memref<32x96xbf16, #tpu.memory_space<vmem>>, vector<32x96xbf16>
    %cst_59 = arith.constant dense<0.000000e+00> : vector<16x96xf32>
    %147 = tpu.matmul %145, %146, %cst_59 {dimension_numbers = #tpu.dot_dimension_numbers<[1], [0], [0], [1], [0, 0, 1, 1], [], []>} : vector<16x32xbf16>, vector<32x96xbf16>, vector<16x96xf32> -> vector<16x96xf32>
    %c0_60 = arith.constant 0 : index
    %c0_61 = arith.constant 0 : index
    %148 = vector.load %arg14[%c0_60, %c0_61] : memref<1x96xf32, #tpu.memory_space<vmem>>, vector<1x96xf32>
    %149 = vector.broadcast %148 : vector<1x96xf32> to vector<16x96xf32>
    %150 = arith.addf %147, %149 : vector<16x96xf32>
    %151 = vector.extract_strided_slice %150 {offsets = [0, 0], sizes = [16, 32], strides = [1, 1]} : vector<16x96xf32> to vector<16x32xf32>
    %152 = vector.extract_strided_slice %150 {offsets = [0, 32], sizes = [16, 32], strides = [1, 1]} : vector<16x96xf32> to vector<16x32xf32>
    %153 = vector.extract_strided_slice %150 {offsets = [0, 64], sizes = [16, 32], strides = [1, 1]} : vector<16x96xf32> to vector<16x32xf32>
    %c0_62 = arith.constant 0 : index
    %c0_63 = arith.constant 0 : index
    %154 = vector.load %arg15[%c0_62, %c0_63] : memref<32x32xbf16, #tpu.memory_space<vmem>>, vector<32x32xbf16>
    %c0_64 = arith.constant 0 : index
    %c0_65 = arith.constant 0 : index
    %155 = vector.load %arg16[%c0_64, %c0_65] : memref<1x32xf32, #tpu.memory_space<vmem>>, vector<1x32xf32>
    %156 = arith.truncf %151 : vector<16x32xf32> to vector<16x32xbf16>
    %157 = arith.truncf %152 : vector<16x32xf32> to vector<16x32xbf16>
    %158 = arith.truncf %153 : vector<16x32xf32> to vector<16x32xbf16>
    %159 = vector.extract_strided_slice %156 {offsets = [0, 0], sizes = [16, 8], strides = [1, 1]} : vector<16x32xbf16> to vector<16x8xbf16>
    %160 = vector.extract_strided_slice %157 {offsets = [0, 0], sizes = [16, 8], strides = [1, 1]} : vector<16x32xbf16> to vector<16x8xbf16>
    %cst_66 = arith.constant dense<0.000000e+00> : vector<16x16xf32>
    %161 = tpu.matmul %159, %160, %cst_66 {dimension_numbers = #tpu.dot_dimension_numbers<[1], [1], [0], [0], [0, 0, 1, 0], [], []>} : vector<16x8xbf16>, vector<16x8xbf16>, vector<16x16xf32> -> vector<16x16xf32>
    %cst_67 = arith.constant 0.353553385 : f32
    %162 = vector.broadcast %cst_67 : f32 to vector<16x16xf32>
    %163 = arith.mulf %161, %162 : vector<16x16xf32>
    %cst_68 = arith.constant dense<0xFF800000> : vector<16xf32>
    %164 = vector.multi_reduction <maximumf>, %163, %cst_68 [1] : vector<16x16xf32> to vector<16xf32>
    %165 = vector.shape_cast %164 : vector<16xf32> to vector<16x1xf32>
    %166 = vector.broadcast %165 : vector<16x1xf32> to vector<16x16xf32>
    %167 = arith.subf %163, %166 : vector<16x16xf32>
    %168 = math.exp %167 : vector<16x16xf32>
    %cst_69 = arith.constant dense<0.000000e+00> : vector<16xf32>
    %169 = vector.multi_reduction <add>, %168, %cst_69 [1] : vector<16x16xf32> to vector<16xf32>
    %170 = vector.shape_cast %169 : vector<16xf32> to vector<16x1xf32>
    %171 = tpu.reciprocal %170 {approx = true} : vector<16x1xf32> -> vector<16x1xf32>
    %172 = vector.broadcast %171 : vector<16x1xf32> to vector<16x16xf32>
    %173 = arith.mulf %168, %172 : vector<16x16xf32>
    %174 = arith.truncf %173 : vector<16x16xf32> to vector<16x16xbf16>
    %175 = vector.extract_strided_slice %158 {offsets = [0, 0], sizes = [16, 8], strides = [1, 1]} : vector<16x32xbf16> to vector<16x8xbf16>
    %cst_70 = arith.constant dense<0.000000e+00> : vector<16x8xf32>
    %176 = tpu.matmul %174, %175, %cst_70 {dimension_numbers = #tpu.dot_dimension_numbers<[1], [0], [0], [1], [0, 0, 1, 1], [], []>} : vector<16x16xbf16>, vector<16x8xbf16>, vector<16x8xf32> -> vector<16x8xf32>
    %177 = vector.extract_strided_slice %156 {offsets = [0, 8], sizes = [16, 8], strides = [1, 1]} : vector<16x32xbf16> to vector<16x8xbf16>
    %178 = vector.extract_strided_slice %157 {offsets = [0, 8], sizes = [16, 8], strides = [1, 1]} : vector<16x32xbf16> to vector<16x8xbf16>
    %cst_71 = arith.constant dense<0.000000e+00> : vector<16x16xf32>
    %179 = tpu.matmul %177, %178, %cst_71 {dimension_numbers = #tpu.dot_dimension_numbers<[1], [1], [0], [0], [0, 0, 1, 0], [], []>} : vector<16x8xbf16>, vector<16x8xbf16>, vector<16x16xf32> -> vector<16x16xf32>
    %cst_72 = arith.constant 0.353553385 : f32
    %180 = vector.broadcast %cst_72 : f32 to vector<16x16xf32>
    %181 = arith.mulf %179, %180 : vector<16x16xf32>
    %cst_73 = arith.constant dense<0xFF800000> : vector<16xf32>
    %182 = vector.multi_reduction <maximumf>, %181, %cst_73 [1] : vector<16x16xf32> to vector<16xf32>
    %183 = vector.shape_cast %182 : vector<16xf32> to vector<16x1xf32>
    %184 = vector.broadcast %183 : vector<16x1xf32> to vector<16x16xf32>
    %185 = arith.subf %181, %184 : vector<16x16xf32>
    %186 = math.exp %185 : vector<16x16xf32>
    %cst_74 = arith.constant dense<0.000000e+00> : vector<16xf32>
    %187 = vector.multi_reduction <add>, %186, %cst_74 [1] : vector<16x16xf32> to vector<16xf32>
    %188 = vector.shape_cast %187 : vector<16xf32> to vector<16x1xf32>
    %189 = tpu.reciprocal %188 {approx = true} : vector<16x1xf32> -> vector<16x1xf32>
    %190 = vector.broadcast %189 : vector<16x1xf32> to vector<16x16xf32>
    %191 = arith.mulf %186, %190 : vector<16x16xf32>
    %192 = arith.truncf %191 : vector<16x16xf32> to vector<16x16xbf16>
    %193 = vector.extract_strided_slice %158 {offsets = [0, 8], sizes = [16, 8], strides = [1, 1]} : vector<16x32xbf16> to vector<16x8xbf16>
    %cst_75 = arith.constant dense<0.000000e+00> : vector<16x8xf32>
    %194 = tpu.matmul %192, %193, %cst_75 {dimension_numbers = #tpu.dot_dimension_numbers<[1], [0], [0], [1], [0, 0, 1, 1], [], []>} : vector<16x16xbf16>, vector<16x8xbf16>, vector<16x8xf32> -> vector<16x8xf32>
    %195 = vector.extract_strided_slice %156 {offsets = [0, 16], sizes = [16, 8], strides = [1, 1]} : vector<16x32xbf16> to vector<16x8xbf16>
    %196 = vector.extract_strided_slice %157 {offsets = [0, 16], sizes = [16, 8], strides = [1, 1]} : vector<16x32xbf16> to vector<16x8xbf16>
    %cst_76 = arith.constant dense<0.000000e+00> : vector<16x16xf32>
    %197 = tpu.matmul %195, %196, %cst_76 {dimension_numbers = #tpu.dot_dimension_numbers<[1], [1], [0], [0], [0, 0, 1, 0], [], []>} : vector<16x8xbf16>, vector<16x8xbf16>, vector<16x16xf32> -> vector<16x16xf32>
    %cst_77 = arith.constant 0.353553385 : f32
    %198 = vector.broadcast %cst_77 : f32 to vector<16x16xf32>
    %199 = arith.mulf %197, %198 : vector<16x16xf32>
    %cst_78 = arith.constant dense<0xFF800000> : vector<16xf32>
    %200 = vector.multi_reduction <maximumf>, %199, %cst_78 [1] : vector<16x16xf32> to vector<16xf32>
    %201 = vector.shape_cast %200 : vector<16xf32> to vector<16x1xf32>
    %202 = vector.broadcast %201 : vector<16x1xf32> to vector<16x16xf32>
    %203 = arith.subf %199, %202 : vector<16x16xf32>
    %204 = math.exp %203 : vector<16x16xf32>
    %cst_79 = arith.constant dense<0.000000e+00> : vector<16xf32>
    %205 = vector.multi_reduction <add>, %204, %cst_79 [1] : vector<16x16xf32> to vector<16xf32>
    %206 = vector.shape_cast %205 : vector<16xf32> to vector<16x1xf32>
    %207 = tpu.reciprocal %206 {approx = true} : vector<16x1xf32> -> vector<16x1xf32>
    %208 = vector.broadcast %207 : vector<16x1xf32> to vector<16x16xf32>
    %209 = arith.mulf %204, %208 : vector<16x16xf32>
    %210 = arith.truncf %209 : vector<16x16xf32> to vector<16x16xbf16>
    %211 = vector.extract_strided_slice %158 {offsets = [0, 16], sizes = [16, 8], strides = [1, 1]} : vector<16x32xbf16> to vector<16x8xbf16>
    %cst_80 = arith.constant dense<0.000000e+00> : vector<16x8xf32>
    %212 = tpu.matmul %210, %211, %cst_80 {dimension_numbers = #tpu.dot_dimension_numbers<[1], [0], [0], [1], [0, 0, 1, 1], [], []>} : vector<16x16xbf16>, vector<16x8xbf16>, vector<16x8xf32> -> vector<16x8xf32>
    %213 = vector.extract_strided_slice %156 {offsets = [0, 24], sizes = [16, 8], strides = [1, 1]} : vector<16x32xbf16> to vector<16x8xbf16>
    %214 = vector.extract_strided_slice %157 {offsets = [0, 24], sizes = [16, 8], strides = [1, 1]} : vector<16x32xbf16> to vector<16x8xbf16>
    %cst_81 = arith.constant dense<0.000000e+00> : vector<16x16xf32>
    %215 = tpu.matmul %213, %214, %cst_81 {dimension_numbers = #tpu.dot_dimension_numbers<[1], [1], [0], [0], [0, 0, 1, 0], [], []>} : vector<16x8xbf16>, vector<16x8xbf16>, vector<16x16xf32> -> vector<16x16xf32>
    %cst_82 = arith.constant 0.353553385 : f32
    %216 = vector.broadcast %cst_82 : f32 to vector<16x16xf32>
    %217 = arith.mulf %215, %216 : vector<16x16xf32>
    %cst_83 = arith.constant dense<0xFF800000> : vector<16xf32>
    %218 = vector.multi_reduction <maximumf>, %217, %cst_83 [1] : vector<16x16xf32> to vector<16xf32>
    %219 = vector.shape_cast %218 : vector<16xf32> to vector<16x1xf32>
    %220 = vector.broadcast %219 : vector<16x1xf32> to vector<16x16xf32>
    %221 = arith.subf %217, %220 : vector<16x16xf32>
    %222 = math.exp %221 : vector<16x16xf32>
    %cst_84 = arith.constant dense<0.000000e+00> : vector<16xf32>
    %223 = vector.multi_reduction <add>, %222, %cst_84 [1] : vector<16x16xf32> to vector<16xf32>
    %224 = vector.shape_cast %223 : vector<16xf32> to vector<16x1xf32>
    %225 = tpu.reciprocal %224 {approx = true} : vector<16x1xf32> -> vector<16x1xf32>
    %226 = vector.broadcast %225 : vector<16x1xf32> to vector<16x16xf32>
    %227 = arith.mulf %222, %226 : vector<16x16xf32>
    %228 = arith.truncf %227 : vector<16x16xf32> to vector<16x16xbf16>
    %229 = vector.extract_strided_slice %158 {offsets = [0, 24], sizes = [16, 8], strides = [1, 1]} : vector<16x32xbf16> to vector<16x8xbf16>
    %cst_85 = arith.constant dense<0.000000e+00> : vector<16x8xf32>
    %230 = tpu.matmul %228, %229, %cst_85 {dimension_numbers = #tpu.dot_dimension_numbers<[1], [0], [0], [1], [0, 0, 1, 1], [], []>} : vector<16x16xbf16>, vector<16x8xbf16>, vector<16x8xf32> -> vector<16x8xf32>
    %231 = tpu.concatenate %176, %194, %212, %230 in 1 : vector<16x8xf32>, vector<16x8xf32>, vector<16x8xf32>, vector<16x8xf32> -> vector<16x32xf32>
    %232 = arith.truncf %231 : vector<16x32xf32> to vector<16x32xbf16>
    %cst_86 = arith.constant dense<0.000000e+00> : vector<16x32xf32>
    %233 = tpu.matmul %232, %154, %cst_86 {dimension_numbers = #tpu.dot_dimension_numbers<[1], [0], [0], [1], [0, 0, 1, 1], [], []>} : vector<16x32xbf16>, vector<32x32xbf16>, vector<16x32xf32> -> vector<16x32xf32>
    %234 = vector.broadcast %155 : vector<1x32xf32> to vector<16x32xf32>
    %235 = arith.addf %233, %234 : vector<16x32xf32>
    %236 = arith.addf %122, %235 : vector<16x32xf32>
    %c0_87 = arith.constant 0 : index
    %c0_88 = arith.constant 0 : index
    %237 = vector.load %arg17[%c0_87, %c0_88] : memref<1x32xf32, #tpu.memory_space<vmem>>, vector<1x32xf32>
    %c0_89 = arith.constant 0 : index
    %c0_90 = arith.constant 0 : index
    %238 = vector.load %arg18[%c0_89, %c0_90] : memref<1x32xf32, #tpu.memory_space<vmem>>, vector<1x32xf32>
    %cst_91 = arith.constant dense<0.000000e+00> : vector<16xf32>
    %239 = vector.multi_reduction <add>, %236, %cst_91 [1] : vector<16x32xf32> to vector<16xf32>
    %240 = vector.shape_cast %239 : vector<16xf32> to vector<16x1xf32>
    %cst_92 = arith.constant 3.200000e+01 : f32
    %241 = vector.broadcast %cst_92 : f32 to vector<16x1xf32>
    %242 = arith.divf %240, %241 : vector<16x1xf32>
    %243 = vector.broadcast %242 : vector<16x1xf32> to vector<16x32xf32>
    %244 = arith.subf %236, %243 : vector<16x32xf32>
    %245 = arith.mulf %244, %244 : vector<16x32xf32>
    %cst_93 = arith.constant dense<0.000000e+00> : vector<16xf32>
    %246 = vector.multi_reduction <add>, %245, %cst_93 [1] : vector<16x32xf32> to vector<16xf32>
    %247 = vector.shape_cast %246 : vector<16xf32> to vector<16x1xf32>
    %cst_94 = arith.constant 3.200000e+01 : f32
    %248 = vector.broadcast %cst_94 : f32 to vector<16x1xf32>
    %249 = arith.divf %247, %248 : vector<16x1xf32>
    %cst_95 = arith.constant 9.99999974E-6 : f32
    %250 = vector.broadcast %cst_95 : f32 to vector<16x1xf32>
    %251 = arith.addf %249, %250 : vector<16x1xf32>
    %252 = math.rsqrt %251 : vector<16x1xf32>
    %253 = vector.broadcast %252 : vector<16x1xf32> to vector<16x32xf32>
    %254 = arith.mulf %244, %253 : vector<16x32xf32>
    %255 = vector.broadcast %237 : vector<1x32xf32> to vector<16x32xf32>
    %256 = arith.mulf %254, %255 : vector<16x32xf32>
    %257 = vector.broadcast %238 : vector<1x32xf32> to vector<16x32xf32>
    %258 = arith.addf %256, %257 : vector<16x32xf32>
    %259 = arith.truncf %258 : vector<16x32xf32> to vector<16x32xbf16>
    %c0_96 = arith.constant 0 : index
    %c0_97 = arith.constant 0 : index
    %260 = vector.load %arg19[%c0_96, %c0_97] : memref<32x128xbf16, #tpu.memory_space<vmem>>, vector<32x128xbf16>
    %cst_98 = arith.constant dense<0.000000e+00> : vector<16x128xf32>
    %261 = tpu.matmul %259, %260, %cst_98 {dimension_numbers = #tpu.dot_dimension_numbers<[1], [0], [0], [1], [0, 0, 1, 1], [], []>} : vector<16x32xbf16>, vector<32x128xbf16>, vector<16x128xf32> -> vector<16x128xf32>
    %c0_99 = arith.constant 0 : index
    %c0_100 = arith.constant 0 : index
    %262 = vector.load %arg20[%c0_99, %c0_100] : memref<1x128xf32, #tpu.memory_space<vmem>>, vector<1x128xf32>
    %263 = vector.broadcast %262 : vector<1x128xf32> to vector<16x128xf32>
    %264 = arith.addf %261, %263 : vector<16x128xf32>
    %cst_101 = arith.constant 5.000000e-01 : f32
    %265 = vector.broadcast %cst_101 : f32 to vector<16x128xf32>
    %266 = arith.mulf %265, %264 : vector<16x128xf32>
    %cst_102 = arith.constant 4.471500e-02 : f32
    %267 = vector.broadcast %cst_102 : f32 to vector<16x128xf32>
    %268 = arith.mulf %267, %264 : vector<16x128xf32>
    %269 = arith.mulf %268, %264 : vector<16x128xf32>
    %270 = arith.mulf %269, %264 : vector<16x128xf32>
    %271 = arith.addf %264, %270 : vector<16x128xf32>
    %cst_103 = arith.constant 0.797884583 : f32
    %272 = vector.broadcast %cst_103 : f32 to vector<16x128xf32>
    %273 = arith.mulf %272, %271 : vector<16x128xf32>
    %274 = math.tanh %273 : vector<16x128xf32>
    %cst_104 = arith.constant 1.000000e+00 : f32
    %275 = vector.broadcast %cst_104 : f32 to vector<16x128xf32>
    %276 = arith.addf %275, %274 : vector<16x128xf32>
    %277 = arith.mulf %266, %276 : vector<16x128xf32>
    %278 = arith.truncf %277 : vector<16x128xf32> to vector<16x128xbf16>
    %c0_105 = arith.constant 0 : index
    %c0_106 = arith.constant 0 : index
    %279 = vector.load %arg21[%c0_105, %c0_106] : memref<128x32xbf16, #tpu.memory_space<vmem>>, vector<128x32xbf16>
    %cst_107 = arith.constant dense<0.000000e+00> : vector<16x32xf32>
    %280 = tpu.matmul %278, %279, %cst_107 {dimension_numbers = #tpu.dot_dimension_numbers<[1], [0], [0], [1], [0, 0, 1, 1], [], []>} : vector<16x128xbf16>, vector<128x32xbf16>, vector<16x32xf32> -> vector<16x32xf32>
    %c0_108 = arith.constant 0 : index
    %c0_109 = arith.constant 0 : index
    %281 = vector.load %arg22[%c0_108, %c0_109] : memref<1x32xf32, #tpu.memory_space<vmem>>, vector<1x32xf32>
    %282 = vector.broadcast %281 : vector<1x32xf32> to vector<16x32xf32>
    %283 = arith.addf %280, %282 : vector<16x32xf32>
    %284 = arith.addf %236, %283 : vector<16x32xf32>
    %c0_110 = arith.constant 0 : index
    %c0_111 = arith.constant 0 : index
    %c0_112 = arith.constant 0 : index
    %285 = vector.load %arg23[%c0_110, %c0_111, %c0_112] : memref<1x16x32xf32, #tpu.memory_space<vmem>>, vector<1x16x32xf32>
    %286 = vector.shape_cast %285 : vector<1x16x32xf32> to vector<16x32xf32>
    %287 = vector.shape_cast %284 : vector<16x32xf32> to vector<1x16x32xf32>
    tpu.vector_store %arg23[%c0_110, %c0_111, %c0_112], %287 {strides = array<i32>} : memref<1x16x32xf32, #tpu.memory_space<vmem>>, vector<1x16x32xf32>,
    return
  }
  func.func @transform_0(%arg0: i32) -> (i32, i32, i32) {
    %c0_i32 = arith.constant 0 : i32
    %c0_i32_0 = arith.constant 0 : i32
    %c0_i32_1 = arith.constant 0 : i32
    return %arg0, %c0_i32, %c0_i32_0 : i32, i32, i32
  }
  func.func @transform_1(%arg0: i32) -> (i32, i32, i32) {
    %c0_i32 = arith.constant 0 : i32
    %c0_i32_0 = arith.constant 0 : i32
    %c0_i32_1 = arith.constant 0 : i32
    return %arg0, %c0_i32, %c0_i32_0 : i32, i32, i32
  }
  func.func @transform_2(%arg0: i32) -> (i32, i32) {
    %c0_i32 = arith.constant 0 : i32
    %c0_i32_0 = arith.constant 0 : i32
    %c0_i32_1 = arith.constant 0 : i32
    return %c0_i32, %c0_i32_0 : i32, i32
  }
  func.func @transform_3(%arg0: i32) -> (i32, i32) {
    %c0_i32 = arith.constant 0 : i32
    %c0_i32_0 = arith.constant 0 : i32
    %c0_i32_1 = arith.constant 0 : i32
    return %c0_i32, %c0_i32_0 : i32, i32
  }
  func.func @transform_4(%arg0: i32) -> (i32, i32) {
    %c0_i32 = arith.constant 0 : i32
    %c0_i32_0 = arith.constant 0 : i32
    %c0_i32_1 = arith.constant 0 : i32
    return %c0_i32, %c0_i32_0 : i32, i32
  }
  func.func @transform_5(%arg0: i32) -> (i32, i32) {
    %c0_i32 = arith.constant 0 : i32
    %c0_i32_0 = arith.constant 0 : i32
    %c0_i32_1 = arith.constant 0 : i32
    return %c0_i32, %c0_i32_0 : i32, i32
  }
  func.func @transform_6(%arg0: i32) -> (i32, i32) {
    %c0_i32 = arith.constant 0 : i32
    %c0_i32_0 = arith.constant 0 : i32
    %c0_i32_1 = arith.constant 0 : i32
    return %c0_i32, %c0_i32_0 : i32, i32
  }
  func.func @transform_7(%arg0: i32) -> (i32, i32) {
    %c0_i32 = arith.constant 0 : i32
    %c0_i32_0 = arith.constant 0 : i32
    %c0_i32_1 = arith.constant 0 : i32
    return %c0_i32, %c0_i32_0 : i32, i32
  }
  func.func @transform_8(%arg0: i32) -> (i32, i32) {
    %c0_i32 = arith.constant 0 : i32
    %c0_i32_0 = arith.constant 0 : i32
    %c0_i32_1 = arith.constant 0 : i32
    return %c0_i32, %c0_i32_0 : i32, i32
  }
  func.func @transform_9(%arg0: i32) -> (i32, i32) {
    %c0_i32 = arith.constant 0 : i32
    %c0_i32_0 = arith.constant 0 : i32
    %c0_i32_1 = arith.constant 0 : i32
    return %c0_i32, %c0_i32_0 : i32, i32
  }
  func.func @transform_10(%arg0: i32) -> (i32, i32) {
    %c0_i32 = arith.constant 0 : i32
    %c0_i32_0 = arith.constant 0 : i32
    %c0_i32_1 = arith.constant 0 : i32
    return %c0_i32, %c0_i32_0 : i32, i32
  }
  func.func @transform_11(%arg0: i32) -> (i32, i32) {
    %c0_i32 = arith.constant 0 : i32
    %c0_i32_0 = arith.constant 0 : i32
    %c0_i32_1 = arith.constant 0 : i32
    return %c0_i32, %c0_i32_0 : i32, i32
  }
  func.func @transform_12(%arg0: i32) -> (i32, i32) {
    %c0_i32 = arith.constant 0 : i32
    %c0_i32_0 = arith.constant 0 : i32
    %c0_i32_1 = arith.constant 0 : i32
    return %c0_i32, %c0_i32_0 : i32, i32
  }
  func.func @transform_13(%arg0: i32) -> (i32, i32) {
    %c0_i32 = arith.constant 0 : i32
    %c0_i32_0 = arith.constant 0 : i32
    %c0_i32_1 = arith.constant 0 : i32
    return %c0_i32, %c0_i32_0 : i32, i32
  }
  func.func @transform_14(%arg0: i32) -> (i32, i32) {
    %c0_i32 = arith.constant 0 : i32
    %c0_i32_0 = arith.constant 0 : i32
    %c0_i32_1 = arith.constant 0 : i32
    return %c0_i32, %c0_i32_0 : i32, i32
  }
  func.func @transform_15(%arg0: i32) -> (i32, i32) {
    %c0_i32 = arith.constant 0 : i32
    %c0_i32_0 = arith.constant 0 : i32
    %c0_i32_1 = arith.constant 0 : i32
    return %c0_i32, %c0_i32_0 : i32, i32
  }
  func.func @transform_16(%arg0: i32) -> (i32, i32) {
    %c0_i32 = arith.constant 0 : i32
    %c0_i32_0 = arith.constant 0 : i32
    %c0_i32_1 = arith.constant 0 : i32
    return %c0_i32, %c0_i32_0 : i32, i32
  }
  func.func @transform_17(%arg0: i32) -> (i32, i32) {
    %c0_i32 = arith.constant 0 : i32
    %c0_i32_0 = arith.constant 0 : i32
    %c0_i32_1 = arith.constant 0 : i32
    return %c0_i32, %c0_i32_0 : i32, i32
  }
  func.func @transform_18(%arg0: i32) -> (i32, i32) {
    %c0_i32 = arith.constant 0 : i32
    %c0_i32_0 = arith.constant 0 : i32
    %c0_i32_1 = arith.constant 0 : i32
    return %c0_i32, %c0_i32_0 : i32, i32
  }
  func.func @transform_19(%arg0: i32) -> (i32, i32) {
    %c0_i32 = arith.constant 0 : i32
    %c0_i32_0 = arith.constant 0 : i32
    %c0_i32_1 = arith.constant 0 : i32
    return %c0_i32, %c0_i32_0 : i32, i32
  }
  func.func @transform_20(%arg0: i32) -> (i32, i32) {
    %c0_i32 = arith.constant 0 : i32
    %c0_i32_0 = arith.constant 0 : i32
    %c0_i32_1 = arith.constant 0 : i32
    return %c0_i32, %c0_i32_0 : i32, i32
  }
  func.func @transform_21(%arg0: i32) -> (i32, i32) {
    %c0_i32 = arith.constant 0 : i32
    %c0_i32_0 = arith.constant 0 : i32
    %c0_i32_1 = arith.constant 0 : i32
    return %c0_i32, %c0_i32_0 : i32, i32
  }
  func.func @transform_22(%arg0: i32) -> (i32, i32, i32) {
    %c0_i32 = arith.constant 0 : i32
    %c0_i32_0 = arith.constant 0 : i32
    %c0_i32_1 = arith.constant 0 : i32
    return %arg0, %c0_i32, %c0_i32_0 : i32, i32, i32
  }
}

module attributes {stable_mosaic.version = 11 : i64} {
  func.func @_pred_head_kernel(%arg0: i32, %arg1: memref<1x16x32xf32, #tpu.memory_space<vmem>>, %arg2: memref<8x32xbf16, #tpu.memory_space<vmem>>, %arg3: memref<8x1xf32, #tpu.memory_space<vmem>>, %arg4: memref<1x8x16xf32, #tpu.memory_space<vmem>>) attributes {dimension_semantics = [#tpu.dimension_semantics<parallel>], iteration_bounds = array<i64: 2>, scalar_prefetch = 0 : i64, scratch_operands = 0 : i64, tpu.core_type = #tpu.core_type<tc>, window_params = [{transform_indices = @transform_0, window_bounds = array<i64: 1, 16, 32>}, {pipeline_mode = #tpu.pipeline_mode<synchronous>, transform_indices = @transform_1, window_bounds = array<i64: 8, 32>}, {pipeline_mode = #tpu.pipeline_mode<synchronous>, transform_indices = @transform_2, window_bounds = array<i64: 8, 1>}, {transform_indices = @transform_3, window_bounds = array<i64: 1, 8, 16>}]} {
    %c0 = arith.constant 0 : index
    %c0_0 = arith.constant 0 : index
    %c0_1 = arith.constant 0 : index
    %0 = vector.load %arg1[%c0, %c0_0, %c0_1] : memref<1x16x32xf32, #tpu.memory_space<vmem>>, vector<1x16x32xf32>
    %1 = vector.shape_cast %0 : vector<1x16x32xf32> to vector<16x32xf32>
    %2 = arith.truncf %1 : vector<16x32xf32> to vector<16x32xbf16>
    %c0_2 = arith.constant 0 : index
    %c0_3 = arith.constant 0 : index
    %3 = vector.load %arg2[%c0_2, %c0_3] : memref<8x32xbf16, #tpu.memory_space<vmem>>, vector<8x32xbf16>
    %cst = arith.constant dense<0.000000e+00> : vector<8x16xf32>
    %4 = tpu.matmul %3, %2, %cst {dimension_numbers = #tpu.dot_dimension_numbers<[1], [1], [0], [0], [0, 0, 1, 0], [], []>} : vector<8x32xbf16>, vector<16x32xbf16>, vector<8x16xf32> -> vector<8x16xf32>
    %c0_4 = arith.constant 0 : index
    %c0_5 = arith.constant 0 : index
    %5 = vector.load %arg3[%c0_4, %c0_5] : memref<8x1xf32, #tpu.memory_space<vmem>>, vector<8x1xf32>
    %6 = vector.broadcast %5 : vector<8x1xf32> to vector<8x16xf32>
    %7 = arith.addf %4, %6 : vector<8x16xf32>
    %c0_6 = arith.constant 0 : index
    %c0_7 = arith.constant 0 : index
    %c0_8 = arith.constant 0 : index
    %8 = vector.load %arg4[%c0_6, %c0_7, %c0_8] : memref<1x8x16xf32, #tpu.memory_space<vmem>>, vector<1x8x16xf32>
    %9 = vector.shape_cast %8 : vector<1x8x16xf32> to vector<8x16xf32>
    %10 = vector.shape_cast %7 : vector<8x16xf32> to vector<1x8x16xf32>
    tpu.vector_store %arg4[%c0_6, %c0_7, %c0_8], %10 {strides = array<i32>} : memref<1x8x16xf32, #tpu.memory_space<vmem>>, vector<1x8x16xf32>,
    return
  }
  func.func @transform_0(%arg0: i32) -> (i32, i32, i32) {
    %c0_i32 = arith.constant 0 : i32
    %c0_i32_0 = arith.constant 0 : i32
    %c0_i32_1 = arith.constant 0 : i32
    return %arg0, %c0_i32, %c0_i32_0 : i32, i32, i32
  }
  func.func @transform_1(%arg0: i32) -> (i32, i32) {
    %c0_i32 = arith.constant 0 : i32
    %c0_i32_0 = arith.constant 0 : i32
    %c0_i32_1 = arith.constant 0 : i32
    return %c0_i32, %c0_i32_0 : i32, i32
  }
  func.func @transform_2(%arg0: i32) -> (i32, i32) {
    %c0_i32 = arith.constant 0 : i32
    %c0_i32_0 = arith.constant 0 : i32
    %c0_i32_1 = arith.constant 0 : i32
    return %c0_i32, %c0_i32_0 : i32, i32
  }
  func.func @transform_3(%arg0: i32) -> (i32, i32, i32) {
    %c0_i32 = arith.constant 0 : i32
    %c0_i32_0 = arith.constant 0 : i32
    %c0_i32_1 = arith.constant 0 : i32
    return %arg0, %c0_i32, %c0_i32_0 : i32, i32, i32
  }
}

module attributes {stable_mosaic.version = 11 : i64} {
  func.func @_encoder_layer_kernel(%arg0: i32, %arg1: memref<1x17x32xf32, #tpu.memory_space<vmem>>, %arg2: memref<1x32xf32, #tpu.memory_space<vmem>>, %arg3: memref<1x32xf32, #tpu.memory_space<vmem>>, %arg4: memref<32x96xbf16, #tpu.memory_space<vmem>>, %arg5: memref<1x96xf32, #tpu.memory_space<vmem>>, %arg6: memref<32x32xbf16, #tpu.memory_space<vmem>>, %arg7: memref<1x32xf32, #tpu.memory_space<vmem>>, %arg8: memref<1x32xf32, #tpu.memory_space<vmem>>, %arg9: memref<1x32xf32, #tpu.memory_space<vmem>>, %arg10: memref<32x128xbf16, #tpu.memory_space<vmem>>, %arg11: memref<1x128xf32, #tpu.memory_space<vmem>>, %arg12: memref<128x32xbf16, #tpu.memory_space<vmem>>, %arg13: memref<1x32xf32, #tpu.memory_space<vmem>>, %arg14: memref<1x17x32xf32, #tpu.memory_space<vmem>>) attributes {dimension_semantics = [#tpu.dimension_semantics<parallel>], iteration_bounds = array<i64: 2>, scalar_prefetch = 0 : i64, scratch_operands = 0 : i64, tpu.core_type = #tpu.core_type<tc>, window_params = [{transform_indices = @transform_0, window_bounds = array<i64: 1, 17, 32>}, {pipeline_mode = #tpu.pipeline_mode<synchronous>, transform_indices = @transform_1, window_bounds = array<i64: 1, 32>}, {pipeline_mode = #tpu.pipeline_mode<synchronous>, transform_indices = @transform_2, window_bounds = array<i64: 1, 32>}, {pipeline_mode = #tpu.pipeline_mode<synchronous>, transform_indices = @transform_3, window_bounds = array<i64: 32, 96>}, {pipeline_mode = #tpu.pipeline_mode<synchronous>, transform_indices = @transform_4, window_bounds = array<i64: 1, 96>}, {pipeline_mode = #tpu.pipeline_mode<synchronous>, transform_indices = @transform_5, window_bounds = array<i64: 32, 32>}, {pipeline_mode = #tpu.pipeline_mode<synchronous>, transform_indices = @transform_6, window_bounds = array<i64: 1, 32>}, {pipeline_mode = #tpu.pipeline_mode<synchronous>, transform_indices = @transform_7, window_bounds = array<i64: 1, 32>}, {pipeline_mode = #tpu.pipeline_mode<synchronous>, transform_indices = @transform_8, window_bounds = array<i64: 1, 32>}, {pipeline_mode = #tpu.pipeline_mode<synchronous>, transform_indices = @transform_9, window_bounds = array<i64: 32, 128>}, {pipeline_mode = #tpu.pipeline_mode<synchronous>, transform_indices = @transform_10, window_bounds = array<i64: 1, 128>}, {pipeline_mode = #tpu.pipeline_mode<synchronous>, transform_indices = @transform_11, window_bounds = array<i64: 128, 32>}, {pipeline_mode = #tpu.pipeline_mode<synchronous>, transform_indices = @transform_12, window_bounds = array<i64: 1, 32>}, {transform_indices = @transform_13, window_bounds = array<i64: 1, 17, 32>}]} {
    %c0 = arith.constant 0 : index
    %c0_0 = arith.constant 0 : index
    %c0_1 = arith.constant 0 : index
    %0 = vector.load %arg1[%c0, %c0_0, %c0_1] : memref<1x17x32xf32, #tpu.memory_space<vmem>>, vector<1x17x32xf32>
    %1 = vector.shape_cast %0 : vector<1x17x32xf32> to vector<17x32xf32>
    %c0_2 = arith.constant 0 : index
    %c0_3 = arith.constant 0 : index
    %2 = vector.load %arg2[%c0_2, %c0_3] : memref<1x32xf32, #tpu.memory_space<vmem>>, vector<1x32xf32>
    %c0_4 = arith.constant 0 : index
    %c0_5 = arith.constant 0 : index
    %3 = vector.load %arg3[%c0_4, %c0_5] : memref<1x32xf32, #tpu.memory_space<vmem>>, vector<1x32xf32>
    %cst = arith.constant dense<0.000000e+00> : vector<17xf32>
    %4 = vector.multi_reduction <add>, %1, %cst [1] : vector<17x32xf32> to vector<17xf32>
    %5 = vector.shape_cast %4 : vector<17xf32> to vector<17x1xf32>
    %cst_6 = arith.constant 3.200000e+01 : f32
    %6 = vector.broadcast %cst_6 : f32 to vector<17x1xf32>
    %7 = arith.divf %5, %6 : vector<17x1xf32>
    %8 = vector.broadcast %7 : vector<17x1xf32> to vector<17x32xf32>
    %9 = arith.subf %1, %8 : vector<17x32xf32>
    %10 = arith.mulf %9, %9 : vector<17x32xf32>
    %cst_7 = arith.constant dense<0.000000e+00> : vector<17xf32>
    %11 = vector.multi_reduction <add>, %10, %cst_7 [1] : vector<17x32xf32> to vector<17xf32>
    %12 = vector.shape_cast %11 : vector<17xf32> to vector<17x1xf32>
    %cst_8 = arith.constant 3.200000e+01 : f32
    %13 = vector.broadcast %cst_8 : f32 to vector<17x1xf32>
    %14 = arith.divf %12, %13 : vector<17x1xf32>
    %cst_9 = arith.constant 9.99999974E-6 : f32
    %15 = vector.broadcast %cst_9 : f32 to vector<17x1xf32>
    %16 = arith.addf %14, %15 : vector<17x1xf32>
    %17 = math.rsqrt %16 : vector<17x1xf32>
    %18 = vector.broadcast %17 : vector<17x1xf32> to vector<17x32xf32>
    %19 = arith.mulf %9, %18 : vector<17x32xf32>
    %20 = vector.broadcast %2 : vector<1x32xf32> to vector<17x32xf32>
    %21 = arith.mulf %19, %20 : vector<17x32xf32>
    %22 = vector.broadcast %3 : vector<1x32xf32> to vector<17x32xf32>
    %23 = arith.addf %21, %22 : vector<17x32xf32>
    %24 = arith.truncf %23 : vector<17x32xf32> to vector<17x32xbf16>
    %c0_10 = arith.constant 0 : index
    %c0_11 = arith.constant 0 : index
    %25 = vector.load %arg4[%c0_10, %c0_11] : memref<32x96xbf16, #tpu.memory_space<vmem>>, vector<32x96xbf16>
    %cst_12 = arith.constant dense<0.000000e+00> : vector<17x96xf32>
    %26 = tpu.matmul %24, %25, %cst_12 {dimension_numbers = #tpu.dot_dimension_numbers<[1], [0], [0], [1], [0, 0, 1, 1], [], []>} : vector<17x32xbf16>, vector<32x96xbf16>, vector<17x96xf32> -> vector<17x96xf32>
    %c0_13 = arith.constant 0 : index
    %c0_14 = arith.constant 0 : index
    %27 = vector.load %arg5[%c0_13, %c0_14] : memref<1x96xf32, #tpu.memory_space<vmem>>, vector<1x96xf32>
    %28 = vector.broadcast %27 : vector<1x96xf32> to vector<17x96xf32>
    %29 = arith.addf %26, %28 : vector<17x96xf32>
    %30 = vector.extract_strided_slice %29 {offsets = [0, 0], sizes = [17, 32], strides = [1, 1]} : vector<17x96xf32> to vector<17x32xf32>
    %31 = vector.extract_strided_slice %29 {offsets = [0, 32], sizes = [17, 32], strides = [1, 1]} : vector<17x96xf32> to vector<17x32xf32>
    %32 = vector.extract_strided_slice %29 {offsets = [0, 64], sizes = [17, 32], strides = [1, 1]} : vector<17x96xf32> to vector<17x32xf32>
    %c0_15 = arith.constant 0 : index
    %c0_16 = arith.constant 0 : index
    %33 = vector.load %arg6[%c0_15, %c0_16] : memref<32x32xbf16, #tpu.memory_space<vmem>>, vector<32x32xbf16>
    %c0_17 = arith.constant 0 : index
    %c0_18 = arith.constant 0 : index
    %34 = vector.load %arg7[%c0_17, %c0_18] : memref<1x32xf32, #tpu.memory_space<vmem>>, vector<1x32xf32>
    %35 = arith.truncf %30 : vector<17x32xf32> to vector<17x32xbf16>
    %36 = arith.truncf %31 : vector<17x32xf32> to vector<17x32xbf16>
    %37 = arith.truncf %32 : vector<17x32xf32> to vector<17x32xbf16>
    %38 = vector.extract_strided_slice %35 {offsets = [0, 0], sizes = [17, 8], strides = [1, 1]} : vector<17x32xbf16> to vector<17x8xbf16>
    %39 = vector.extract_strided_slice %36 {offsets = [0, 0], sizes = [17, 8], strides = [1, 1]} : vector<17x32xbf16> to vector<17x8xbf16>
    %cst_19 = arith.constant dense<0.000000e+00> : vector<17x17xf32>
    %40 = tpu.matmul %38, %39, %cst_19 {dimension_numbers = #tpu.dot_dimension_numbers<[1], [1], [0], [0], [0, 0, 1, 0], [], []>} : vector<17x8xbf16>, vector<17x8xbf16>, vector<17x17xf32> -> vector<17x17xf32>
    %cst_20 = arith.constant 0.353553385 : f32
    %41 = vector.broadcast %cst_20 : f32 to vector<17x17xf32>
    %42 = arith.mulf %40, %41 : vector<17x17xf32>
    %cst_21 = arith.constant dense<0xFF800000> : vector<17xf32>
    %43 = vector.multi_reduction <maximumf>, %42, %cst_21 [1] : vector<17x17xf32> to vector<17xf32>
    %44 = vector.shape_cast %43 : vector<17xf32> to vector<17x1xf32>
    %45 = vector.broadcast %44 : vector<17x1xf32> to vector<17x17xf32>
    %46 = arith.subf %42, %45 : vector<17x17xf32>
    %47 = math.exp %46 : vector<17x17xf32>
    %cst_22 = arith.constant dense<0.000000e+00> : vector<17xf32>
    %48 = vector.multi_reduction <add>, %47, %cst_22 [1] : vector<17x17xf32> to vector<17xf32>
    %49 = vector.shape_cast %48 : vector<17xf32> to vector<17x1xf32>
    %50 = tpu.reciprocal %49 {approx = true} : vector<17x1xf32> -> vector<17x1xf32>
    %51 = vector.broadcast %50 : vector<17x1xf32> to vector<17x17xf32>
    %52 = arith.mulf %47, %51 : vector<17x17xf32>
    %53 = arith.truncf %52 : vector<17x17xf32> to vector<17x17xbf16>
    %54 = vector.extract_strided_slice %37 {offsets = [0, 0], sizes = [17, 8], strides = [1, 1]} : vector<17x32xbf16> to vector<17x8xbf16>
    %cst_23 = arith.constant dense<0.000000e+00> : vector<17x8xf32>
    %55 = tpu.matmul %53, %54, %cst_23 {dimension_numbers = #tpu.dot_dimension_numbers<[1], [0], [0], [1], [0, 0, 1, 1], [], []>} : vector<17x17xbf16>, vector<17x8xbf16>, vector<17x8xf32> -> vector<17x8xf32>
    %56 = vector.extract_strided_slice %35 {offsets = [0, 8], sizes = [17, 8], strides = [1, 1]} : vector<17x32xbf16> to vector<17x8xbf16>
    %57 = vector.extract_strided_slice %36 {offsets = [0, 8], sizes = [17, 8], strides = [1, 1]} : vector<17x32xbf16> to vector<17x8xbf16>
    %cst_24 = arith.constant dense<0.000000e+00> : vector<17x17xf32>
    %58 = tpu.matmul %56, %57, %cst_24 {dimension_numbers = #tpu.dot_dimension_numbers<[1], [1], [0], [0], [0, 0, 1, 0], [], []>} : vector<17x8xbf16>, vector<17x8xbf16>, vector<17x17xf32> -> vector<17x17xf32>
    %cst_25 = arith.constant 0.353553385 : f32
    %59 = vector.broadcast %cst_25 : f32 to vector<17x17xf32>
    %60 = arith.mulf %58, %59 : vector<17x17xf32>
    %cst_26 = arith.constant dense<0xFF800000> : vector<17xf32>
    %61 = vector.multi_reduction <maximumf>, %60, %cst_26 [1] : vector<17x17xf32> to vector<17xf32>
    %62 = vector.shape_cast %61 : vector<17xf32> to vector<17x1xf32>
    %63 = vector.broadcast %62 : vector<17x1xf32> to vector<17x17xf32>
    %64 = arith.subf %60, %63 : vector<17x17xf32>
    %65 = math.exp %64 : vector<17x17xf32>
    %cst_27 = arith.constant dense<0.000000e+00> : vector<17xf32>
    %66 = vector.multi_reduction <add>, %65, %cst_27 [1] : vector<17x17xf32> to vector<17xf32>
    %67 = vector.shape_cast %66 : vector<17xf32> to vector<17x1xf32>
    %68 = tpu.reciprocal %67 {approx = true} : vector<17x1xf32> -> vector<17x1xf32>
    %69 = vector.broadcast %68 : vector<17x1xf32> to vector<17x17xf32>
    %70 = arith.mulf %65, %69 : vector<17x17xf32>
    %71 = arith.truncf %70 : vector<17x17xf32> to vector<17x17xbf16>
    %72 = vector.extract_strided_slice %37 {offsets = [0, 8], sizes = [17, 8], strides = [1, 1]} : vector<17x32xbf16> to vector<17x8xbf16>
    %cst_28 = arith.constant dense<0.000000e+00> : vector<17x8xf32>
    %73 = tpu.matmul %71, %72, %cst_28 {dimension_numbers = #tpu.dot_dimension_numbers<[1], [0], [0], [1], [0, 0, 1, 1], [], []>} : vector<17x17xbf16>, vector<17x8xbf16>, vector<17x8xf32> -> vector<17x8xf32>
    %74 = vector.extract_strided_slice %35 {offsets = [0, 16], sizes = [17, 8], strides = [1, 1]} : vector<17x32xbf16> to vector<17x8xbf16>
    %75 = vector.extract_strided_slice %36 {offsets = [0, 16], sizes = [17, 8], strides = [1, 1]} : vector<17x32xbf16> to vector<17x8xbf16>
    %cst_29 = arith.constant dense<0.000000e+00> : vector<17x17xf32>
    %76 = tpu.matmul %74, %75, %cst_29 {dimension_numbers = #tpu.dot_dimension_numbers<[1], [1], [0], [0], [0, 0, 1, 0], [], []>} : vector<17x8xbf16>, vector<17x8xbf16>, vector<17x17xf32> -> vector<17x17xf32>
    %cst_30 = arith.constant 0.353553385 : f32
    %77 = vector.broadcast %cst_30 : f32 to vector<17x17xf32>
    %78 = arith.mulf %76, %77 : vector<17x17xf32>
    %cst_31 = arith.constant dense<0xFF800000> : vector<17xf32>
    %79 = vector.multi_reduction <maximumf>, %78, %cst_31 [1] : vector<17x17xf32> to vector<17xf32>
    %80 = vector.shape_cast %79 : vector<17xf32> to vector<17x1xf32>
    %81 = vector.broadcast %80 : vector<17x1xf32> to vector<17x17xf32>
    %82 = arith.subf %78, %81 : vector<17x17xf32>
    %83 = math.exp %82 : vector<17x17xf32>
    %cst_32 = arith.constant dense<0.000000e+00> : vector<17xf32>
    %84 = vector.multi_reduction <add>, %83, %cst_32 [1] : vector<17x17xf32> to vector<17xf32>
    %85 = vector.shape_cast %84 : vector<17xf32> to vector<17x1xf32>
    %86 = tpu.reciprocal %85 {approx = true} : vector<17x1xf32> -> vector<17x1xf32>
    %87 = vector.broadcast %86 : vector<17x1xf32> to vector<17x17xf32>
    %88 = arith.mulf %83, %87 : vector<17x17xf32>
    %89 = arith.truncf %88 : vector<17x17xf32> to vector<17x17xbf16>
    %90 = vector.extract_strided_slice %37 {offsets = [0, 16], sizes = [17, 8], strides = [1, 1]} : vector<17x32xbf16> to vector<17x8xbf16>
    %cst_33 = arith.constant dense<0.000000e+00> : vector<17x8xf32>
    %91 = tpu.matmul %89, %90, %cst_33 {dimension_numbers = #tpu.dot_dimension_numbers<[1], [0], [0], [1], [0, 0, 1, 1], [], []>} : vector<17x17xbf16>, vector<17x8xbf16>, vector<17x8xf32> -> vector<17x8xf32>
    %92 = vector.extract_strided_slice %35 {offsets = [0, 24], sizes = [17, 8], strides = [1, 1]} : vector<17x32xbf16> to vector<17x8xbf16>
    %93 = vector.extract_strided_slice %36 {offsets = [0, 24], sizes = [17, 8], strides = [1, 1]} : vector<17x32xbf16> to vector<17x8xbf16>
    %cst_34 = arith.constant dense<0.000000e+00> : vector<17x17xf32>
    %94 = tpu.matmul %92, %93, %cst_34 {dimension_numbers = #tpu.dot_dimension_numbers<[1], [1], [0], [0], [0, 0, 1, 0], [], []>} : vector<17x8xbf16>, vector<17x8xbf16>, vector<17x17xf32> -> vector<17x17xf32>
    %cst_35 = arith.constant 0.353553385 : f32
    %95 = vector.broadcast %cst_35 : f32 to vector<17x17xf32>
    %96 = arith.mulf %94, %95 : vector<17x17xf32>
    %cst_36 = arith.constant dense<0xFF800000> : vector<17xf32>
    %97 = vector.multi_reduction <maximumf>, %96, %cst_36 [1] : vector<17x17xf32> to vector<17xf32>
    %98 = vector.shape_cast %97 : vector<17xf32> to vector<17x1xf32>
    %99 = vector.broadcast %98 : vector<17x1xf32> to vector<17x17xf32>
    %100 = arith.subf %96, %99 : vector<17x17xf32>
    %101 = math.exp %100 : vector<17x17xf32>
    %cst_37 = arith.constant dense<0.000000e+00> : vector<17xf32>
    %102 = vector.multi_reduction <add>, %101, %cst_37 [1] : vector<17x17xf32> to vector<17xf32>
    %103 = vector.shape_cast %102 : vector<17xf32> to vector<17x1xf32>
    %104 = tpu.reciprocal %103 {approx = true} : vector<17x1xf32> -> vector<17x1xf32>
    %105 = vector.broadcast %104 : vector<17x1xf32> to vector<17x17xf32>
    %106 = arith.mulf %101, %105 : vector<17x17xf32>
    %107 = arith.truncf %106 : vector<17x17xf32> to vector<17x17xbf16>
    %108 = vector.extract_strided_slice %37 {offsets = [0, 24], sizes = [17, 8], strides = [1, 1]} : vector<17x32xbf16> to vector<17x8xbf16>
    %cst_38 = arith.constant dense<0.000000e+00> : vector<17x8xf32>
    %109 = tpu.matmul %107, %108, %cst_38 {dimension_numbers = #tpu.dot_dimension_numbers<[1], [0], [0], [1], [0, 0, 1, 1], [], []>} : vector<17x17xbf16>, vector<17x8xbf16>, vector<17x8xf32> -> vector<17x8xf32>
    %110 = tpu.concatenate %55, %73, %91, %109 in 1 : vector<17x8xf32>, vector<17x8xf32>, vector<17x8xf32>, vector<17x8xf32> -> vector<17x32xf32>
    %111 = arith.truncf %110 : vector<17x32xf32> to vector<17x32xbf16>
    %cst_39 = arith.constant dense<0.000000e+00> : vector<17x32xf32>
    %112 = tpu.matmul %111, %33, %cst_39 {dimension_numbers = #tpu.dot_dimension_numbers<[1], [0], [0], [1], [0, 0, 1, 1], [], []>} : vector<17x32xbf16>, vector<32x32xbf16>, vector<17x32xf32> -> vector<17x32xf32>
    %113 = vector.broadcast %34 : vector<1x32xf32> to vector<17x32xf32>
    %114 = arith.addf %112, %113 : vector<17x32xf32>
    %115 = arith.addf %1, %114 : vector<17x32xf32>
    %c0_40 = arith.constant 0 : index
    %c0_41 = arith.constant 0 : index
    %116 = vector.load %arg8[%c0_40, %c0_41] : memref<1x32xf32, #tpu.memory_space<vmem>>, vector<1x32xf32>
    %c0_42 = arith.constant 0 : index
    %c0_43 = arith.constant 0 : index
    %117 = vector.load %arg9[%c0_42, %c0_43] : memref<1x32xf32, #tpu.memory_space<vmem>>, vector<1x32xf32>
    %cst_44 = arith.constant dense<0.000000e+00> : vector<17xf32>
    %118 = vector.multi_reduction <add>, %115, %cst_44 [1] : vector<17x32xf32> to vector<17xf32>
    %119 = vector.shape_cast %118 : vector<17xf32> to vector<17x1xf32>
    %cst_45 = arith.constant 3.200000e+01 : f32
    %120 = vector.broadcast %cst_45 : f32 to vector<17x1xf32>
    %121 = arith.divf %119, %120 : vector<17x1xf32>
    %122 = vector.broadcast %121 : vector<17x1xf32> to vector<17x32xf32>
    %123 = arith.subf %115, %122 : vector<17x32xf32>
    %124 = arith.mulf %123, %123 : vector<17x32xf32>
    %cst_46 = arith.constant dense<0.000000e+00> : vector<17xf32>
    %125 = vector.multi_reduction <add>, %124, %cst_46 [1] : vector<17x32xf32> to vector<17xf32>
    %126 = vector.shape_cast %125 : vector<17xf32> to vector<17x1xf32>
    %cst_47 = arith.constant 3.200000e+01 : f32
    %127 = vector.broadcast %cst_47 : f32 to vector<17x1xf32>
    %128 = arith.divf %126, %127 : vector<17x1xf32>
    %cst_48 = arith.constant 9.99999974E-6 : f32
    %129 = vector.broadcast %cst_48 : f32 to vector<17x1xf32>
    %130 = arith.addf %128, %129 : vector<17x1xf32>
    %131 = math.rsqrt %130 : vector<17x1xf32>
    %132 = vector.broadcast %131 : vector<17x1xf32> to vector<17x32xf32>
    %133 = arith.mulf %123, %132 : vector<17x32xf32>
    %134 = vector.broadcast %116 : vector<1x32xf32> to vector<17x32xf32>
    %135 = arith.mulf %133, %134 : vector<17x32xf32>
    %136 = vector.broadcast %117 : vector<1x32xf32> to vector<17x32xf32>
    %137 = arith.addf %135, %136 : vector<17x32xf32>
    %138 = arith.truncf %137 : vector<17x32xf32> to vector<17x32xbf16>
    %c0_49 = arith.constant 0 : index
    %c0_50 = arith.constant 0 : index
    %139 = vector.load %arg10[%c0_49, %c0_50] : memref<32x128xbf16, #tpu.memory_space<vmem>>, vector<32x128xbf16>
    %cst_51 = arith.constant dense<0.000000e+00> : vector<17x128xf32>
    %140 = tpu.matmul %138, %139, %cst_51 {dimension_numbers = #tpu.dot_dimension_numbers<[1], [0], [0], [1], [0, 0, 1, 1], [], []>} : vector<17x32xbf16>, vector<32x128xbf16>, vector<17x128xf32> -> vector<17x128xf32>
    %c0_52 = arith.constant 0 : index
    %c0_53 = arith.constant 0 : index
    %141 = vector.load %arg11[%c0_52, %c0_53] : memref<1x128xf32, #tpu.memory_space<vmem>>, vector<1x128xf32>
    %142 = vector.broadcast %141 : vector<1x128xf32> to vector<17x128xf32>
    %143 = arith.addf %140, %142 : vector<17x128xf32>
    %cst_54 = arith.constant 5.000000e-01 : f32
    %144 = vector.broadcast %cst_54 : f32 to vector<17x128xf32>
    %145 = arith.mulf %144, %143 : vector<17x128xf32>
    %cst_55 = arith.constant 4.471500e-02 : f32
    %146 = vector.broadcast %cst_55 : f32 to vector<17x128xf32>
    %147 = arith.mulf %146, %143 : vector<17x128xf32>
    %148 = arith.mulf %147, %143 : vector<17x128xf32>
    %149 = arith.mulf %148, %143 : vector<17x128xf32>
    %150 = arith.addf %143, %149 : vector<17x128xf32>
    %cst_56 = arith.constant 0.797884583 : f32
    %151 = vector.broadcast %cst_56 : f32 to vector<17x128xf32>
    %152 = arith.mulf %151, %150 : vector<17x128xf32>
    %153 = math.tanh %152 : vector<17x128xf32>
    %cst_57 = arith.constant 1.000000e+00 : f32
    %154 = vector.broadcast %cst_57 : f32 to vector<17x128xf32>
    %155 = arith.addf %154, %153 : vector<17x128xf32>
    %156 = arith.mulf %145, %155 : vector<17x128xf32>
    %157 = arith.truncf %156 : vector<17x128xf32> to vector<17x128xbf16>
    %c0_58 = arith.constant 0 : index
    %c0_59 = arith.constant 0 : index
    %158 = vector.load %arg12[%c0_58, %c0_59] : memref<128x32xbf16, #tpu.memory_space<vmem>>, vector<128x32xbf16>
    %cst_60 = arith.constant dense<0.000000e+00> : vector<17x32xf32>
    %159 = tpu.matmul %157, %158, %cst_60 {dimension_numbers = #tpu.dot_dimension_numbers<[1], [0], [0], [1], [0, 0, 1, 1], [], []>} : vector<17x128xbf16>, vector<128x32xbf16>, vector<17x32xf32> -> vector<17x32xf32>
    %c0_61 = arith.constant 0 : index
    %c0_62 = arith.constant 0 : index
    %160 = vector.load %arg13[%c0_61, %c0_62] : memref<1x32xf32, #tpu.memory_space<vmem>>, vector<1x32xf32>
    %161 = vector.broadcast %160 : vector<1x32xf32> to vector<17x32xf32>
    %162 = arith.addf %159, %161 : vector<17x32xf32>
    %163 = arith.addf %115, %162 : vector<17x32xf32>
    %c0_63 = arith.constant 0 : index
    %c0_64 = arith.constant 0 : index
    %c0_65 = arith.constant 0 : index
    %164 = vector.load %arg14[%c0_63, %c0_64, %c0_65] : memref<1x17x32xf32, #tpu.memory_space<vmem>>, vector<1x17x32xf32>
    %165 = vector.shape_cast %164 : vector<1x17x32xf32> to vector<17x32xf32>
    %166 = vector.shape_cast %163 : vector<17x32xf32> to vector<1x17x32xf32>
    tpu.vector_store %arg14[%c0_63, %c0_64, %c0_65], %166 {strides = array<i32>} : memref<1x17x32xf32, #tpu.memory_space<vmem>>, vector<1x17x32xf32>,
    return
  }
  func.func @transform_0(%arg0: i32) -> (i32, i32, i32) {
    %c0_i32 = arith.constant 0 : i32
    %c0_i32_0 = arith.constant 0 : i32
    %c0_i32_1 = arith.constant 0 : i32
    return %arg0, %c0_i32, %c0_i32_0 : i32, i32, i32
  }
  func.func @transform_1(%arg0: i32) -> (i32, i32) {
    %c0_i32 = arith.constant 0 : i32
    %c0_i32_0 = arith.constant 0 : i32
    %c0_i32_1 = arith.constant 0 : i32
    return %c0_i32, %c0_i32_0 : i32, i32
  }
  func.func @transform_2(%arg0: i32) -> (i32, i32) {
    %c0_i32 = arith.constant 0 : i32
    %c0_i32_0 = arith.constant 0 : i32
    %c0_i32_1 = arith.constant 0 : i32
    return %c0_i32, %c0_i32_0 : i32, i32
  }
  func.func @transform_3(%arg0: i32) -> (i32, i32) {
    %c0_i32 = arith.constant 0 : i32
    %c0_i32_0 = arith.constant 0 : i32
    %c0_i32_1 = arith.constant 0 : i32
    return %c0_i32, %c0_i32_0 : i32, i32
  }
  func.func @transform_4(%arg0: i32) -> (i32, i32) {
    %c0_i32 = arith.constant 0 : i32
    %c0_i32_0 = arith.constant 0 : i32
    %c0_i32_1 = arith.constant 0 : i32
    return %c0_i32, %c0_i32_0 : i32, i32
  }
  func.func @transform_5(%arg0: i32) -> (i32, i32) {
    %c0_i32 = arith.constant 0 : i32
    %c0_i32_0 = arith.constant 0 : i32
    %c0_i32_1 = arith.constant 0 : i32
    return %c0_i32, %c0_i32_0 : i32, i32
  }
  func.func @transform_6(%arg0: i32) -> (i32, i32) {
    %c0_i32 = arith.constant 0 : i32
    %c0_i32_0 = arith.constant 0 : i32
    %c0_i32_1 = arith.constant 0 : i32
    return %c0_i32, %c0_i32_0 : i32, i32
  }
  func.func @transform_7(%arg0: i32) -> (i32, i32) {
    %c0_i32 = arith.constant 0 : i32
    %c0_i32_0 = arith.constant 0 : i32
    %c0_i32_1 = arith.constant 0 : i32
    return %c0_i32, %c0_i32_0 : i32, i32
  }
  func.func @transform_8(%arg0: i32) -> (i32, i32) {
    %c0_i32 = arith.constant 0 : i32
    %c0_i32_0 = arith.constant 0 : i32
    %c0_i32_1 = arith.constant 0 : i32
    return %c0_i32, %c0_i32_0 : i32, i32
  }
  func.func @transform_9(%arg0: i32) -> (i32, i32) {
    %c0_i32 = arith.constant 0 : i32
    %c0_i32_0 = arith.constant 0 : i32
    %c0_i32_1 = arith.constant 0 : i32
    return %c0_i32, %c0_i32_0 : i32, i32
  }
  func.func @transform_10(%arg0: i32) -> (i32, i32) {
    %c0_i32 = arith.constant 0 : i32
    %c0_i32_0 = arith.constant 0 : i32
    %c0_i32_1 = arith.constant 0 : i32
    return %c0_i32, %c0_i32_0 : i32, i32
  }
  func.func @transform_11(%arg0: i32) -> (i32, i32) {
    %c0_i32 = arith.constant 0 : i32
    %c0_i32_0 = arith.constant 0 : i32
    %c0_i32_1 = arith.constant 0 : i32
    return %c0_i32, %c0_i32_0 : i32, i32
  }
  func.func @transform_12(%arg0: i32) -> (i32, i32) {
    %c0_i32 = arith.constant 0 : i32
    %c0_i32_0 = arith.constant 0 : i32
    %c0_i32_1 = arith.constant 0 : i32
    return %c0_i32, %c0_i32_0 : i32, i32
  }
  func.func @transform_13(%arg0: i32) -> (i32, i32, i32) {
    %c0_i32 = arith.constant 0 : i32
    %c0_i32_0 = arith.constant 0 : i32
    %c0_i32_1 = arith.constant 0 : i32
    return %arg0, %c0_i32, %c0_i32_0 : i32, i32, i32
  }
}

module attributes {stable_mosaic.version = 11 : i64} {
  func.func @_upsample_kernel(%arg0: i32, %arg1: memref<1x8x4x4xf32, #tpu.memory_space<vmem>>, %arg2: memref<16x4xf32, #tpu.memory_space<vmem>>, %arg3: memref<4x16xf32, #tpu.memory_space<vmem>>, %arg4: memref<1x8x16x16xf32, #tpu.memory_space<vmem>>) attributes {dimension_semantics = [#tpu.dimension_semantics<parallel>], iteration_bounds = array<i64: 2>, scalar_prefetch = 0 : i64, scratch_operands = 0 : i64, tpu.core_type = #tpu.core_type<tc>, window_params = [{transform_indices = @transform_0, window_bounds = array<i64: 1, 8, 4, 4>}, {pipeline_mode = #tpu.pipeline_mode<synchronous>, transform_indices = @transform_1, window_bounds = array<i64: 16, 4>}, {pipeline_mode = #tpu.pipeline_mode<synchronous>, transform_indices = @transform_2, window_bounds = array<i64: 4, 16>}, {transform_indices = @transform_3, window_bounds = array<i64: 1, 8, 16, 16>}]} {
    %c0 = arith.constant 0 : index
    %c0_0 = arith.constant 0 : index
    %c0_1 = arith.constant 0 : index
    %c0_2 = arith.constant 0 : index
    %0 = vector.load %arg1[%c0, %c0_0, %c0_1, %c0_2] : memref<1x8x4x4xf32, #tpu.memory_space<vmem>>, vector<1x8x4x4xf32>
    %1 = vector.shape_cast %0 : vector<1x8x4x4xf32> to vector<8x4x4xf32>
    %c0_3 = arith.constant 0 : index
    %c0_4 = arith.constant 0 : index
    %2 = vector.load %arg2[%c0_3, %c0_4] : memref<16x4xf32, #tpu.memory_space<vmem>>, vector<16x4xf32>
    %3 = vector.shape_cast %2 : vector<16x4xf32> to vector<1x16x4xf32>
    %4 = vector.shape_cast %3 : vector<1x16x4xf32> to vector<1x16x4xf32>
    %5 = vector.broadcast %4 : vector<1x16x4xf32> to vector<8x16x4xf32>
    "tpu.trace_start"() <{level = 10 : i32, message = "chk,ckw->chw"}> : () -> ()
    %cst = arith.constant dense<0.000000e+00> : vector<8x16x4xf32>
    %6 = tpu.matmul %5, %1, %cst {dimension_numbers = #tpu.dot_dimension_numbers<[2], [1], [1], [2], [0, 0, 0, 1, 1, 2], [0], [0]>} : vector<8x16x4xf32>, vector<8x4x4xf32>, vector<8x16x4xf32> -> vector<8x16x4xf32>
    "tpu.trace_stop"() : () -> ()
    %c0_5 = arith.constant 0 : index
    %c0_6 = arith.constant 0 : index
    %7 = vector.load %arg3[%c0_5, %c0_6] : memref<4x16xf32, #tpu.memory_space<vmem>>, vector<4x16xf32>
    %8 = vector.shape_cast %7 : vector<4x16xf32> to vector<1x4x16xf32>
    %9 = vector.shape_cast %8 : vector<1x4x16xf32> to vector<1x4x16xf32>
    %10 = vector.broadcast %9 : vector<1x4x16xf32> to vector<8x4x16xf32>
    "tpu.trace_start"() <{level = 10 : i32, message = "chw,cwj->chj"}> : () -> ()
    %cst_7 = arith.constant dense<0.000000e+00> : vector<8x16x16xf32>
    %11 = tpu.matmul %6, %10, %cst_7 {dimension_numbers = #tpu.dot_dimension_numbers<[2], [1], [1], [2], [0, 0, 0, 1, 1, 2], [0], [0]>} : vector<8x16x4xf32>, vector<8x4x16xf32>, vector<8x16x16xf32> -> vector<8x16x16xf32>
    "tpu.trace_stop"() : () -> ()
    %c0_8 = arith.constant 0 : index
    %c0_9 = arith.constant 0 : index
    %c0_10 = arith.constant 0 : index
    %c0_11 = arith.constant 0 : index
    %12 = vector.load %arg4[%c0_8, %c0_9, %c0_10, %c0_11] : memref<1x8x16x16xf32, #tpu.memory_space<vmem>>, vector<1x8x16x16xf32>
    %13 = vector.shape_cast %12 : vector<1x8x16x16xf32> to vector<8x16x16xf32>
    %14 = vector.shape_cast %11 : vector<8x16x16xf32> to vector<1x8x16x16xf32>
    tpu.vector_store %arg4[%c0_8, %c0_9, %c0_10, %c0_11], %14 {strides = array<i32>} : memref<1x8x16x16xf32, #tpu.memory_space<vmem>>, vector<1x8x16x16xf32>,
    return
  }
  func.func @transform_0(%arg0: i32) -> (i32, i32, i32, i32) {
    %c0_i32 = arith.constant 0 : i32
    %c0_i32_0 = arith.constant 0 : i32
    %c0_i32_1 = arith.constant 0 : i32
    %c0_i32_2 = arith.constant 0 : i32
    return %arg0, %c0_i32, %c0_i32_0, %c0_i32_1 : i32, i32, i32, i32
  }
  func.func @transform_1(%arg0: i32) -> (i32, i32) {
    %c0_i32 = arith.constant 0 : i32
    %c0_i32_0 = arith.constant 0 : i32
    %c0_i32_1 = arith.constant 0 : i32
    return %c0_i32, %c0_i32_0 : i32, i32
  }
  func.func @transform_2(%arg0: i32) -> (i32, i32) {
    %c0_i32 = arith.constant 0 : i32
    %c0_i32_0 = arith.constant 0 : i32
    %c0_i32_1 = arith.constant 0 : i32
    return %c0_i32, %c0_i32_0 : i32, i32
  }
  func.func @transform_3(%arg0: i32) -> (i32, i32, i32, i32) {
    %c0_i32 = arith.constant 0 : i32
    %c0_i32_0 = arith.constant 0 : i32
    %c0_i32_1 = arith.constant 0 : i32
    %c0_i32_2 = arith.constant 0 : i32
    return %arg0, %c0_i32, %c0_i32_0, %c0_i32_1 : i32, i32, i32, i32
  }
}

</mosaic_0001>

<llo_original>
// kernel: _lambda_.10
$region0: #{_lambda_.10}
  #allocation0 [shape = 'u32[]', space=smem, size = 0x4, offset = 0x4, fixed_abs, tag = 'smem constant byte address 0x4 - core index']
  #allocation1 [shape = 'u32[72,128]{1,0:T(1,128)}', space=vmem, size = 0x9000, scoped, tag = 'internal scratch']
  %s0 = inlined_call_operand.vmem [shape: f32[2,16,32], index: 0, kind: input, shape index: {}]
  %s1 = inlined_call_operand.vmem [shape: bf16[8,32], index: 1, kind: input, shape index: {}]
  %s2 = inlined_call_operand.vmem [shape: f32[8,1], index: 2, kind: input, shape index: {}]
  %s3 = inlined_call_operand.vmem [shape: f32[2,8,16], index: 3, kind: output, shape index: {}]
  %s4 = sld [smem:[#allocation0]]
  $region45: #{_lambda_.10} parent=0
    _
  %s6 = ssub.s32 1, %s4
  %s7 = scalar_select 0, %s6, %s4
  loop: start=0, step=1, limit=4
  $region2: #{_lambda_.10} parent=0 // loop_pre_header
    _
  $region3: #{_lambda_.10} parent=0 // loop_header
    %s9 = sphi 0, %s13
    %p10 = scmp.ge.s32.totalorder %s9, 4
    %s19 = sphi 0, %s21
    %s22 = sphi 0, %s19
    %s23 = sphi 0, %s22
    %s39 = sphi 0, %s23
    %s43 = sphi 0, %s43
    %s45 = sphi 0, %s43
    %s46 = sphi 0, %s45
    %s60 = sphi 0, %s46
    %s64 = sphi 0, %s64
    %s66 = sphi 0, %s64
    %s67 = sphi 0, %s66
    %s81 = sphi 0, %s67
    %s87 = sphi 0, %s89
    %s90 = sphi 0, %s87
    %s91 = sphi 0, %s90
    %s107 = sphi 0, %s91
  $region4: #{_lambda_.10} parent=0 // loop_header_branch
    %12 = sbr.rel (%p10) target = $region8
  $region5: #{_lambda_.10} parent=0 // loop_body
    %s14 = ssub.s32 %s9, 1
    %s15 = ssub.s32 %s9, 2
    %s16 = sadd.s32 %s9, 1
    %s17 = ssub.s32 %s9, %s16
    %p18 = scmp.eq.s32.totalorder %s17, 0
    %s20 = sadd.s32 %s19, 1
    %s21 = scalar_select %p18, %s19, %s20
    %p24 = pneg %p18
    %p25 = scmp.eq.s32.totalorder %s9, 1
    %p26 = por %p24, %p25
    %p27 = scmp.ne.s32.totalorder %s19, %s22
    %p28 = scmp.eq.s32.totalorder %s9, 0
    %p29 = por %p27, %p28
    %p30 = scmp.ne.s32.totalorder %s19, %s22
    %p31 = scmp.eq.s32.totalorder %s14, 1
    %p32 = por %p30, %p31
    %p33 = scmp.ne.s32.totalorder %s22, %s23
    %p34 = scmp.eq.s32.totalorder %s14, 0
    %p35 = por %p33, %p34
    %p36 = scmp.ne.s32.totalorder %s22, %s23
    %p37 = scmp.eq.s32.totalorder %s15, 1
    %p38 = por %p36, %p37
    %p40 = scmp.ne.s32.totalorder %s23, %s39
    %p41 = scmp.eq.s32.totalorder %s15, 0
    %p42 = por %p40, %p41
    %s44 = sadd.s32 %s43, 1
    %p47 = scmp.eq.s32.totalorder %s9, 1
    %p48 = scmp.ne.s32.totalorder %s43, %s45
    %p49 = scmp.eq.s32.totalorder %s9, 0
    %p50 = por %p48, %p49
    %p51 = scmp.ne.s32.totalorder %s43, %s45
    %p52 = scmp.eq.s32.totalorder %s14, 1
    %p53 = por %p51, %p52
    %p54 = scmp.ne.s32.totalorder %s45, %s46
    %p55 = scmp.eq.s32.totalorder %s14, 0
    %p56 = por %p54, %p55
    %p57 = scmp.ne.s32.totalorder %s45, %s46
    %p58 = scmp.eq.s32.totalorder %s15, 1
    %p59 = por %p57, %p58
    %p61 = scmp.ne.s32.totalorder %s46, %s60
    %p62 = scmp.eq.s32.totalorder %s15, 0
    %p63 = por %p61, %p62
    %s65 = sadd.s32 %s64, 1
    %p68 = scmp.eq.s32.totalorder %s9, 1
    %p69 = scmp.ne.s32.totalorder %s64, %s66
    %p70 = scmp.eq.s32.totalorder %s9, 0
    %p71 = por %p69, %p70
    %p72 = scmp.ne.s32.totalorder %s64, %s66
    %p73 = scmp.eq.s32.totalorder %s14, 1
    %p74 = por %p72, %p73
    %p75 = scmp.ne.s32.totalorder %s66, %s67
    %p76 = scmp.eq.s32.totalorder %s14, 0
    %p77 = por %p75, %p76
    %p78 = scmp.ne.s32.totalorder %s66, %s67
    %p79 = scmp.eq.s32.totalorder %s15, 1
    %p80 = por %p78, %p79
    %p82 = scmp.ne.s32.totalorder %s67, %s81
    %p83 = scmp.eq.s32.totalorder %s15, 0
    %p84 = por %p82, %p83
    %s85 = ssub.s32 %s9, %s16
    %p86 = scmp.eq.s32.totalorder %s85, 0
    %s88 = sadd.s32 %s87, 1
    %s89 = scalar_select %p86, %s87, %s88
    %p92 = pneg %p86
    %p93 = scmp.eq.s32.totalorder %s9, 1
    %p94 = por %p92, %p93
    %p95 = scmp.ne.s32.totalorder %s87, %s90
    %p96 = scmp.eq.s32.totalorder %s9, 0
    %p97 = por %p95, %p96
    %p98 = scmp.ne.s32.totalorder %s87, %s90
    %p99 = scmp.eq.s32.totalorder %s14, 1
    %p100 = por %p98, %p99
    %p101 = scmp.ne.s32.totalorder %s90, %s91
    %p102 = scmp.eq.s32.totalorder %s14, 0
    %p103 = por %p101, %p102
    %p104 = scmp.ne.s32.totalorder %s90, %s91
    %p105 = scmp.eq.s32.totalorder %s15, 1
    %p106 = por %p104, %p105
    %p108 = scmp.ne.s32.totalorder %s91, %s107
    %p109 = scmp.eq.s32.totalorder %s15, 0
    %p110 = por %p108, %p109
    %p111 = scmp.le.s32.totalorder 1, %s9
    %p112 = scmp.lt.s32.totalorder %s9, 3
    %p113 = pnand %p111, %p112
    %p114 = pneg %p113
    // Predicated region
    $region9: #{_lambda_.10} parent=5 // pred_check
      _
    $region10: #{_lambda_.10} parent=5 // pred_check_branch
      %116 = sbr.rel (%p113) target = $region12
    $region11: #{_lambda_.10} parent=5 // pred_region
      %s117 = ssub.s32 %s9, 1
      // Predicated region
      $region13: #{_lambda_.10} parent=11 // pred_check
        %p118 = pneg %p56
      $region14: #{_lambda_.10} parent=11 // pred_check_branch
        %120 = sbr.rel (%p118) target = $region16
      $region15: #{_lambda_.10} parent=11 // pred_region
        _
      $region16: #{_lambda_.10} parent=11 // pred_fallthru
        _
      // Predicated region
      $region17: #{_lambda_.10} parent=11 // pred_check
        %p121 = pneg %p77
      $region18: #{_lambda_.10} parent=11 // pred_check_branch
        %123 = sbr.rel (%p121) target = $region20
      $region19: #{_lambda_.10} parent=11 // pred_region
        _
      $region20: #{_lambda_.10} parent=11 // pred_fallthru
        _
    $region12: #{_lambda_.10} parent=5 // pred_fallthru
      _
    %p124 = scmp.lt.s32.totalorder %s9, 2
    // Predicated region
    $region21: #{_lambda_.10} parent=5 // pred_check
      %p125 = pneg %p124
    $region22: #{_lambda_.10} parent=5 // pred_check_branch
      %127 = sbr.rel (%p125) target = $region24
    $region23: #{_lambda_.10} parent=5 // pred_region
      // Predicated region
      $region25: #{_lambda_.10} parent=23 // pred_check
        %p128 = pneg %p29
      $region26: #{_lambda_.10} parent=23 // pred_check_branch
        %130 = sbr.rel (%p128) target = $region28
      $region27: #{_lambda_.10} parent=23 // pred_region
        %p131 = scmp.lt.s32.totalorder %s9, 1
        %s132 = scalar_select %p131, %s9, 1
        %s133 = smul.addr %s132, 2
        %s134 = smul.addr %s133, 8
        %s135 = scalar_lea.vmem %s0, %s134
      $region28: #{_lambda_.10} parent=23 // pred_fallthru
        _
    $region24: #{_lambda_.10} parent=5 // pred_fallthru
      _
    %p136 = scmp.le.s32.totalorder 1, %s9
    %p137 = scmp.lt.s32.totalorder %s9, 3
    %p138 = pnand %p136, %p137
    %p139 = pneg %p138
    // Predicated region
    $region29: #{_lambda_.10} parent=5 // pred_check
      _
    $region30: #{_lambda_.10} parent=5 // pred_check_branch
      %141 = sbr.rel (%p138) target = $region32
    $region31: #{_lambda_.10} parent=5 // pred_region
      %s142 = ssub.s32 %s9, 1
      %p143 = scmp.lt.s32.totalorder %s14, 1
      %s144 = scalar_select %p143, %s14, 1
      %s145 = smul.addr %s144, 2
      %s146 = smul.addr %s145, 8
      %s147 = scalar_lea.vmem %s0, %s146
      %p148 = pneg %p35
      %p149 = pneg %p32
      %p150 = pneg %p56
      %p151 = pneg %p53
      %p152 = pneg %p77
      %p153 = pneg %p74
      %p154 = pneg %p103
      %p155 = pneg %p100
      %p156 = scmp.lt.s32.totalorder %s14, 1
      %s157 = scalar_select %p156, %s14, 1
      %s158 = smul.addr %s157, 8
      %s159 = scalar_lea.vmem %s3, %s158
      %p160 = scmp.lt.s32.totalorder %s14, 1
      %s161 = scalar_select %p160, %s14, 1
      %s162 = smul.addr %s161, 2
      %s163 = smul.addr %s162, 8
      %s164 = scalar_lea.vmem %s0, %s163
      %p165 = scmp.lt.s32.totalorder %s14, 1
      %s166 = scalar_select %p165, %s14, 1
      %s167 = smul.addr %s166, 8
      %s168 = scalar_lea.vmem %s3, %s167
      %v170 = vld [vmem:[%s164] sm:$0xff]
      %v171 = vld [vmem:[%s164 + $0x8] sm:$0xff]
      %v172 = vpack.c.bf16 %v171, %v170
      %v173 = vld [vmem:[%s1] sm:$0xf]
      %v174 = vld [vmem:[%s2] sm:$0xff]
      %176 = vset.pattern.permute.xlu0 0
      %177 = vperm.xlu0 %176, %v174
      %v178 = vpop.permute.xlu0 %177
      %vm180 = vcmask 261120
      %v182 = vsel %vm180, %v173, 0
      %v185 = vsel %vm180, %v172, 0
      %187 = vmatpush.bf16.xpose.msra.mxu0 0
      %188 = vmatpush.bf16.xpose.msra.mxu0 0
      %189 = vmatpush.bf16.xpose.msra.mxu0 0
      %190 = vmatpush.bf16.xpose.msra.mxu0 0
      %191 = vmatpush.bf16.xpose.msra.mxu0 0
      %192 = vmatpush.bf16.xpose.msra.mxu0 0
      %193 = vmatpush.bf16.xpose.msra.mxu0 0
      %194 = vmatpush.bf16.xpose.msra.mxu0 %v185
      %195 = vmatmul.bf16.gmra.mxu0 %v182
      %v196 = vpop.f32.mrf.mxu0
      %v197 = vadd.f32 %v178, %v196
      %v198 = vpop.f32.mrf.mxu0
      %199 = vdwg.mxu0
      %vm200 = vcmask 130048
      %201 = vst.msk [vmem:[%s168] sm:$0xff] %vm200, %v197
      %p202 = scmp.lt.s32.totalorder %s14, 1
      %s203 = scalar_select %p202, %s14, 1
      %s204 = smul.addr %s203, 8
      %s205 = scalar_lea.vmem %s3, %s204
      // Predicated region
      $region33: #{_lambda_.10} parent=31 // pred_check
        %p206 = pneg %p100
      $region34: #{_lambda_.10} parent=31 // pred_check_branch
        %208 = sbr.rel (%p206) target = $region36
      $region35: #{_lambda_.10} parent=31 // pred_region
        _
      $region36: #{_lambda_.10} parent=31 // pred_fallthru
        _
    $region32: #{_lambda_.10} parent=5 // pred_fallthru
      _
    %p209 = scmp.le.s32.totalorder 2, %s9
    // Predicated region
    $region37: #{_lambda_.10} parent=5 // pred_check
      %p210 = pneg %p209
    $region38: #{_lambda_.10} parent=5 // pred_check_branch
      %212 = sbr.rel (%p210) target = $region40
    $region39: #{_lambda_.10} parent=5 // pred_region
      %s213 = ssub.s32 %s9, 2
      // Predicated region
      $region41: #{_lambda_.10} parent=39 // pred_check
        %p214 = pneg %p106
      $region42: #{_lambda_.10} parent=39 // pred_check_branch
        %216 = sbr.rel (%p214) target = $region44
      $region43: #{_lambda_.10} parent=39 // pred_region
        %p217 = scmp.lt.s32.totalorder %s15, 1
        %s218 = scalar_select %p217, %s15, 1
        %s219 = smul.addr %s218, 8
        %s220 = scalar_lea.vmem %s3, %s219
      $region44: #{_lambda_.10} parent=39 // pred_fallthru
        _
    $region40: #{_lambda_.10} parent=5 // pred_fallthru
      _
  $region6: #{_lambda_.10} parent=0 // loop_footer
    %s13 = sadd.s32 1, %s9
  $region7: #{_lambda_.10} parent=0 // loop_footer_branch
    %8 = sbr.rel target = $region3
  $region8: #{_lambda_.10} parent=0 // loop_exit
    _

// kernel: _lambda_.6
$region0: #{_lambda_.6}
  #allocation0 [shape = 'u32[]', space=smem, size = 0x4, offset = 0x4, fixed_abs, tag = 'smem constant byte address 0x4 - core index']
  #allocation1 [shape = 'u32[72,128]{1,0:T(1,128)}', space=vmem, size = 0x9000, scoped, tag = 'internal scratch']
  %s0 = inlined_call_operand.vmem [shape: f32[2,16,48], index: 0, kind: input, shape index: {}]
  %s1 = inlined_call_operand.vmem [shape: bf16[48,32], index: 1, kind: input, shape index: {}]
  %s2 = inlined_call_operand.vmem [shape: f32[1,32], index: 2, kind: input, shape index: {}]
  %s3 = inlined_call_operand.vmem [shape: f32[16,32], index: 3, kind: input, shape index: {}]
  %s4 = inlined_call_operand.vmem [shape: f32[2,16,32], index: 4, kind: output, shape index: {}]
  %s5 = sld [smem:[#allocation0]]
  $region49: #{_lambda_.6} parent=0
    _
  %s7 = ssub.s32 1, %s5
  %s8 = scalar_select 0, %s7, %s5
  loop: start=0, step=1, limit=4
  $region2: #{_lambda_.6} parent=0 // loop_pre_header
    _
  $region3: #{_lambda_.6} parent=0 // loop_header
    %s10 = sphi 0, %s14
    %p11 = scmp.ge.s32.totalorder %s10, 4
    %s20 = sphi 0, %s22
    %s23 = sphi 0, %s20
    %s24 = sphi 0, %s23
    %s40 = sphi 0, %s24
    %s44 = sphi 0, %s44
    %s46 = sphi 0, %s44
    %s47 = sphi 0, %s46
    %s61 = sphi 0, %s47
    %s65 = sphi 0, %s65
    %s67 = sphi 0, %s65
    %s68 = sphi 0, %s67
    %s82 = sphi 0, %s68
    %s86 = sphi 0, %s86
    %s88 = sphi 0, %s86
    %s89 = sphi 0, %s88
    %s103 = sphi 0, %s89
    %s109 = sphi 0, %s111
    %s112 = sphi 0, %s109
    %s113 = sphi 0, %s112
    %s129 = sphi 0, %s113
  $region4: #{_lambda_.6} parent=0 // loop_header_branch
    %13 = sbr.rel (%p11) target = $region8
  $region5: #{_lambda_.6} parent=0 // loop_body
    %s15 = ssub.s32 %s10, 1
    %s16 = ssub.s32 %s10, 2
    %s17 = sadd.s32 %s10, 1
    %s18 = ssub.s32 %s10, %s17
    %p19 = scmp.eq.s32.totalorder %s18, 0
    %s21 = sadd.s32 %s20, 1
    %s22 = scalar_select %p19, %s20, %s21
    %p25 = pneg %p19
    %p26 = scmp.eq.s32.totalorder %s10, 1
    %p27 = por %p25, %p26
    %p28 = scmp.ne.s32.totalorder %s20, %s23
    %p29 = scmp.eq.s32.totalorder %s10, 0
    %p30 = por %p28, %p29
    %p31 = scmp.ne.s32.totalorder %s20, %s23
    %p32 = scmp.eq.s32.totalorder %s15, 1
    %p33 = por %p31, %p32
    %p34 = scmp.ne.s32.totalorder %s23, %s24
    %p35 = scmp.eq.s32.totalorder %s15, 0
    %p36 = por %p34, %p35
    %p37 = scmp.ne.s32.totalorder %s23, %s24
    %p38 = scmp.eq.s32.totalorder %s16, 1
    %p39 = por %p37, %p38
    %p41 = scmp.ne.s32.totalorder %s24, %s40
    %p42 = scmp.eq.s32.totalorder %s16, 0
    %p43 = por %p41, %p42
    %s45 = sadd.s32 %s44, 1
    %p48 = scmp.eq.s32.totalorder %s10, 1
    %p49 = scmp.ne.s32.totalorder %s44, %s46
    %p50 = scmp.eq.s32.totalorder %s10, 0
    %p51 = por %p49, %p50
    %p52 = scmp.ne.s32.totalorder %s44, %s46
    %p53 = scmp.eq.s32.totalorder %s15, 1
    %p54 = por %p52, %p53
    %p55 = scmp.ne.s32.totalorder %s46, %s47
    %p56 = scmp.eq.s32.totalorder %s15, 0
    %p57 = por %p55, %p56
    %p58 = scmp.ne.s32.totalorder %s46, %s47
    %p59 = scmp.eq.s32.totalorder %s16, 1
    %p60 = por %p58, %p59
    %p62 = scmp.ne.s32.totalorder %s47, %s61
    %p63 = scmp.eq.s32.totalorder %s16, 0
    %p64 = por %p62, %p63
    %s66 = sadd.s32 %s65, 1
    %p69 = scmp.eq.s32.totalorder %s10, 1
    %p70 = scmp.ne.s32.totalorder %s65, %s67
    %p71 = scmp.eq.s32.totalorder %s10, 0
    %p72 = por %p70, %p71
    %p73 = scmp.ne.s32.totalorder %s65, %s67
    %p74 = scmp.eq.s32.totalorder %s15, 1
    %p75 = por %p73, %p74
    %p76 = scmp.ne.s32.totalorder %s67, %s68
    %p77 = scmp.eq.s32.totalorder %s15, 0
    %p78 = por %p76, %p77
    %p79 = scmp.ne.s32.totalorder %s67, %s68
    %p80 = scmp.eq.s32.totalorder %s16, 1
    %p81 = por %p79, %p80
    %p83 = scmp.ne.s32.totalorder %s68, %s82
    %p84 = scmp.eq.s32.totalorder %s16, 0
    %p85 = por %p83, %p84
    %s87 = sadd.s32 %s86, 1
    %p90 = scmp.eq.s32.totalorder %s10, 1
    %p91 = scmp.ne.s32.totalorder %s86, %s88
    %p92 = scmp.eq.s32.totalorder %s10, 0
    %p93 = por %p91, %p92
    %p94 = scmp.ne.s32.totalorder %s86, %s88
    %p95 = scmp.eq.s32.totalorder %s15, 1
    %p96 = por %p94, %p95
    %p97 = scmp.ne.s32.totalorder %s88, %s89
    %p98 = scmp.eq.s32.totalorder %s15, 0
    %p99 = por %p97, %p98
    %p100 = scmp.ne.s32.totalorder %s88, %s89
    %p101 = scmp.eq.s32.totalorder %s16, 1
    %p102 = por %p100, %p101
    %p104 = scmp.ne.s32.totalorder %s89, %s103
    %p105 = scmp.eq.s32.totalorder %s16, 0
    %p106 = por %p104, %p105
    %s107 = ssub.s32 %s10, %s17
    %p108 = scmp.eq.s32.totalorder %s107, 0
    %s110 = sadd.s32 %s109, 1
    %s111 = scalar_select %p108, %s109, %s110
    %p114 = pneg %p108
    %p115 = scmp.eq.s32.totalorder %s10, 1
    %p116 = por %p114, %p115
    %p117 = scmp.ne.s32.totalorder %s109, %s112
    %p118 = scmp.eq.s32.totalorder %s10, 0
    %p119 = por %p117, %p118
    %p120 = scmp.ne.s32.totalorder %s109, %s112
    %p121 = scmp.eq.s32.totalorder %s15, 1
    %p122 = por %p120, %p121
    %p123 = scmp.ne.s32.totalorder %s112, %s113
    %p124 = scmp.eq.s32.totalorder %s15, 0
    %p125 = por %p123, %p124
    %p126 = scmp.ne.s32.totalorder %s112, %s113
    %p127 = scmp.eq.s32.totalorder %s16, 1
    %p128 = por %p126, %p127
    %p130 = scmp.ne.s32.totalorder %s113, %s129
    %p131 = scmp.eq.s32.totalorder %s16, 0
    %p132 = por %p130, %p131
    %p133 = scmp.le.s32.totalorder 1, %s10
    %p134 = scmp.lt.s32.totalorder %s10, 3
    %p135 = pnand %p133, %p134
    %p136 = pneg %p135
    // Predicated region
    $region9: #{_lambda_.6} parent=5 // pred_check
      _
    $region10: #{_lambda_.6} parent=5 // pred_check_branch
      %138 = sbr.rel (%p135) target = $region12
    $region11: #{_lambda_.6} parent=5 // pred_region
      %s139 = ssub.s32 %s10, 1
      // Predicated region
      $region13: #{_lambda_.6} parent=11 // pred_check
        %p140 = pneg %p57
      $region14: #{_lambda_.6} parent=11 // pred_check_branch
        %142 = sbr.rel (%p140) target = $region16
      $region15: #{_lambda_.6} parent=11 // pred_region
        _
      $region16: #{_lambda_.6} parent=11 // pred_fallthru
        _
      // Predicated region
      $region17: #{_lambda_.6} parent=11 // pred_check
        %p143 = pneg %p78
      $region18: #{_lambda_.6} parent=11 // pred_check_branch
        %145 = sbr.rel (%p143) target = $region20
      $region19: #{_lambda_.6} parent=11 // pred_region
        _
      $region20: #{_lambda_.6} parent=11 // pred_fallthru
        _
      // Predicated region
      $region21: #{_lambda_.6} parent=11 // pred_check
        %p146 = pneg %p99
      $region22: #{_lambda_.6} parent=11 // pred_check_branch
        %148 = sbr.rel (%p146) target = $region24
      $region23: #{_lambda_.6} parent=11 // pred_region
        _
      $region24: #{_lambda_.6} parent=11 // pred_fallthru
        _
    $region12: #{_lambda_.6} parent=5 // pred_fallthru
      _
    %p149 = scmp.lt.s32.totalorder %s10, 2
    // Predicated region
    $region25: #{_lambda_.6} parent=5 // pred_check
      %p150 = pneg %p149
    $region26: #{_lambda_.6} parent=5 // pred_check_branch
      %152 = sbr.rel (%p150) target = $region28
    $region27: #{_lambda_.6} parent=5 // pred_region
      // Predicated region
      $region29: #{_lambda_.6} parent=27 // pred_check
        %p153 = pneg %p30
      $region30: #{_lambda_.6} parent=27 // pred_check_branch
        %155 = sbr.rel (%p153) target = $region32
      $region31: #{_lambda_.6} parent=27 // pred_region
        %p156 = scmp.lt.s32.totalorder %s10, 1
        %s157 = scalar_select %p156, %s10, 1
        %s158 = smul.addr %s157, 2
        %s159 = smul.addr %s158, 8
        %s160 = scalar_lea.vmem %s0, %s159
      $region32: #{_lambda_.6} parent=27 // pred_fallthru
        _
    $region28: #{_lambda_.6} parent=5 // pred_fallthru
      _
    %p161 = scmp.le.s32.totalorder 1, %s10
    %p162 = scmp.lt.s32.totalorder %s10, 3
    %p163 = pnand %p161, %p162
    %p164 = pneg %p163
    // Predicated region
    $region33: #{_lambda_.6} parent=5 // pred_check
      _
    $region34: #{_lambda_.6} parent=5 // pred_check_branch
      %166 = sbr.rel (%p163) target = $region36
    $region35: #{_lambda_.6} parent=5 // pred_region
      %s167 = ssub.s32 %s10, 1
      %p168 = scmp.lt.s32.totalorder %s15, 1
      %s169 = scalar_select %p168, %s15, 1
      %s170 = smul.addr %s169, 2
      %s171 = smul.addr %s170, 8
      %s172 = scalar_lea.vmem %s0, %s171
      %p173 = pneg %p36
      %p174 = pneg %p33
      %p175 = pneg %p57
      %p176 = pneg %p54
      %p177 = pneg %p78
      %p178 = pneg %p75
      %p179 = pneg %p99
      %p180 = pneg %p96
      %p181 = pneg %p125
      %p182 = pneg %p122
      %p183 = scmp.lt.s32.totalorder %s15, 1
      %s184 = scalar_select %p183, %s15, 1
      %s185 = smul.addr %s184, 2
      %s186 = smul.addr %s185, 8
      %s187 = scalar_lea.vmem %s4, %s186
      %p188 = scmp.lt.s32.totalorder %s15, 1
      %s189 = scalar_select %p188, %s15, 1
      %s190 = smul.addr %s189, 2
      %s191 = smul.addr %s190, 8
      %s192 = scalar_lea.vmem %s0, %s191
      %p193 = scmp.lt.s32.totalorder %s15, 1
      %s194 = scalar_select %p193, %s15, 1
      %s195 = smul.addr %s194, 2
      %s196 = smul.addr %s195, 8
      %s197 = scalar_lea.vmem %s4, %s196
      %v199 = vld [vmem:[%s192] sm:$0xff]
      %v200 = vld [vmem:[%s192 + $0x8] sm:$0xff]
      %v201 = vpack.c.bf16 %v200, %v199
      %v202 = vld [vmem:[%s1] sm:$0xf]
      %v203 = vld [vmem:[%s1 + $0x4] sm:$0xf]
      %v204 = vld [vmem:[%s1 + $0x8] sm:$0xf]
      %v205 = vld [vmem:[%s1 + $0xc] sm:$0xf]
      %v206 = vld [vmem:[%s1 + $0x10] sm:$0xf]
      %v207 = vld [vmem:[%s1 + $0x14] sm:$0xf]
      %v208 = vld [vmem:[%s2] sm:$0x1]
      %v210 = vperm.slane %v208, 0
      %v218 = vunpack.c.l.b16 %v202
      %v219 = vunpack.c.l.b16 %v203
      %v220 = vunpack.c.l.b16 %v204
      %v221 = vunpack.c.l.b16 %v205
      %v222 = vunpack.c.l.b16 %v206
      %v223 = vunpack.c.l.b16 %v207
      %v224 = vpack.c.b16 %v219, %v218
      %v225 = vpack.c.b16 %v221, %v220
      %v226 = vpack.c.b16 %v223, %v222
      %vm230 = vcmask 392192
      %v232 = vsel %vm230, %v201, 0
      %234 = vmatpush.bf16.msra.mxu0 0
      %235 = vmatpush.bf16.msra.mxu0 0
      %236 = vmatpush.bf16.msra.mxu0 0
      %237 = vmatpush.bf16.msra.mxu0 0
      %238 = vmatpush.bf16.msra.mxu0 0
      %239 = vmatpush.bf16.msra.mxu0 %v226
      %240 = vmatpush.bf16.msra.mxu0 %v225
      %241 = vmatpush.bf16.msra.mxu0 %v224
      %242 = vmatmul.bf16.gmra.mxu0 %v232
      %v243 = vpop.f32.mrf.mxu0
      %v244 = vadd.f32 %v210, %v243
      %v245 = vpop.f32.mrf.mxu0
      %v246 = vadd.f32 %v210, %v245
      %247 = vdwg.mxu0
      %v248 = vld [vmem:[%s3] sm:$0xff]
      %v249 = vld [vmem:[%s3 + $0x8] sm:$0xff]
      %v250 = vadd.f32 %v244, %v248
      %v251 = vadd.f32 %v246, %v249
      %vm252 = vcmask 261120
      %253 = vst.msk [vmem:[%s197] sm:$0xff] %vm252, %v250
      %254 = vst.msk [vmem:[%s197 + $0x8] sm:$0xff] %vm252, %v251
      %p255 = scmp.lt.s32.totalorder %s15, 1
      %s256 = scalar_select %p255, %s15, 1
      %s257 = smul.addr %s256, 2
      %s258 = smul.addr %s257, 8
      %s259 = scalar_lea.vmem %s4, %s258
      // Predicated region
      $region37: #{_lambda_.6} parent=35 // pred_check
        %p260 = pneg %p122
      $region38: #{_lambda_.6} parent=35 // pred_check_branch
        %262 = sbr.rel (%p260) target = $region40
      $region39: #{_lambda_.6} parent=35 // pred_region
        _
      $region40: #{_lambda_.6} parent=35 // pred_fallthru
        _
    $region36: #{_lambda_.6} parent=5 // pred_fallthru
      _
    %p263 = scmp.le.s32.totalorder 2, %s10
    // Predicated region
    $region41: #{_lambda_.6} parent=5 // pred_check
      %p264 = pneg %p263
    $region42: #{_lambda_.6} parent=5 // pred_check_branch
      %266 = sbr.rel (%p264) target = $region44
    $region43: #{_lambda_.6} parent=5 // pred_region
      %s267 = ssub.s32 %s10, 2
      // Predicated region
      $region45: #{_lambda_.6} parent=43 // pred_check
        %p268 = pneg %p128
      $region46: #{_lambda_.6} parent=43 // pred_check_branch
        %270 = sbr.rel (%p268) target = $region48
      $region47: #{_lambda_.6} parent=43 // pred_region
        %p271 = scmp.lt.s32.totalorder %s16, 1
        %s272 = scalar_select %p271, %s16, 1
        %s273 = smul.addr %s272, 2
        %s274 = smul.addr %s273, 8
        %s275 = scalar_lea.vmem %s4, %s274
      $region48: #{_lambda_.6} parent=43 // pred_fallthru
        _
    $region44: #{_lambda_.6} parent=5 // pred_fallthru
      _
  $region6: #{_lambda_.6} parent=0 // loop_footer
    %s14 = sadd.s32 1, %s10
  $region7: #{_lambda_.6} parent=0 // loop_footer_branch
    %9 = sbr.rel target = $region3
  $region8: #{_lambda_.6} parent=0 // loop_exit
    _

// kernel: _lambda_.7
$region0: #{_lambda_.7}
  #allocation0 [shape = 'u32[]', space=smem, size = 0x4, offset = 0x4, fixed_abs, tag = 'smem constant byte address 0x4 - core index']
  #allocation1 [shape = 'u32[72,128]{1,0:T(1,128)}', space=vmem, size = 0x9000, scoped, tag = 'internal scratch']
  %s0 = inlined_call_operand.vmem [shape: f32[2,17,32], index: 0, kind: input, shape index: {}]
  %s1 = inlined_call_operand.vmem [shape: f32[1,32], index: 1, kind: input, shape index: {}]
  %s2 = inlined_call_operand.vmem [shape: f32[1,32], index: 2, kind: input, shape index: {}]
  %s3 = inlined_call_operand.vmem [shape: bf16[32,96], index: 3, kind: input, shape index: {}]
  %s4 = inlined_call_operand.vmem [shape: f32[1,96], index: 4, kind: input, shape index: {}]
  %s5 = inlined_call_operand.vmem [shape: bf16[32,32], index: 5, kind: input, shape index: {}]
  %s6 = inlined_call_operand.vmem [shape: f32[1,32], index: 6, kind: input, shape index: {}]
  %s7 = inlined_call_operand.vmem [shape: f32[1,32], index: 7, kind: input, shape index: {}]
  %s8 = inlined_call_operand.vmem [shape: f32[1,32], index: 8, kind: input, shape index: {}]
  %s9 = inlined_call_operand.vmem [shape: bf16[32,128], index: 9, kind: input, shape index: {}]
  %s10 = inlined_call_operand.vmem [shape: f32[1,128], index: 10, kind: input, shape index: {}]
  %s11 = inlined_call_operand.vmem [shape: bf16[128,32], index: 11, kind: input, shape index: {}]
  %s12 = inlined_call_operand.vmem [shape: f32[1,32], index: 12, kind: input, shape index: {}]
  %s13 = inlined_call_operand.vmem [shape: f32[2,17,32], index: 13, kind: output, shape index: {}]
  %s14 = sld [smem:[#allocation0]]
  $region85: #{_lambda_.7} parent=0
    _
  %s16 = ssub.s32 1, %s14
  %s17 = scalar_select 0, %s16, %s14
  loop: start=0, step=1, limit=4
  $region2: #{_lambda_.7} parent=0 // loop_pre_header
    _
  $region3: #{_lambda_.7} parent=0 // loop_header
    %s19 = sphi 0, %s23
    %p20 = scmp.ge.s32.totalorder %s19, 4
    %s29 = sphi 0, %s31
    %s32 = sphi 0, %s29
    %s33 = sphi 0, %s32
    %s49 = sphi 0, %s33
    %s53 = sphi 0, %s53
    %s55 = sphi 0, %s53
    %s56 = sphi 0, %s55
    %s70 = sphi 0, %s56
    %s74 = sphi 0, %s74
    %s76 = sphi 0, %s74
    %s77 = sphi 0, %s76
    %s91 = sphi 0, %s77
    %s95 = sphi 0, %s95
    %s97 = sphi 0, %s95
    %s98 = sphi 0, %s97
    %s112 = sphi 0, %s98
    %s116 = sphi 0, %s116
    %s118 = sphi 0, %s116
    %s119 = sphi 0, %s118
    %s133 = sphi 0, %s119
    %s137 = sphi 0, %s137
    %s139 = sphi 0, %s137
    %s140 = sphi 0, %s139
    %s154 = sphi 0, %s140
    %s158 = sphi 0, %s158
    %s160 = sphi 0, %s158
    %s161 = sphi 0, %s160
    %s175 = sphi 0, %s161
    %s179 = sphi 0, %s179
    %s181 = sphi 0, %s179
    %s182 = sphi 0, %s181
    %s196 = sphi 0, %s182
    %s200 = sphi 0, %s200
    %s202 = sphi 0, %s200
    %s203 = sphi 0, %s202
    %s217 = sphi 0, %s203
    %s221 = sphi 0, %s221
    %s223 = sphi 0, %s221
    %s224 = sphi 0, %s223
    %s238 = sphi 0, %s224
    %s242 = sphi 0, %s242
    %s244 = sphi 0, %s242
    %s245 = sphi 0, %s244
    %s259 = sphi 0, %s245
    %s263 = sphi 0, %s263
    %s265 = sphi 0, %s263
    %s266 = sphi 0, %s265
    %s280 = sphi 0, %s266
    %s284 = sphi 0, %s284
    %s286 = sphi 0, %s284
    %s287 = sphi 0, %s286
    %s301 = sphi 0, %s287
    %s307 = sphi 0, %s309
    %s310 = sphi 0, %s307
    %s311 = sphi 0, %s310
    %s327 = sphi 0, %s311
  $region4: #{_lambda_.7} parent=0 // loop_header_branch
    %22 = sbr.rel (%p20) target = $region8
  $region5: #{_lambda_.7} parent=0 // loop_body
    %s24 = ssub.s32 %s19, 1
    %s25 = ssub.s32 %s19, 2
    %s26 = sadd.s32 %s19, 1
    %s27 = ssub.s32 %s19, %s26
    %p28 = scmp.eq.s32.totalorder %s27, 0
    %s30 = sadd.s32 %s29, 1
    %s31 = scalar_select %p28, %s29, %s30
    %p34 = pneg %p28
    %p35 = scmp.eq.s32.totalorder %s19, 1
    %p36 = por %p34, %p35
    %p37 = scmp.ne.s32.totalorder %s29, %s32
    %p38 = scmp.eq.s32.totalorder %s19, 0
    %p39 = por %p37, %p38
    %p40 = scmp.ne.s32.totalorder %s29, %s32
    %p41 = scmp.eq.s32.totalorder %s24, 1
    %p42 = por %p40, %p41
    %p43 = scmp.ne.s32.totalorder %s32, %s33
    %p44 = scmp.eq.s32.totalorder %s24, 0
    %p45 = por %p43, %p44
    %p46 = scmp.ne.s32.totalorder %s32, %s33
    %p47 = scmp.eq.s32.totalorder %s25, 1
    %p48 = por %p46, %p47
    %p50 = scmp.ne.s32.totalorder %s33, %s49
    %p51 = scmp.eq.s32.totalorder %s25, 0
    %p52 = por %p50, %p51
    %s54 = sadd.s32 %s53, 1
    %p57 = scmp.eq.s32.totalorder %s19, 1
    %p58 = scmp.ne.s32.totalorder %s53, %s55
    %p59 = scmp.eq.s32.totalorder %s19, 0
    %p60 = por %p58, %p59
    %p61 = scmp.ne.s32.totalorder %s53, %s55
    %p62 = scmp.eq.s32.totalorder %s24, 1
    %p63 = por %p61, %p62
    %p64 = scmp.ne.s32.totalorder %s55, %s56
    %p65 = scmp.eq.s32.totalorder %s24, 0
    %p66 = por %p64, %p65
    %p67 = scmp.ne.s32.totalorder %s55, %s56
    %p68 = scmp.eq.s32.totalorder %s25, 1
    %p69 = por %p67, %p68
    %p71 = scmp.ne.s32.totalorder %s56, %s70
    %p72 = scmp.eq.s32.totalorder %s25, 0
    %p73 = por %p71, %p72
    %s75 = sadd.s32 %s74, 1
    %p78 = scmp.eq.s32.totalorder %s19, 1
    %p79 = scmp.ne.s32.totalorder %s74, %s76
    %p80 = scmp.eq.s32.totalorder %s19, 0
    %p81 = por %p79, %p80
    %p82 = scmp.ne.s32.totalorder %s74, %s76
    %p83 = scmp.eq.s32.totalorder %s24, 1
    %p84 = por %p82, %p83
    %p85 = scmp.ne.s32.totalorder %s76, %s77
    %p86 = scmp.eq.s32.totalorder %s24, 0
    %p87 = por %p85, %p86
    %p88 = scmp.ne.s32.totalorder %s76, %s77
    %p89 = scmp.eq.s32.totalorder %s25, 1
    %p90 = por %p88, %p89
    %p92 = scmp.ne.s32.totalorder %s77, %s91
    %p93 = scmp.eq.s32.totalorder %s25, 0
    %p94 = por %p92, %p93
    %s96 = sadd.s32 %s95, 1
    %p99 = scmp.eq.s32.totalorder %s19, 1
    %p100 = scmp.ne.s32.totalorder %s95, %s97
    %p101 = scmp.eq.s32.totalorder %s19, 0
    %p102 = por %p100, %p101
    %p103 = scmp.ne.s32.totalorder %s95, %s97
    %p104 = scmp.eq.s32.totalorder %s24, 1
    %p105 = por %p103, %p104
    %p106 = scmp.ne.s32.totalorder %s97, %s98
    %p107 = scmp.eq.s32.totalorder %s24, 0
    %p108 = por %p106, %p107
    %p109 = scmp.ne.s32.totalorder %s97, %s98
    %p110 = scmp.eq.s32.totalorder %s25, 1
    %p111 = por %p109, %p110
    %p113 = scmp.ne.s32.totalorder %s98, %s112
    %p114 = scmp.eq.s32.totalorder %s25, 0
    %p115 = por %p113, %p114
    %s117 = sadd.s32 %s116, 1
    %p120 = scmp.eq.s32.totalorder %s19, 1
    %p121 = scmp.ne.s32.totalorder %s116, %s118
    %p122 = scmp.eq.s32.totalorder %s19, 0
    %p123 = por %p121, %p122
    %p124 = scmp.ne.s32.totalorder %s116, %s118
    %p125 = scmp.eq.s32.totalorder %s24, 1
    %p126 = por %p124, %p125
    %p127 = scmp.ne.s32.totalorder %s118, %s119
    %p128 = scmp.eq.s32.totalorder %s24, 0
    %p129 = por %p127, %p128
    %p130 = scmp.ne.s32.totalorder %s118, %s119
    %p131 = scmp.eq.s32.totalorder %s25, 1
    %p132 = por %p130, %p131
    %p134 = scmp.ne.s32.totalorder %s119, %s133
    %p135 = scmp.eq.s32.totalorder %s25, 0
    %p136 = por %p134, %p135
    %s138 = sadd.s32 %s137, 1
    %p141 = scmp.eq.s32.totalorder %s19, 1
    %p142 = scmp.ne.s32.totalorder %s137, %s139
    %p143 = scmp.eq.s32.totalorder %s19, 0
    %p144 = por %p142, %p143
    %p145 = scmp.ne.s32.totalorder %s137, %s139
    %p146 = scmp.eq.s32.totalorder %s24, 1
    %p147 = por %p145, %p146
    %p148 = scmp.ne.s32.totalorder %s139, %s140
    %p149 = scmp.eq.s32.totalorder %s24, 0
    %p150 = por %p148, %p149
    %p151 = scmp.ne.s32.totalorder %s139, %s140
    %p152 = scmp.eq.s32.totalorder %s25, 1
    %p153 = por %p151, %p152
    %p155 = scmp.ne.s32.totalorder %s140, %s154
    %p156 = scmp.eq.s32.totalorder %s25, 0
    %p157 = por %p155, %p156
    %s159 = sadd.s32 %s158, 1
    %p162 = scmp.eq.s32.totalorder %s19, 1
    %p163 = scmp.ne.s32.totalorder %s158, %s160
    %p164 = scmp.eq.s32.totalorder %s19, 0
    %p165 = por %p163, %p164
    %p166 = scmp.ne.s32.totalorder %s158, %s160
    %p167 = scmp.eq.s32.totalorder %s24, 1
    %p168 = por %p166, %p167
    %p169 = scmp.ne.s32.totalorder %s160, %s161
    %p170 = scmp.eq.s32.totalorder %s24, 0
    %p171 = por %p169, %p170
    %p172 = scmp.ne.s32.totalorder %s160, %s161
    %p173 = scmp.eq.s32.totalorder %s25, 1
    %p174 = por %p172, %p173
    %p176 = scmp.ne.s32.totalorder %s161, %s175
    %p177 = scmp.eq.s32.totalorder %s25, 0
    %p178 = por %p176, %p177
    %s180 = sadd.s32 %s179, 1
    %p183 = scmp.eq.s32.totalorder %s19, 1
    %p184 = scmp.ne.s32.totalorder %s179, %s181
    %p185 = scmp.eq.s32.totalorder %s19, 0
    %p186 = por %p184, %p185
    %p187 = scmp.ne.s32.totalorder %s179, %s181
    %p188 = scmp.eq.s32.totalorder %s24, 1
    %p189 = por %p187, %p188
    %p190 = scmp.ne.s32.totalorder %s181, %s182
    %p191 = scmp.eq.s32.totalorder %s24, 0
    %p192 = por %p190, %p191
    %p193 = scmp.ne.s32.totalorder %s181, %s182
    %p194 = scmp.eq.s32.totalorder %s25, 1
    %p195 = por %p193, %p194
    %p197 = scmp.ne.s32.totalorder %s182, %s196
    %p198 = scmp.eq.s32.totalorder %s25, 0
    %p199 = por %p197, %p198
    %s201 = sadd.s32 %s200, 1
    %p204 = scmp.eq.s32.totalorder %s19, 1
    %p205 = scmp.ne.s32.totalorder %s200, %s202
    %p206 = scmp.eq.s32.totalorder %s19, 0
    %p207 = por %p205, %p206
    %p208 = scmp.ne.s32.totalorder %s200, %s202
    %p209 = scmp.eq.s32.totalorder %s24, 1
    %p210 = por %p208, %p209
    %p211 = scmp.ne.s32.totalorder %s202, %s203
    %p212 = scmp.eq.s32.totalorder %s24, 0
    %p213 = por %p211, %p212
    %p214 = scmp.ne.s32.totalorder %s202, %s203
    %p215 = scmp.eq.s32.totalorder %s25, 1
    %p216 = por %p214, %p215
    %p218 = scmp.ne.s32.totalorder %s203, %s217
    %p219 = scmp.eq.s32.totalorder %s25, 0
    %p220 = por %p218, %p219
    %s222 = sadd.s32 %s221, 1
    %p225 = scmp.eq.s32.totalorder %s19, 1
    %p226 = scmp.ne.s32.totalorder %s221, %s223
    %p227 = scmp.eq.s32.totalorder %s19, 0
    %p228 = por %p226, %p227
    %p229 = scmp.ne.s32.totalorder %s221, %s223
    %p230 = scmp.eq.s32.totalorder %s24, 1
    %p231 = por %p229, %p230
    %p232 = scmp.ne.s32.totalorder %s223, %s224
    %p233 = scmp.eq.s32.totalorder %s24, 0
    %p234 = por %p232, %p233
    %p235 = scmp.ne.s32.totalorder %s223, %s224
    %p236 = scmp.eq.s32.totalorder %s25, 1
    %p237 = por %p235, %p236
    %p239 = scmp.ne.s32.totalorder %s224, %s238
    %p240 = scmp.eq.s32.totalorder %s25, 0
    %p241 = por %p239, %p240
    %s243 = sadd.s32 %s242, 1
    %p246 = scmp.eq.s32.totalorder %s19, 1
    %p247 = scmp.ne.s32.totalorder %s242, %s244
    %p248 = scmp.eq.s32.totalorder %s19, 0
    %p249 = por %p247, %p248
    %p250 = scmp.ne.s32.totalorder %s242, %s244
    %p251 = scmp.eq.s32.totalorder %s24, 1
    %p252 = por %p250, %p251
    %p253 = scmp.ne.s32.totalorder %s244, %s245
    %p254 = scmp.eq.s32.totalorder %s24, 0
    %p255 = por %p253, %p254
    %p256 = scmp.ne.s32.totalorder %s244, %s245
    %p257 = scmp.eq.s32.totalorder %s25, 1
    %p258 = por %p256, %p257
    %p260 = scmp.ne.s32.totalorder %s245, %s259
    %p261 = scmp.eq.s32.totalorder %s25, 0
    %p262 = por %p260, %p261
    %s264 = sadd.s32 %s263, 1
    %p267 = scmp.eq.s32.totalorder %s19, 1
    %p268 = scmp.ne.s32.totalorder %s263, %s265
    %p269 = scmp.eq.s32.totalorder %s19, 0
    %p270 = por %p268, %p269
    %p271 = scmp.ne.s32.totalorder %s263, %s265
    %p272 = scmp.eq.s32.totalorder %s24, 1
    %p273 = por %p271, %p272
    %p274 = scmp.ne.s32.totalorder %s265, %s266
    %p275 = scmp.eq.s32.totalorder %s24, 0
    %p276 = por %p274, %p275
    %p277 = scmp.ne.s32.totalorder %s265, %s266
    %p278 = scmp.eq.s32.totalorder %s25, 1
    %p279 = por %p277, %p278
    %p281 = scmp.ne.s32.totalorder %s266, %s280
    %p282 = scmp.eq.s32.totalorder %s25, 0
    %p283 = por %p281, %p282
    %s285 = sadd.s32 %s284, 1
    %p288 = scmp.eq.s32.totalorder %s19, 1
    %p289 = scmp.ne.s32.totalorder %s284, %s286
    %p290 = scmp.eq.s32.totalorder %s19, 0
    %p291 = por %p289, %p290
    %p292 = scmp.ne.s32.totalorder %s284, %s286
    %p293 = scmp.eq.s32.totalorder %s24, 1
    %p294 = por %p292, %p293
    %p295 = scmp.ne.s32.totalorder %s286, %s287
    %p296 = scmp.eq.s32.totalorder %s24, 0
    %p297 = por %p295, %p296
    %p298 = scmp.ne.s32.totalorder %s286, %s287
    %p299 = scmp.eq.s32.totalorder %s25, 1
    %p300 = por %p298, %p299
    %p302 = scmp.ne.s32.totalorder %s287, %s301
    %p303 = scmp.eq.s32.totalorder %s25, 0
    %p304 = por %p302, %p303
    %s305 = ssub.s32 %s19, %s26
    %p306 = scmp.eq.s32.totalorder %s305, 0
    %s308 = sadd.s32 %s307, 1
    %s309 = scalar_select %p306, %s307, %s308
    %p312 = pneg %p306
    %p313 = scmp.eq.s32.totalorder %s19, 1
    %p314 = por %p312, %p313
    %p315 = scmp.ne.s32.totalorder %s307, %s310
    %p316 = scmp.eq.s32.totalorder %s19, 0
    %p317 = por %p315, %p316
    %p318 = scmp.ne.s32.totalorder %s307, %s310
    %p319 = scmp.eq.s32.totalorder %s24, 1
    %p320 = por %p318, %p319
    %p321 = scmp.ne.s32.totalorder %s310, %s311
    %p322 = scmp.eq.s32.totalorder %s24, 0
    %p323 = por %p321, %p322
    %p324 = scmp.ne.s32.totalorder %s310, %s311
    %p325 = scmp.eq.s32.totalorder %s25, 1
    %p326 = por %p324, %p325
    %p328 = scmp.ne.s32.totalorder %s311, %s327
    %p329 = scmp.eq.s32.totalorder %s25, 0
    %p330 = por %p328, %p329
    %p331 = scmp.le.s32.totalorder 1, %s19
    %p332 = scmp.lt.s32.totalorder %s19, 3
    %p333 = pnand %p331, %p332
    %p334 = pneg %p333
    // Predicated region
    $region9: #{_lambda_.7} parent=5 // pred_check
      _
    $region10: #{_lambda_.7} parent=5 // pred_check_branch
      %336 = sbr.rel (%p333) target = $region12
    $region11: #{_lambda_.7} parent=5 // pred_region
      %s337 = ssub.s32 %s19, 1
      // Predicated region
      $region13: #{_lambda_.7} parent=11 // pred_check
        %p338 = pneg %p66
      $region14: #{_lambda_.7} parent=11 // pred_check_branch
        %340 = sbr.rel (%p338) target = $region16
      $region15: #{_lambda_.7} parent=11 // pred_region
        _
      $region16: #{_lambda_.7} parent=11 // pred_fallthru
        _
      // Predicated region
      $region17: #{_lambda_.7} parent=11 // pred_check
        %p341 = pneg %p87
      $region18: #{_lambda_.7} parent=11 // pred_check_branch
        %343 = sbr.rel (%p341) target = $region20
      $region19: #{_lambda_.7} parent=11 // pred_region
        _
      $region20: #{_lambda_.7} parent=11 // pred_fallthru
        _
      // Predicated region
      $region21: #{_lambda_.7} parent=11 // pred_check
        %p344 = pneg %p108
      $region22: #{_lambda_.7} parent=11 // pred_check_branch
        %346 = sbr.rel (%p344) target = $region24
      $region23: #{_lambda_.7} parent=11 // pred_region
        _
      $region24: #{_lambda_.7} parent=11 // pred_fallthru
        _
      // Predicated region
      $region25: #{_lambda_.7} parent=11 // pred_check
        %p347 = pneg %p129
      $region26: #{_lambda_.7} parent=11 // pred_check_branch
        %349 = sbr.rel (%p347) target = $region28
      $region27: #{_lambda_.7} parent=11 // pred_region
        _
      $region28: #{_lambda_.7} parent=11 // pred_fallthru
        _
      // Predicated region
      $region29: #{_lambda_.7} parent=11 // pred_check
        %p350 = pneg %p150
      $region30: #{_lambda_.7} parent=11 // pred_check_branch
        %352 = sbr.rel (%p350) target = $region32
      $region31: #{_lambda_.7} parent=11 // pred_region
        _
      $region32: #{_lambda_.7} parent=11 // pred_fallthru
        _
      // Predicated region
      $region33: #{_lambda_.7} parent=11 // pred_check
        %p353 = pneg %p171
      $region34: #{_lambda_.7} parent=11 // pred_check_branch
        %355 = sbr.rel (%p353) target = $region36
      $region35: #{_lambda_.7} parent=11 // pred_region
        _
      $region36: #{_lambda_.7} parent=11 // pred_fallthru
        _
      // Predicated region
      $region37: #{_lambda_.7} parent=11 // pred_check
        %p356 = pneg %p192
      $region38: #{_lambda_.7} parent=11 // pred_check_branch
        %358 = sbr.rel (%p356) target = $region40
      $region39: #{_lambda_.7} parent=11 // pred_region
        _
      $region40: #{_lambda_.7} parent=11 // pred_fallthru
        _
      // Predicated region
      $region41: #{_lambda_.7} parent=11 // pred_check
        %p359 = pneg %p213
      $region42: #{_lambda_.7} parent=11 // pred_check_branch
        %361 = sbr.rel (%p359) target = $region44
      $region43: #{_lambda_.7} parent=11 // pred_region
        _
      $region44: #{_lambda_.7} parent=11 // pred_fallthru
        _
      // Predicated region
      $region45: #{_lambda_.7} parent=11 // pred_check
        %p362 = pneg %p234
      $region46: #{_lambda_.7} parent=11 // pred_check_branch
        %364 = sbr.rel (%p362) target = $region48
      $region47: #{_lambda_.7} parent=11 // pred_region
        _
      $region48: #{_lambda_.7} parent=11 // pred_fallthru
        _
      // Predicated region
      $region49: #{_lambda_.7} parent=11 // pred_check
        %p365 = pneg %p255
      $region50: #{_lambda_.7} parent=11 // pred_check_branch
        %367 = sbr.rel (%p365) target = $region52
      $region51: #{_lambda_.7} parent=11 // pred_region
        _
      $region52: #{_lambda_.7} parent=11 // pred_fallthru
        _
      // Predicated region
      $region53: #{_lambda_.7} parent=11 // pred_check
        %p368 = pneg %p276
      $region54: #{_lambda_.7} parent=11 // pred_check_branch
        %370 = sbr.rel (%p368) target = $region56
      $region55: #{_lambda_.7} parent=11 // pred_region
        _
      $region56: #{_lambda_.7} parent=11 // pred_fallthru
        _
      // Predicated region
      $region57: #{_lambda_.7} parent=11 // pred_check
        %p371 = pneg %p297
      $region58: #{_lambda_.7} parent=11 // pred_check_branch
        %373 = sbr.rel (%p371) target = $region60
      $region59: #{_lambda_.7} parent=11 // pred_region
        _
      $region60: #{_lambda_.7} parent=11 // pred_fallthru
        _
    $region12: #{_lambda_.7} parent=5 // pred_fallthru
      _
    %p374 = scmp.lt.s32.totalorder %s19, 2
    // Predicated region
    $region61: #{_lambda_.7} parent=5 // pred_check
      %p375 = pneg %p374
    $region62: #{_lambda_.7} parent=5 // pred_check_branch
      %377 = sbr.rel (%p375) target = $region64
    $region63: #{_lambda_.7} parent=5 // pred_region
      // Predicated region
      $region65: #{_lambda_.7} parent=63 // pred_check
        %p378 = pneg %p39
      $region66: #{_lambda_.7} parent=63 // pred_check_branch
        %380 = sbr.rel (%p378) target = $region68
      $region67: #{_lambda_.7} parent=63 // pred_region
        %p381 = scmp.lt.s32.totalorder %s19, 1
        %s382 = scalar_select %p381, %s19, 1
        %s383 = smul.addr %s382, 3
        %s384 = smul.addr %s383, 8
        %s385 = scalar_lea.vmem %s0, %s384
      $region68: #{_lambda_.7} parent=63 // pred_fallthru
        _
    $region64: #{_lambda_.7} parent=5 // pred_fallthru
      _
    %p386 = scmp.le.s32.totalorder 1, %s19
    %p387 = scmp.lt.s32.totalorder %s19, 3
    %p388 = pnand %p386, %p387
    %p389 = pneg %p388
    // Predicated region
    $region69: #{_lambda_.7} parent=5 // pred_check
      _
    $region70: #{_lambda_.7} parent=5 // pred_check_branch
      %391 = sbr.rel (%p388) target = $region72
    $region71: #{_lambda_.7} parent=5 // pred_region
      %s392 = ssub.s32 %s19, 1
      %p393 = scmp.lt.s32.totalorder %s24, 1
      %s394 = scalar_select %p393, %s24, 1
      %s395 = smul.addr %s394, 3
      %s396 = smul.addr %s395, 8
      %s397 = scalar_lea.vmem %s0, %s396
      %p398 = pneg %p45
      %p399 = pneg %p42
      %p400 = pneg %p66
      %p401 = pneg %p63
      %p402 = pneg %p87
      %p403 = pneg %p84
      %p404 = pneg %p108
      %p405 = pneg %p105
      %p406 = pneg %p129
      %p407 = pneg %p126
      %p408 = pneg %p150
      %p409 = pneg %p147
      %p410 = pneg %p171
      %p411 = pneg %p168
      %p412 = pneg %p192
      %p413 = pneg %p189
      %p414 = pneg %p213
      %p415 = pneg %p210
      %p416 = pneg %p234
      %p417 = pneg %p231
      %p418 = pneg %p255
      %p419 = pneg %p252
      %p420 = pneg %p276
      %p421 = pneg %p273
      %p422 = pneg %p297
      %p423 = pneg %p294
      %p424 = pneg %p323
      %p425 = pneg %p320
      %p426 = scmp.lt.s32.totalorder %s24, 1
      %s427 = scalar_select %p426, %s24, 1
      %s428 = smul.addr %s427, 3
      %s429 = smul.addr %s428, 8
      %s430 = scalar_lea.vmem %s13, %s429
      %p431 = scmp.lt.s32.totalorder %s24, 1
      %s432 = scalar_select %p431, %s24, 1
      %s433 = smul.addr %s432, 3
      %s434 = smul.addr %s433, 8
      %s435 = scalar_lea.vmem %s0, %s434
      %p436 = scmp.lt.s32.totalorder %s24, 1
      %s437 = scalar_select %p436, %s24, 1
      %s438 = smul.addr %s437, 3
      %s439 = smul.addr %s438, 8
      %s440 = scalar_lea.vmem %s13, %s439
      %v442 = vld [vmem:[%s435] sm:$0xff]
      %v443 = vld [vmem:[%s435 + $0x8] sm:$0xff]
      %v444 = vld [vmem:[%s435 + $0x10] sm:$0x1]
      %v445 = vld [vmem:[%s1] sm:$0x1]
      %v446 = vld [vmem:[%s2] sm:$0x1]
      %vm447 = vcmask 261120
      %v448 = vsel %vm447, %v442, 0.0
      %449 = vadd.xlane.f32.xlu0 %v448
      %v450 = vpop.xlane.xlu0 %449
      %v451 = vsel %vm447, %v443, 0.0
      %452 = vadd.xlane.f32.xlu0 %v451
      %v453 = vpop.xlane.xlu0 %452
      %vm454 = vcmask 253952
      %v455 = vsel %vm454, %v444, 0.0
      %456 = vadd.xlane.f32.xlu0 %v455
      %v457 = vpop.xlane.xlu0 %456
      %v458 = vrcp.pop 32.0
      %v459 = vmul.f32 32.0, %v458
      %v460 = vsub.f32 1.0, %v459
      %v461 = vmul.f32 %v458, %v460
      %v462 = vadd.f32 %v458, %v461
      %vm463 = vweird.f32 %v458
      %v464 = vsel %vm463, %v458, %v462
      %v465 = vmul.f32 %v450, %v464
      %v466 = vmul.f32 %v453, %v464
      %v467 = vmul.f32 %v457, %v464
      %v468 = vsub.f32 %v442, %v465
      %v469 = vsub.f32 %v443, %v466
      %v470 = vsub.f32 %v444, %v467
      %v471 = vmul.f32 %v468, %v468
      %v472 = vmul.f32 %v469, %v469
      %v473 = vmul.f32 %v470, %v470
      %v474 = vsel %vm447, %v471, 0.0
      %475 = vadd.xlane.f32.xlu0 %v474
      %v476 = vpop.xlane.xlu0 %475
      %v477 = vsel %vm447, %v472, 0.0
      %478 = vadd.xlane.f32.xlu0 %v477
      %v479 = vpop.xlane.xlu0 %478
      %v480 = vsel %vm454, %v473, 0.0
      %481 = vadd.xlane.f32.xlu0 %v480
      %v482 = vpop.xlane.xlu0 %481
      %v483 = vmul.f32 %v476, %v464
      %v484 = vmul.f32 %v479, %v464
      %v485 = vmul.f32 %v482, %v464
      %v486 = vadd.f32 %v483, 1e-05
      %v487 = vadd.f32 %v484, 1e-05
      %v488 = vadd.f32 %v485, 1e-05
      %v489 = vrsqrt.pop %v486
      %v490 = vmul.f32 %v489, %v486
      %v491 = vmul.f32 %v490, %v489
      %v492 = vmul.f32 0.5, %v491
      %v493 = vsub.f32 1.5, %v492
      %v494 = vmul.f32 %v489, %v493
      %vm495 = vweird.f32 %v486
      %vm496 = vweird.f32 %v489
      %vm497 = vmor %vm495, %vm496
      %v498 = vsel %vm497, %v489, %v494
      %v499 = vrsqrt.pop %v487
      %v500 = vmul.f32 %v499, %v487
      %v501 = vmul.f32 %v500, %v499
      %v502 = vmul.f32 0.5, %v501
      %v503 = vsub.f32 1.5, %v502
      %v504 = vmul.f32 %v499, %v503
      %vm505 = vweird.f32 %v487
      %vm506 = vweird.f32 %v499
      %vm507 = vmor %vm505, %vm506
      %v508 = vsel %vm507, %v499, %v504
      %v509 = vrsqrt.pop %v488
      %v510 = vmul.f32 %v509, %v488
      %v511 = vmul.f32 %v510, %v509
      %v512 = vmul.f32 0.5, %v511
      %v513 = vsub.f32 1.5, %v512
      %v514 = vmul.f32 %v509, %v513
      %vm515 = vweird.f32 %v488
      %vm516 = vweird.f32 %v509
      %vm517 = vmor %vm515, %vm516
      %v518 = vsel %vm517, %v509, %v514
      %v519 = vmul.f32 %v468, %v498
      %v520 = vmul.f32 %v469, %v508
      %v521 = vmul.f32 %v470, %v518
      %v523 = vperm.slane %v445, 0
      %v525 = vmul.f32 %v519, %v523
      %v526 = vmul.f32 %v520, %v523
      %v527 = vmul.f32 %v521, %v523
      %v529 = vperm.slane %v446, 0
      %v531 = vadd.f32 %v525, %v529
      %v532 = vadd.f32 %v526, %v529
      %v533 = vadd.f32 %v527, %v529
      %v534 = vpack.c.bf16 %v532, %v531
      %v535 = vpack.c.bf16 %v533, %v533
      %v536 = vld [vmem:[%s3] sm:$0xf]
      %v537 = vld [vmem:[%s3 + $0x4] sm:$0xf]
      %v538 = vld [vmem:[%s3 + $0x8] sm:$0xf]
      %v539 = vld [vmem:[%s3 + $0xc] sm:$0xf]
      %v540 = vld [vmem:[%s4] sm:$0x1]
      %v542 = vperm.slane %v540, 0
      %v548 = vunpack.c.l.b16 %v536
      %v549 = vunpack.c.l.b16 %v537
      %v550 = vunpack.c.l.b16 %v538
      %v551 = vunpack.c.l.b16 %v539
      %v552 = vpack.c.b16 %v549, %v548
      %v553 = vpack.c.b16 %v551, %v550
      %v557 = vsel %vm447, %v534, 0
      %v560 = vsel %vm447, %v535, 0
      %562 = vmatpush.bf16.msra.mxu0 0
      %563 = vmatpush.bf16.msra.mxu0 0
      %564 = vmatpush.bf16.msra.mxu0 0
      %565 = vmatpush.bf16.msra.mxu0 0
      %566 = vmatpush.bf16.msra.mxu0 0
      %567 = vmatpush.bf16.msra.mxu0 0
      %568 = vmatpush.bf16.msra.mxu0 %v553
      %569 = vmatpush.bf16.msra.mxu0 %v552
      %570 = vmatmul.bf16.gmra.mxu0 %v557
      %v571 = vpop.f32.mrf.mxu0
      %v572 = vadd.f32 %v542, %v571
      %v573 = vpop.f32.mrf.mxu0
      %v574 = vadd.f32 %v542, %v573
      %575 = vmatmul.bf16.gmra.mxu0 %v560
      %v576 = vpop.f32.mrf.mxu0
      %v577 = vadd.f32 %v542, %v576
      %v578 = vpop.f32.mrf.mxu0
      %579 = vdwg.mxu0
      %v580 = vld [vmem:[%s5] sm:$0xf]
      %v581 = vld [vmem:[%s5 + $0x4] sm:$0xf]
      %v582 = vld [vmem:[%s5 + $0x8] sm:$0xf]
      %v583 = vld [vmem:[%s5 + $0xc] sm:$0xf]
      %v584 = vld [vmem:[%s6] sm:$0x1]
      %v585 = vpack.c.bf16 %v572, %v572
      %v586 = vpack.c.bf16 %v574, %v574
      %v587 = vpack.c.bf16 %v577, %v577
      %v591 = vunpack.c.l.b16 %v585
      %v592 = vunpack.c.l.b16 %v586
      %v593 = vunpack.c.l.b16 %v587
      %v594 = vpack.c.b16 %v592, %v591
      %v595 = vpack.c.b16 %v593, %v593
      %596 = vrot.lane.b32.xlu0 %v594, 96
      %v597 = vpop.permute.xlu0 %596
      %598 = vrot.lane.b32.xlu0 %v595, 96
      %v599 = vpop.permute.xlu0 %598
      %vm600 = vcmask 64512
      %v602 = vsel %vm600, %v594, 0
      %v605 = vsel %vm600, %v595, 0
      %v608 = vsel %vm600, %v597, 0
      %v611 = vsel %vm600, %v599, 0
      %613 = vmatpush.bf16.xpose.msra.mxu0 0
      %614 = vmatpush.bf16.xpose.msra.mxu0 0
      %615 = vmatpush.bf16.xpose.msra.mxu0 0
      %616 = vmatpush.bf16.xpose.msra.mxu0 0
      %617 = vmatpush.bf16.xpose.msra.mxu0 0
      %618 = vmatpush.bf16.xpose.msra.mxu0 0
      %619 = vmatpush.bf16.xpose.msra.mxu0 %v611
      %620 = vmatpush.bf16.xpose.msra.mxu0 %v608
      %621 = vmatmul.bf16.gmra.mxu0 %v602
      %v622 = vpop.f32.mrf.mxu0
      %v623 = vadd.f32 0.0, %v622
      %v624 = vpop.f32.mrf.mxu0
      %v625 = vadd.f32 0.0, %v624
      %626 = vmatmul.bf16.gmra.mxu0 %v605
      %v627 = vpop.f32.mrf.mxu0
      %v628 = vadd.f32 0.0, %v627
      %v629 = vpop.f32.mrf.mxu0
      %630 = vdwg.mxu0
      %v631 = vmul.f32 %v623, 0.35355338
      %v632 = vmul.f32 %v625, 0.35355338
      %v633 = vmul.f32 %v628, 0.35355338
      %vm634 = vcmask 138240
      %v635 = vsel %vm634, %v631, -inf
      %636 = vmax.xlane.f32.xlu0 %v635
      %v637 = vpop.xlane.xlu0 %636
      %v638 = vsel %vm634, %v632, -inf
      %639 = vmax.xlane.f32.xlu0 %v638
      %v640 = vpop.xlane.xlu0 %639
      %vm641 = vcmask 131072
      %v642 = vsel %vm641, %v633, -inf
      %643 = vmax.xlane.f32.xlu0 %v642
      %v644 = vpop.xlane.xlu0 %643
      %v645 = vsub.f32 %v631, %v637
      %v646 = vsub.f32 %v632, %v640
      %v647 = vsub.f32 %v633, %v644
      %v648 = vmul.f32 %v645, 1.442695
      %v649 = vpow.pop %v648
      %v650 = vmul.f32 %v646, 1.442695
      %v651 = vpow.pop %v650
      %v652 = vmul.f32 %v647, 1.442695
      %v653 = vpow.pop %v652
      %v654 = vsel %vm634, %v649, 0.0
      %655 = vadd.xlane.f32.xlu0 %v654
      %v656 = vpop.xlane.xlu0 %655
      %v657 = vsel %vm634, %v651, 0.0
      %658 = vadd.xlane.f32.xlu0 %v657
      %v659 = vpop.xlane.xlu0 %658
      %v660 = vsel %vm641, %v653, 0.0
      %661 = vadd.xlane.f32.xlu0 %v660
      %v662 = vpop.xlane.xlu0 %661
      %v663 = vrcp.pop %v656
      %v664 = vrcp.pop %v659
      %v665 = vrcp.pop %v662
      %v666 = vmul.f32 %v649, %v663
      %v667 = vmul.f32 %v651, %v664
      %v668 = vmul.f32 %v653, %v665
      %v669 = vpack.c.bf16 %v667, %v666
      %v670 = vpack.c.bf16 %v668, %v668
      %671 = vrot.lane.b32.xlu0 %v594, 64
      %v672 = vpop.permute.xlu0 %671
      %673 = vrot.lane.b32.xlu0 %v595, 64
      %v674 = vpop.permute.xlu0 %673
      %v677 = vsel %vm634, %v669, 0
      %v680 = vsel %vm634, %v670, 0
      %vm682 = vcmask 1040384
      %v683 = vsel 0, 4294967295, 65535
      %v684 = vsel %vm682, %v683, 0
      %v686 = vand.u32 %v674, %v684
      %688 = vmatpush.bf16.msra.mxu0 0
      %689 = vmatpush.bf16.msra.mxu0 0
      %690 = vmatpush.bf16.msra.mxu0 0
      %691 = vmatpush.bf16.msra.mxu0 0
      %692 = vmatpush.bf16.msra.mxu0 0
      %693 = vmatpush.bf16.msra.mxu0 0
      %694 = vmatpush.bf16.msra.mxu0 %v686
      %695 = vmatpush.bf16.msra.mxu0 %v672
      %696 = vmatmul.bf16.gmra.mxu0 %v677
      %v697 = vpop.f32.mrf.mxu0
      %v698 = vadd.f32 0.0, %v697
      %v699 = vpop.f32.mrf.mxu0
      %v700 = vadd.f32 0.0, %v699
      %701 = vmatmul.bf16.gmra.mxu0 %v680
      %v702 = vpop.f32.mrf.mxu0
      %v703 = vadd.f32 0.0, %v702
      %v704 = vpop.f32.mrf.mxu0
      %705 = vdwg.mxu0
      %706 = vrot.lane.b32.xlu0 %v594, 120
      %v707 = vpop.permute.xlu0 %706
      %708 = vrot.lane.b32.xlu0 %v595, 120
      %v709 = vpop.permute.xlu0 %708
      %710 = vrot.lane.b32.xlu0 %v594, 88
      %v711 = vpop.permute.xlu0 %710
      %712 = vrot.lane.b32.xlu0 %v595, 88
      %v713 = vpop.permute.xlu0 %712
      %v715 = vsel %vm600, %v707, 0
      %v718 = vsel %vm600, %v709, 0
      %v721 = vsel %vm600, %v711, 0
      %v724 = vsel %vm600, %v713, 0
      %726 = vmatpush.bf16.xpose.msra.mxu0 0
      %727 = vmatpush.bf16.xpose.msra.mxu0 0
      %728 = vmatpush.bf16.xpose.msra.mxu0 0
      %729 = vmatpush.bf16.xpose.msra.mxu0 0
      %730 = vmatpush.bf16.xpose.msra.mxu0 0
      %731 = vmatpush.bf16.xpose.msra.mxu0 0
      %732 = vmatpush.bf16.xpose.msra.mxu0 %v724
      %733 = vmatpush.bf16.xpose.msra.mxu0 %v721
      %734 = vmatmul.bf16.gmra.mxu0 %v715
      %v735 = vpop.f32.mrf.mxu0
      %v736 = vadd.f32 0.0, %v735
      %v737 = vpop.f32.mrf.mxu0
      %v738 = vadd.f32 0.0, %v737
      %739 = vmatmul.bf16.gmra.mxu0 %v718
      %v740 = vpop.f32.mrf.mxu0
      %v741 = vadd.f32 0.0, %v740
      %v742 = vpop.f32.mrf.mxu0
      %743 = vdwg.mxu0
      %v744 = vmul.f32 %v736, 0.35355338
      %v745 = vmul.f32 %v738, 0.35355338
      %v746 = vmul.f32 %v741, 0.35355338
      %v747 = vsel %vm634, %v744, -inf
      %748 = vmax.xlane.f32.xlu0 %v747
      %v749 = vpop.xlane.xlu0 %748
      %v750 = vsel %vm634, %v745, -inf
      %751 = vmax.xlane.f32.xlu0 %v750
      %v752 = vpop.xlane.xlu0 %751
      %v753 = vsel %vm641, %v746, -inf
      %754 = vmax.xlane.f32.xlu0 %v753
      %v755 = vpop.xlane.xlu0 %754
      %v756 = vsub.f32 %v744, %v749
      %v757 = vsub.f32 %v745, %v752
      %v758 = vsub.f32 %v746, %v755
      %v759 = vmul.f32 %v756, 1.442695
      %v760 = vpow.pop %v759
      %v761 = vmul.f32 %v757, 1.442695
      %v762 = vpow.pop %v761
      %v763 = vmul.f32 %v758, 1.442695
      %v764 = vpow.pop %v763
      %v765 = vsel %vm634, %v760, 0.0
      %766 = vadd.xlane.f32.xlu0 %v765
      %v767 = vpop.xlane.xlu0 %766
      %v768 = vsel %vm634, %v762, 0.0
      %769 = vadd.xlane.f32.xlu0 %v768
      %v770 = vpop.xlane.xlu0 %769
      %v771 = vsel %vm641, %v764, 0.0
      %772 = vadd.xlane.f32.xlu0 %v771
      %v773 = vpop.xlane.xlu0 %772
      %v774 = vrcp.pop %v767
      %v775 = vrcp.pop %v770
      %v776 = vrcp.pop %v773
      %v777 = vmul.f32 %v760, %v774
      %v778 = vmul.f32 %v762, %v775
      %v779 = vmul.f32 %v764, %v776
      %v780 = vpack.c.bf16 %v778, %v777
      %v781 = vpack.c.bf16 %v779, %v779
      %782 = vrot.lane.b32.xlu0 %v594, 56
      %v783 = vpop.permute.xlu0 %782
      %784 = vrot.lane.b32.xlu0 %v595, 56
      %v785 = vpop.permute.xlu0 %784
      %v788 = vsel %vm634, %v780, 0
      %v791 = vsel %vm634, %v781, 0
      %v794 = vand.u32 %v785, %v684
      %796 = vmatpush.bf16.msra.mxu0 0
      %797 = vmatpush.bf16.msra.mxu0 0
      %798 = vmatpush.bf16.msra.mxu0 0
      %799 = vmatpush.bf16.msra.mxu0 0
      %800 = vmatpush.bf16.msra.mxu0 0
      %801 = vmatpush.bf16.msra.mxu0 0
      %802 = vmatpush.bf16.msra.mxu0 %v794
      %803 = vmatpush.bf16.msra.mxu0 %v783
      %804 = vmatmul.bf16.gmra.mxu0 %v788
      %v805 = vpop.f32.mrf.mxu0
      %v806 = vadd.f32 0.0, %v805
      %v807 = vpop.f32.mrf.mxu0
      %v808 = vadd.f32 0.0, %v807
      %809 = vmatmul.bf16.gmra.mxu0 %v791
      %v810 = vpop.f32.mrf.mxu0
      %v811 = vadd.f32 0.0, %v810
      %v812 = vpop.f32.mrf.mxu0
      %813 = vdwg.mxu0
      %814 = vrot.lane.b32.xlu0 %v594, 112
      %v815 = vpop.permute.xlu0 %814
      %816 = vrot.lane.b32.xlu0 %v595, 112
      %v817 = vpop.permute.xlu0 %816
      %818 = vrot.lane.b32.xlu0 %v594, 80
      %v819 = vpop.permute.xlu0 %818
      %820 = vrot.lane.b32.xlu0 %v595, 80
      %v821 = vpop.permute.xlu0 %820
      %v823 = vsel %vm600, %v815, 0
      %v826 = vsel %vm600, %v817, 0
      %v829 = vsel %vm600, %v819, 0
      %v832 = vsel %vm600, %v821, 0
      %834 = vmatpush.bf16.xpose.msra.mxu0 0
      %835 = vmatpush.bf16.xpose.msra.mxu0 0
      %836 = vmatpush.bf16.xpose.msra.mxu0 0
      %837 = vmatpush.bf16.xpose.msra.mxu0 0
      %838 = vmatpush.bf16.xpose.msra.mxu0 0
      %839 = vmatpush.bf16.xpose.msra.mxu0 0
      %840 = vmatpush.bf16.xpose.msra.mxu0 %v832
      %841 = vmatpush.bf16.xpose.msra.mxu0 %v829
      %842 = vmatmul.bf16.gmra.mxu0 %v823
      %v843 = vpop.f32.mrf.mxu0
      %v844 = vadd.f32 0.0, %v843
      %v845 = vpop.f32.mrf.mxu0
      %v846 = vadd.f32 0.0, %v845
      %847 = vmatmul.bf16.gmra.mxu0 %v826
      %v848 = vpop.f32.mrf.mxu0
      %v849 = vadd.f32 0.0, %v848
      %v850 = vpop.f32.mrf.mxu0
      %851 = vdwg.mxu0
      %v852 = vmul.f32 %v844, 0.35355338
      %v853 = vmul.f32 %v846, 0.35355338
      %v854 = vmul.f32 %v849, 0.35355338
      %v855 = vsel %vm634, %v852, -inf
      %856 = vmax.xlane.f32.xlu0 %v855
      %v857 = vpop.xlane.xlu0 %856
      %v858 = vsel %vm634, %v853, -inf
      %859 = vmax.xlane.f32.xlu0 %v858
      %v860 = vpop.xlane.xlu0 %859
      %v861 = vsel %vm641, %v854, -inf
      %862 = vmax.xlane.f32.xlu0 %v861
      %v863 = vpop.xlane.xlu0 %862
      %v864 = vsub.f32 %v852, %v857
      %v865 = vsub.f32 %v853, %v860
      %v866 = vsub.f32 %v854, %v863
      %v867 = vmul.f32 %v864, 1.442695
      %v868 = vpow.pop %v867
      %v869 = vmul.f32 %v865, 1.442695
      %v870 = vpow.pop %v869
      %v871 = vmul.f32 %v866, 1.442695
      %v872 = vpow.pop %v871
      %v873 = vsel %vm634, %v868, 0.0
      %874 = vadd.xlane.f32.xlu0 %v873
      %v875 = vpop.xlane.xlu0 %874
      %v876 = vsel %vm634, %v870, 0.0
      %877 = vadd.xlane.f32.xlu0 %v876
      %v878 = vpop.xlane.xlu0 %877
      %v879 = vsel %vm641, %v872, 0.0
      %880 = vadd.xlane.f32.xlu0 %v879
      %v881 = vpop.xlane.xlu0 %880
      %v882 = vrcp.pop %v875
      %v883 = vrcp.pop %v878
      %v884 = vrcp.pop %v881
      %v885 = vmul.f32 %v868, %v882
      %v886 = vmul.f32 %v870, %v883
      %v887 = vmul.f32 %v872, %v884
      %v888 = vpack.c.bf16 %v886, %v885
      %v889 = vpack.c.bf16 %v887, %v887
      %890 = vrot.lane.b32.xlu0 %v594, 48
      %v891 = vpop.permute.xlu0 %890
      %892 = vrot.lane.b32.xlu0 %v595, 48
      %v893 = vpop.permute.xlu0 %892
      %v896 = vsel %vm634, %v888, 0
      %v899 = vsel %vm634, %v889, 0
      %v902 = vand.u32 %v893, %v684
      %904 = vmatpush.bf16.msra.mxu0 0
      %905 = vmatpush.bf16.msra.mxu0 0
      %906 = vmatpush.bf16.msra.mxu0 0
      %907 = vmatpush.bf16.msra.mxu0 0
      %908 = vmatpush.bf16.msra.mxu0 0
      %909 = vmatpush.bf16.msra.mxu0 0
      %910 = vmatpush.bf16.msra.mxu0 %v902
      %911 = vmatpush.bf16.msra.mxu0 %v891
      %912 = vmatmul.bf16.gmra.mxu0 %v896
      %v913 = vpop.f32.mrf.mxu0
      %v914 = vadd.f32 0.0, %v913
      %v915 = vpop.f32.mrf.mxu0
      %v916 = vadd.f32 0.0, %v915
      %917 = vmatmul.bf16.gmra.mxu0 %v899
      %v918 = vpop.f32.mrf.mxu0
      %v919 = vadd.f32 0.0, %v918
      %v920 = vpop.f32.mrf.mxu0
      %921 = vdwg.mxu0
      %922 = vrot.lane.b32.xlu0 %v594, 104
      %v923 = vpop.permute.xlu0 %922
      %924 = vrot.lane.b32.xlu0 %v595, 104
      %v925 = vpop.permute.xlu0 %924
      %926 = vrot.lane.b32.xlu0 %v594, 72
      %v927 = vpop.permute.xlu0 %926
      %928 = vrot.lane.b32.xlu0 %v595, 72
      %v929 = vpop.permute.xlu0 %928
      %v931 = vsel %vm600, %v923, 0
      %v934 = vsel %vm600, %v925, 0
      %v937 = vsel %vm600, %v927, 0
      %v940 = vsel %vm600, %v929, 0
      %942 = vmatpush.bf16.xpose.msra.mxu0 0
      %943 = vmatpush.bf16.xpose.msra.mxu0 0
      %944 = vmatpush.bf16.xpose.msra.mxu0 0
      %945 = vmatpush.bf16.xpose.msra.mxu0 0
      %946 = vmatpush.bf16.xpose.msra.mxu0 0
      %947 = vmatpush.bf16.xpose.msra.mxu0 0
      %948 = vmatpush.bf16.xpose.msra.mxu0 %v940
      %949 = vmatpush.bf16.xpose.msra.mxu0 %v937
      %950 = vmatmul.bf16.gmra.mxu0 %v931
      %v951 = vpop.f32.mrf.mxu0
      %v952 = vadd.f32 0.0, %v951
      %v953 = vpop.f32.mrf.mxu0
      %v954 = vadd.f32 0.0, %v953
      %955 = vmatmul.bf16.gmra.mxu0 %v934
      %v956 = vpop.f32.mrf.mxu0
      %v957 = vadd.f32 0.0, %v956
      %v958 = vpop.f32.mrf.mxu0
      %959 = vdwg.mxu0
      %v960 = vmul.f32 %v952, 0.35355338
      %v961 = vmul.f32 %v954, 0.35355338
      %v962 = vmul.f32 %v957, 0.35355338
      %v963 = vsel %vm634, %v960, -inf
      %964 = vmax.xlane.f32.xlu0 %v963
      %v965 = vpop.xlane.xlu0 %964
      %v966 = vsel %vm634, %v961, -inf
      %967 = vmax.xlane.f32.xlu0 %v966
      %v968 = vpop.xlane.xlu0 %967
      %v969 = vsel %vm641, %v962, -inf
      %970 = vmax.xlane.f32.xlu0 %v969
      %v971 = vpop.xlane.xlu0 %970
      %v972 = vsub.f32 %v960, %v965
      %v973 = vsub.f32 %v961, %v968
      %v974 = vsub.f32 %v962, %v971
      %v975 = vmul.f32 %v972, 1.442695
      %v976 = vpow.pop %v975
      %v977 = vmul.f32 %v973, 1.442695
      %v978 = vpow.pop %v977
      %v979 = vmul.f32 %v974, 1.442695
      %v980 = vpow.pop %v979
      %v981 = vsel %vm634, %v976, 0.0
      %982 = vadd.xlane.f32.xlu0 %v981
      %v983 = vpop.xlane.xlu0 %982
      %v984 = vsel %vm634, %v978, 0.0
      %985 = vadd.xlane.f32.xlu0 %v984
      %v986 = vpop.xlane.xlu0 %985
      %v987 = vsel %vm641, %v980, 0.0
      %988 = vadd.xlane.f32.xlu0 %v987
      %v989 = vpop.xlane.xlu0 %988
      %v990 = vrcp.pop %v983
      %v991 = vrcp.pop %v986
      %v992 = vrcp.pop %v989
      %v993 = vmul.f32 %v976, %v990
      %v994 = vmul.f32 %v978, %v991
      %v995 = vmul.f32 %v980, %v992
      %v996 = vpack.c.bf16 %v994, %v993
      %v997 = vpack.c.bf16 %v995, %v995
      %998 = vrot.lane.b32.xlu0 %v594, 40
      %v999 = vpop.permute.xlu0 %998
      %1000 = vrot.lane.b32.xlu0 %v595, 40
      %v1001 = vpop.permute.xlu0 %1000
      %v1004 = vsel %vm634, %v996, 0
      %v1007 = vsel %vm634, %v997, 0
      %v1010 = vand.u32 %v1001, %v684
      %1012 = vmatpush.bf16.msra.mxu0 0
      %1013 = vmatpush.bf16.msra.mxu0 0
      %1014 = vmatpush.bf16.msra.mxu0 0
      %1015 = vmatpush.bf16.msra.mxu0 0
      %1016 = vmatpush.bf16.msra.mxu0 0
      %1017 = vmatpush.bf16.msra.mxu0 0
      %1018 = vmatpush.bf16.msra.mxu0 %v1010
      %1019 = vmatpush.bf16.msra.mxu0 %v999
      %1020 = vmatmul.bf16.gmra.mxu0 %v1004
      %v1021 = vpop.f32.mrf.mxu0
      %v1022 = vadd.f32 0.0, %v1021
      %v1023 = vpop.f32.mrf.mxu0
      %v1024 = vadd.f32 0.0, %v1023
      %1025 = vmatmul.bf16.gmra.mxu0 %v1007
      %v1026 = vpop.f32.mrf.mxu0
      %v1027 = vadd.f32 0.0, %v1026
      %v1028 = vpop.f32.mrf.mxu0
      %1029 = vdwg.mxu0
      %1033 = vrot.lane.b32.xlu0 %v806, 8
      %v1034 = vpop.permute.xlu0 %1033
      %1035 = vrot.lane.b32.xlu0 %v808, 8
      %v1036 = vpop.permute.xlu0 %1035
      %1037 = vrot.lane.b32.xlu0 %v811, 8
      %v1038 = vpop.permute.xlu0 %1037
      %1045 = vrot.lane.b32.xlu0 %v914, 16
      %v1046 = vpop.permute.xlu0 %1045
      %1047 = vrot.lane.b32.xlu0 %v916, 16
      %v1048 = vpop.permute.xlu0 %1047
      %1049 = vrot.lane.b32.xlu0 %v919, 16
      %v1050 = vpop.permute.xlu0 %1049
      %1057 = vrot.lane.b32.xlu0 %v1022, 24
      %v1058 = vpop.permute.xlu0 %1057
      %1059 = vrot.lane.b32.xlu0 %v1024, 24
      %v1060 = vpop.permute.xlu0 %1059
      %1061 = vrot.lane.b32.xlu0 %v1027, 24
      %v1062 = vpop.permute.xlu0 %1061
      %v1066 = vsel %vm600, %v698, %v1034
      %v1067 = vsel %vm600, %v700, %v1036
      %v1068 = vsel %vm600, %v703, %v1038
      %vm1069 = vcmask 130048
      %v1070 = vsel %vm1069, %v1066, %v1046
      %v1071 = vsel %vm1069, %v1067, %v1048
      %v1072 = vsel %vm1069, %v1068, %v1050
      %vm1073 = vcmask 195584
      %v1074 = vsel %vm1073, %v1070, %v1058
      %v1075 = vsel %vm1073, %v1071, %v1060
      %v1076 = vsel %vm1073, %v1072, %v1062
      %v1077 = vpack.c.bf16 %v1075, %v1074
      %v1078 = vpack.c.bf16 %v1076, %v1076
      %v1080 = vperm.slane %v584, 0
      %v1086 = vunpack.c.l.b16 %v580
      %v1087 = vunpack.c.l.b16 %v581
      %v1088 = vunpack.c.l.b16 %v582
      %v1089 = vunpack.c.l.b16 %v583
      %v1090 = vpack.c.b16 %v1087, %v1086
      %v1091 = vpack.c.b16 %v1089, %v1088
      %v1095 = vsel %vm447, %v1077, 0
      %v1098 = vsel %vm447, %v1078, 0
      %1100 = vmatpush.bf16.msra.mxu0 0
      %1101 = vmatpush.bf16.msra.mxu0 0
      %1102 = vmatpush.bf16.msra.mxu0 0
      %1103 = vmatpush.bf16.msra.mxu0 0
      %1104 = vmatpush.bf16.msra.mxu0 0
      %1105 = vmatpush.bf16.msra.mxu0 0
      %1106 = vmatpush.bf16.msra.mxu0 %v1091
      %1107 = vmatpush.bf16.msra.mxu0 %v1090
      %1108 = vmatmul.bf16.gmra.mxu0 %v1095
      %v1109 = vpop.f32.mrf.mxu0
      %v1110 = vadd.f32 %v1080, %v1109
      %v1111 = vpop.f32.mrf.mxu0
      %v1112 = vadd.f32 %v1080, %v1111
      %1113 = vmatmul.bf16.gmra.mxu0 %v1098
      %v1114 = vpop.f32.mrf.mxu0
      %v1115 = vadd.f32 %v1080, %v1114
      %v1116 = vpop.f32.mrf.mxu0
      %1117 = vdwg.mxu0
      %v1118 = vadd.f32 %v442, %v1110
      %v1119 = vadd.f32 %v443, %v1112
      %v1120 = vadd.f32 %v444, %v1115
      %v1121 = vld [vmem:[%s7] sm:$0x1]
      %v1122 = vld [vmem:[%s8] sm:$0x1]
      %v1123 = vsel %vm447, %v1118, 0.0
      %1124 = vadd.xlane.f32.xlu0 %v1123
      %v1125 = vpop.xlane.xlu0 %1124
      %v1126 = vsel %vm447, %v1119, 0.0
      %1127 = vadd.xlane.f32.xlu0 %v1126
      %v1128 = vpop.xlane.xlu0 %1127
      %v1129 = vsel %vm454, %v1120, 0.0
      %1130 = vadd.xlane.f32.xlu0 %v1129
      %v1131 = vpop.xlane.xlu0 %1130
      %v1132 = vmul.f32 %v1125, %v464
      %v1133 = vmul.f32 %v1128, %v464
      %v1134 = vmul.f32 %v1131, %v464
      %v1135 = vsub.f32 %v1118, %v1132
      %v1136 = vsub.f32 %v1119, %v1133
      %v1137 = vsub.f32 %v1120, %v1134
      %v1138 = vmul.f32 %v1135, %v1135
      %v1139 = vmul.f32 %v1136, %v1136
      %v1140 = vmul.f32 %v1137, %v1137
      %v1141 = vsel %vm447, %v1138, 0.0
      %1142 = vadd.xlane.f32.xlu0 %v1141
      %v1143 = vpop.xlane.xlu0 %1142
      %v1144 = vsel %vm447, %v1139, 0.0
      %1145 = vadd.xlane.f32.xlu0 %v1144
      %v1146 = vpop.xlane.xlu0 %1145
      %v1147 = vsel %vm454, %v1140, 0.0
      %1148 = vadd.xlane.f32.xlu0 %v1147
      %v1149 = vpop.xlane.xlu0 %1148
      %v1150 = vmul.f32 %v1143, %v464
      %v1151 = vmul.f32 %v1146, %v464
      %v1152 = vmul.f32 %v1149, %v464
      %v1153 = vadd.f32 %v1150, 1e-05
      %v1154 = vadd.f32 %v1151, 1e-05
      %v1155 = vadd.f32 %v1152, 1e-05
      %v1156 = vrsqrt.pop %v1153
      %v1157 = vmul.f32 %v1156, %v1153
      %v1158 = vmul.f32 %v1157, %v1156
      %v1159 = vmul.f32 0.5, %v1158
      %v1160 = vsub.f32 1.5, %v1159
      %v1161 = vmul.f32 %v1156, %v1160
      %vm1162 = vweird.f32 %v1153
      %vm1163 = vweird.f32 %v1156
      %vm1164 = vmor %vm1162, %vm1163
      %v1165 = vsel %vm1164, %v1156, %v1161
      %v1166 = vrsqrt.pop %v1154
      %v1167 = vmul.f32 %v1166, %v1154
      %v1168 = vmul.f32 %v1167, %v1166
      %v1169 = vmul.f32 0.5, %v1168
      %v1170 = vsub.f32 1.5, %v1169
      %v1171 = vmul.f32 %v1166, %v1170
      %vm1172 = vweird.f32 %v1154
      %vm1173 = vweird.f32 %v1166
      %vm1174 = vmor %vm1172, %vm1173
      %v1175 = vsel %vm1174, %v1166, %v1171
      %v1176 = vrsqrt.pop %v1155
      %v1177 = vmul.f32 %v1176, %v1155
      %v1178 = vmul.f32 %v1177, %v1176
      %v1179 = vmul.f32 0.5, %v1178
      %v1180 = vsub.f32 1.5, %v1179
      %v1181 = vmul.f32 %v1176, %v1180
      %vm1182 = vweird.f32 %v1155
      %vm1183 = vweird.f32 %v1176
      %vm1184 = vmor %vm1182, %vm1183
      %v1185 = vsel %vm1184, %v1176, %v1181
      %v1186 = vmul.f32 %v1135, %v1165
      %v1187 = vmul.f32 %v1136, %v1175
      %v1188 = vmul.f32 %v1137, %v1185
      %v1190 = vperm.slane %v1121, 0
      %v1192 = vmul.f32 %v1186, %v1190
      %v1193 = vmul.f32 %v1187, %v1190
      %v1194 = vmul.f32 %v1188, %v1190
      %v1196 = vperm.slane %v1122, 0
      %v1198 = vadd.f32 %v1192, %v1196
      %v1199 = vadd.f32 %v1193, %v1196
      %v1200 = vadd.f32 %v1194, %v1196
      %v1201 = vpack.c.bf16 %v1199, %v1198
      %v1202 = vpack.c.bf16 %v1200, %v1200
      %v1203 = vld [vmem:[%s9] sm:$0xf]
      %v1204 = vld [vmem:[%s9 + $0x4] sm:$0xf]
      %v1205 = vld [vmem:[%s9 + $0x8] sm:$0xf]
      %v1206 = vld [vmem:[%s9 + $0xc] sm:$0xf]
      %v1207 = vld [vmem:[%s10] sm:$0x1]
      %v1209 = vperm.slane %v1207, 0
      %v1215 = vunpack.c.l.b16 %v1203
      %v1216 = vunpack.c.l.b16 %v1204
      %v1217 = vunpack.c.l.b16 %v1205
      %v1218 = vunpack.c.l.b16 %v1206
      %v1219 = vpack.c.b16 %v1216, %v1215
      %v1220 = vpack.c.b16 %v1218, %v1217
      %v1224 = vsel %vm447, %v1201, 0
      %v1227 = vsel %vm447, %v1202, 0
      %1229 = vmatpush.bf16.msra.mxu0 0
      %1230 = vmatpush.bf16.msra.mxu0 0
      %1231 = vmatpush.bf16.msra.mxu0 0
      %1232 = vmatpush.bf16.msra.mxu0 0
      %1233 = vmatpush.bf16.msra.mxu0 0
      %1234 = vmatpush.bf16.msra.mxu0 0
      %1235 = vmatpush.bf16.msra.mxu0 %v1220
      %1236 = vmatpush.bf16.msra.mxu0 %v1219
      %1237 = vmatmul.bf16.gmra.mxu0 %v1224
      %v1238 = vpop.f32.mrf.mxu0
      %v1239 = vadd.f32 %v1209, %v1238
      %v1240 = vpop.f32.mrf.mxu0
      %v1241 = vadd.f32 %v1209, %v1240
      %1242 = vmatmul.bf16.gmra.mxu0 %v1227
      %v1243 = vpop.f32.mrf.mxu0
      %v1244 = vadd.f32 %v1209, %v1243
      %v1245 = vpop.f32.mrf.mxu0
      %1246 = vdwg.mxu0
      %v1247 = vmul.f32 %v1239, 0.5
      %v1248 = vmul.f32 %v1241, 0.5
      %v1249 = vmul.f32 %v1244, 0.5
      %v1250 = vmul.f32 %v1239, 0.044715
      %v1251 = vmul.f32 %v1241, 0.044715
      %v1252 = vmul.f32 %v1244, 0.044715
      %v1253 = vmul.f32 %v1250, %v1239
      %v1254 = vmul.f32 %v1251, %v1241
      %v1255 = vmul.f32 %v1252, %v1244
      %v1256 = vmul.f32 %v1253, %v1239
      %v1257 = vmul.f32 %v1254, %v1241
      %v1258 = vmul.f32 %v1255, %v1244
      %v1259 = vadd.f32 %v1239, %v1256
      %v1260 = vadd.f32 %v1241, %v1257
      %v1261 = vadd.f32 %v1244, %v1258
      %v1262 = vmul.f32 %v1259, 0.7978846
      %v1263 = vmul.f32 %v1260, 0.7978846
      %v1264 = vmul.f32 %v1261, 0.7978846
      %v1265 = vtanh.pop %v1262
      %v1266 = vtanh.pop %v1263
      %v1267 = vtanh.pop %v1264
      %v1268 = vadd.f32 %v1265, 1.0
      %v1269 = vadd.f32 %v1266, 1.0
      %v1270 = vadd.f32 %v1267, 1.0
      %v1271 = vmul.f32 %v1247, %v1268
      %v1272 = vmul.f32 %v1248, %v1269
      %v1273 = vmul.f32 %v1249, %v1270
      %v1274 = vpack.c.bf16 %v1272, %v1271
      %v1275 = vpack.c.bf16 %v1273, %v1273
      %v1276 = vld [vmem:[%s11] sm:$0xf]
      %v1277 = vld [vmem:[%s11 + $0x4] sm:$0xf]
      %v1278 = vld [vmem:[%s11 + $0x8] sm:$0xf]
      %v1279 = vld [vmem:[%s11 + $0xc] sm:$0xf]
      %v1280 = vld [vmem:[%s11 + $0x10] sm:$0xf]
      %v1281 = vld [vmem:[%s11 + $0x14] sm:$0xf]
      %v1282 = vld [vmem:[%s11 + $0x18] sm:$0xf]
      %v1283 = vld [vmem:[%s11 + $0x1c] sm:$0xf]
      %v1284 = vld [vmem:[%s11 + $0x20] sm:$0xf]
      %v1285 = vld [vmem:[%s11 + $0x24] sm:$0xf]
      %v1286 = vld [vmem:[%s11 + $0x28] sm:$0xf]
      %v1287 = vld [vmem:[%s11 + $0x2c] sm:$0xf]
      %v1288 = vld [vmem:[%s11 + $0x30] sm:$0xf]
      %v1289 = vld [vmem:[%s11 + $0x34] sm:$0xf]
      %v1290 = vld [vmem:[%s11 + $0x38] sm:$0xf]
      %v1291 = vld [vmem:[%s11 + $0x3c] sm:$0xf]
      %v1292 = vld [vmem:[%s12] sm:$0x1]
      %v1294 = vperm.slane %v1292, 0
      %v1312 = vunpack.c.l.b16 %v1276
      %v1313 = vunpack.c.l.b16 %v1277
      %v1314 = vunpack.c.l.b16 %v1278
      %v1315 = vunpack.c.l.b16 %v1279
      %v1316 = vunpack.c.l.b16 %v1280
      %v1317 = vunpack.c.l.b16 %v1281
      %v1318 = vunpack.c.l.b16 %v1282
      %v1319 = vunpack.c.l.b16 %v1283
      %v1320 = vunpack.c.l.b16 %v1284
      %v1321 = vunpack.c.l.b16 %v1285
      %v1322 = vunpack.c.l.b16 %v1286
      %v1323 = vunpack.c.l.b16 %v1287
      %v1324 = vunpack.c.l.b16 %v1288
      %v1325 = vunpack.c.l.b16 %v1289
      %v1326 = vunpack.c.l.b16 %v1290
      %v1327 = vunpack.c.l.b16 %v1291
      %v1328 = vpack.c.b16 %v1313, %v1312
      %v1329 = vpack.c.b16 %v1315, %v1314
      %v1330 = vpack.c.b16 %v1317, %v1316
      %v1331 = vpack.c.b16 %v1319, %v1318
      %v1332 = vpack.c.b16 %v1321, %v1320
      %v1333 = vpack.c.b16 %v1323, %v1322
      %v1334 = vpack.c.b16 %v1325, %v1324
      %v1335 = vpack.c.b16 %v1327, %v1326
      %1344 = vmatpush.bf16.msra.mxu0 %v1335
      %1345 = vmatpush.bf16.msra.mxu0 %v1334
      %1346 = vmatpush.bf16.msra.mxu0 %v1333
      %1347 = vmatpush.bf16.msra.mxu0 %v1332
      %1348 = vmatpush.bf16.msra.mxu0 %v1331
      %1349 = vmatpush.bf16.msra.mxu0 %v1330
      %1350 = vmatpush.bf16.msra.mxu0 %v1329
      %1351 = vmatpush.bf16.msra.mxu0 %v1328
      %1352 = vmatmul.bf16.gmra.mxu0 %v1274
      %v1353 = vpop.f32.mrf.mxu0
      %v1354 = vadd.f32 %v1294, %v1353
      %v1355 = vpop.f32.mrf.mxu0
      %v1356 = vadd.f32 %v1294, %v1355
      %1357 = vmatmul.bf16.gmra.mxu0 %v1275
      %v1358 = vpop.f32.mrf.mxu0
      %v1359 = vadd.f32 %v1294, %v1358
      %v1360 = vpop.f32.mrf.mxu0
      %1361 = vdwg.mxu0
      %v1362 = vadd.f32 %v1118, %v1354
      %v1363 = vadd.f32 %v1119, %v1356
      %v1364 = vadd.f32 %v1120, %v1359
      %1365 = vst.msk [vmem:[%s440] sm:$0xff] %vm447, %v1362
      %1366 = vst.msk [vmem:[%s440 + $0x8] sm:$0xff] %vm447, %v1363
      %1367 = vst.msk [vmem:[%s440 + $0x10] sm:$0x1] %vm454, %v1364
      %p1368 = scmp.lt.s32.totalorder %s24, 1
      %s1369 = scalar_select %p1368, %s24, 1
      %s1370 = smul.addr %s1369, 3
      %s1371 = smul.addr %s1370, 8
      %s1372 = scalar_lea.vmem %s13, %s1371
      // Predicated region
      $region73: #{_lambda_.7} parent=71 // pred_check
        %p1373 = pneg %p320
      $region74: #{_lambda_.7} parent=71 // pred_check_branch
        %1375 = sbr.rel (%p1373) target = $region76
      $region75: #{_lambda_.7} parent=71 // pred_region
        _
      $region76: #{_lambda_.7} parent=71 // pred_fallthru
        _
    $region72: #{_lambda_.7} parent=5 // pred_fallthru
      _
    %p1376 = scmp.le.s32.totalorder 2, %s19
    // Predicated region
    $region77: #{_lambda_.7} parent=5 // pred_check
      %p1377 = pneg %p1376
    $region78: #{_lambda_.7} parent=5 // pred_check_branch
      %1379 = sbr.rel (%p1377) target = $region80
    $region79: #{_lambda_.7} parent=5 // pred_region
      %s1380 = ssub.s32 %s19, 2
      // Predicated region
      $region81: #{_lambda_.7} parent=79 // pred_check
        %p1381 = pneg %p326
      $region82: #{_lambda_.7} parent=79 // pred_check_branch
        %1383 = sbr.rel (%p1381) target = $region84
      $region83: #{_lambda_.7} parent=79 // pred_region
        %p1384 = scmp.lt.s32.totalorder %s25, 1
        %s1385 = scalar_select %p1384, %s25, 1
        %s1386 = smul.addr %s1385, 3
        %s1387 = smul.addr %s1386, 8
        %s1388 = scalar_lea.vmem %s13, %s1387
      $region84: #{_lambda_.7} parent=79 // pred_fallthru
        _
    $region80: #{_lambda_.7} parent=5 // pred_fallthru
      _
  $region6: #{_lambda_.7} parent=0 // loop_footer
    %s23 = sadd.s32 1, %s19
  $region7: #{_lambda_.7} parent=0 // loop_footer_branch
    %18 = sbr.rel target = $region3
  $region8: #{_lambda_.7} parent=0 // loop_exit
    _

// kernel: _lambda_.9
$region0: #{_lambda_.9}
  #allocation0 [shape = 'u32[]', space=smem, size = 0x4, offset = 0x4, fixed_abs, tag = 'smem constant byte address 0x4 - core index']
  #allocation1 [shape = 'u32[72,128]{1,0:T(1,128)}', space=vmem, size = 0x9000, scoped, tag = 'internal scratch']
  %s0 = inlined_call_operand.vmem [shape: f32[2,16,32], index: 0, kind: input, shape index: {}]
  %s1 = inlined_call_operand.vmem [shape: f32[2,17,32], index: 1, kind: input, shape index: {}]
  %s2 = inlined_call_operand.vmem [shape: f32[1,32], index: 2, kind: input, shape index: {}]
  %s3 = inlined_call_operand.vmem [shape: f32[1,32], index: 3, kind: input, shape index: {}]
  %s4 = inlined_call_operand.vmem [shape: bf16[32,32], index: 4, kind: input, shape index: {}]
  %s5 = inlined_call_operand.vmem [shape: f32[1,32], index: 5, kind: input, shape index: {}]
  %s6 = inlined_call_operand.vmem [shape: bf16[32,64], index: 6, kind: input, shape index: {}]
  %s7 = inlined_call_operand.vmem [shape: f32[1,64], index: 7, kind: input, shape index: {}]
  %s8 = inlined_call_operand.vmem [shape: bf16[32,32], index: 8, kind: input, shape index: {}]
  %s9 = inlined_call_operand.vmem [shape: f32[1,32], index: 9, kind: input, shape index: {}]
  %s10 = inlined_call_operand.vmem [shape: f32[1,32], index: 10, kind: input, shape index: {}]
  %s11 = inlined_call_operand.vmem [shape: f32[1,32], index: 11, kind: input, shape index: {}]
  %s12 = inlined_call_operand.vmem [shape: bf16[32,96], index: 12, kind: input, shape index: {}]
  %s13 = inlined_call_operand.vmem [shape: f32[1,96], index: 13, kind: input, shape index: {}]
  %s14 = inlined_call_operand.vmem [shape: bf16[32,32], index: 14, kind: input, shape index: {}]
  %s15 = inlined_call_operand.vmem [shape: f32[1,32], index: 15, kind: input, shape index: {}]
  %s16 = inlined_call_operand.vmem [shape: f32[1,32], index: 16, kind: input, shape index: {}]
  %s17 = inlined_call_operand.vmem [shape: f32[1,32], index: 17, kind: input, shape index: {}]
  %s18 = inlined_call_operand.vmem [shape: bf16[32,128], index: 18, kind: input, shape index: {}]
  %s19 = inlined_call_operand.vmem [shape: f32[1,128], index: 19, kind: input, shape index: {}]
  %s20 = inlined_call_operand.vmem [shape: bf16[128,32], index: 20, kind: input, shape index: {}]
  %s21 = inlined_call_operand.vmem [shape: f32[1,32], index: 21, kind: input, shape index: {}]
  %s22 = inlined_call_operand.vmem [shape: f32[2,16,32], index: 22, kind: output, shape index: {}]
  %s23 = sld [smem:[#allocation0]]
  $region121: #{_lambda_.9} parent=0
    _
  %s25 = ssub.s32 1, %s23
  %s26 = scalar_select 0, %s25, %s23
  loop: start=0, step=1, limit=4
  $region2: #{_lambda_.9} parent=0 // loop_pre_header
    _
  $region3: #{_lambda_.9} parent=0 // loop_header
    %s28 = sphi 0, %s32
    %p29 = scmp.ge.s32.totalorder %s28, 4
    %s38 = sphi 0, %s40
    %s41 = sphi 0, %s38
    %s42 = sphi 0, %s41
    %s58 = sphi 0, %s42
    %s64 = sphi 0, %s66
    %s67 = sphi 0, %s64
    %s68 = sphi 0, %s67
    %s84 = sphi 0, %s68
    %s88 = sphi 0, %s88
    %s90 = sphi 0, %s88
    %s91 = sphi 0, %s90
    %s105 = sphi 0, %s91
    %s109 = sphi 0, %s109
    %s111 = sphi 0, %s109
    %s112 = sphi 0, %s111
    %s126 = sphi 0, %s112
    %s130 = sphi 0, %s130
    %s132 = sphi 0, %s130
    %s133 = sphi 0, %s132
    %s147 = sphi 0, %s133
    %s151 = sphi 0, %s151
    %s153 = sphi 0, %s151
    %s154 = sphi 0, %s153
    %s168 = sphi 0, %s154
    %s172 = sphi 0, %s172
    %s174 = sphi 0, %s172
    %s175 = sphi 0, %s174
    %s189 = sphi 0, %s175
    %s193 = sphi 0, %s193
    %s195 = sphi 0, %s193
    %s196 = sphi 0, %s195
    %s210 = sphi 0, %s196
    %s214 = sphi 0, %s214
    %s216 = sphi 0, %s214
    %s217 = sphi 0, %s216
    %s231 = sphi 0, %s217
    %s235 = sphi 0, %s235
    %s237 = sphi 0, %s235
    %s238 = sphi 0, %s237
    %s252 = sphi 0, %s238
    %s256 = sphi 0, %s256
    %s258 = sphi 0, %s256
    %s259 = sphi 0, %s258
    %s273 = sphi 0, %s259
    %s277 = sphi 0, %s277
    %s279 = sphi 0, %s277
    %s280 = sphi 0, %s279
    %s294 = sphi 0, %s280
    %s298 = sphi 0, %s298
    %s300 = sphi 0, %s298
    %s301 = sphi 0, %s300
    %s315 = sphi 0, %s301
    %s319 = sphi 0, %s319
    %s321 = sphi 0, %s319
    %s322 = sphi 0, %s321
    %s336 = sphi 0, %s322
    %s340 = sphi 0, %s340
    %s342 = sphi 0, %s340
    %s343 = sphi 0, %s342
    %s357 = sphi 0, %s343
    %s361 = sphi 0, %s361
    %s363 = sphi 0, %s361
    %s364 = sphi 0, %s363
    %s378 = sphi 0, %s364
    %s382 = sphi 0, %s382
    %s384 = sphi 0, %s382
    %s385 = sphi 0, %s384
    %s399 = sphi 0, %s385
    %s403 = sphi 0, %s403
    %s405 = sphi 0, %s403
    %s406 = sphi 0, %s405
    %s420 = sphi 0, %s406
    %s424 = sphi 0, %s424
    %s426 = sphi 0, %s424
    %s427 = sphi 0, %s426
    %s441 = sphi 0, %s427
    %s445 = sphi 0, %s445
    %s447 = sphi 0, %s445
    %s448 = sphi 0, %s447
    %s462 = sphi 0, %s448
    %s466 = sphi 0, %s466
    %s468 = sphi 0, %s466
    %s469 = sphi 0, %s468
    %s483 = sphi 0, %s469
    %s487 = sphi 0, %s487
    %s489 = sphi 0, %s487
    %s490 = sphi 0, %s489
    %s504 = sphi 0, %s490
    %s510 = sphi 0, %s512
    %s513 = sphi 0, %s510
    %s514 = sphi 0, %s513
    %s530 = sphi 0, %s514
  $region4: #{_lambda_.9} parent=0 // loop_header_branch
    %31 = sbr.rel (%p29) target = $region8
  $region5: #{_lambda_.9} parent=0 // loop_body
    %s33 = ssub.s32 %s28, 1
    %s34 = ssub.s32 %s28, 2
    %s35 = sadd.s32 %s28, 1
    %s36 = ssub.s32 %s28, %s35
    %p37 = scmp.eq.s32.totalorder %s36, 0
    %s39 = sadd.s32 %s38, 1
    %s40 = scalar_select %p37, %s38, %s39
    %p43 = pneg %p37
    %p44 = scmp.eq.s32.totalorder %s28, 1
    %p45 = por %p43, %p44
    %p46 = scmp.ne.s32.totalorder %s38, %s41
    %p47 = scmp.eq.s32.totalorder %s28, 0
    %p48 = por %p46, %p47
    %p49 = scmp.ne.s32.totalorder %s38, %s41
    %p50 = scmp.eq.s32.totalorder %s33, 1
    %p51 = por %p49, %p50
    %p52 = scmp.ne.s32.totalorder %s41, %s42
    %p53 = scmp.eq.s32.totalorder %s33, 0
    %p54 = por %p52, %p53
    %p55 = scmp.ne.s32.totalorder %s41, %s42
    %p56 = scmp.eq.s32.totalorder %s34, 1
    %p57 = por %p55, %p56
    %p59 = scmp.ne.s32.totalorder %s42, %s58
    %p60 = scmp.eq.s32.totalorder %s34, 0
    %p61 = por %p59, %p60
    %s62 = ssub.s32 %s28, %s35
    %p63 = scmp.eq.s32.totalorder %s62, 0
    %s65 = sadd.s32 %s64, 1
    %s66 = scalar_select %p63, %s64, %s65
    %p69 = pneg %p63
    %p70 = scmp.eq.s32.totalorder %s28, 1
    %p71 = por %p69, %p70
    %p72 = scmp.ne.s32.totalorder %s64, %s67
    %p73 = scmp.eq.s32.totalorder %s28, 0
    %p74 = por %p72, %p73
    %p75 = scmp.ne.s32.totalorder %s64, %s67
    %p76 = scmp.eq.s32.totalorder %s33, 1
    %p77 = por %p75, %p76
    %p78 = scmp.ne.s32.totalorder %s67, %s68
    %p79 = scmp.eq.s32.totalorder %s33, 0
    %p80 = por %p78, %p79
    %p81 = scmp.ne.s32.totalorder %s67, %s68
    %p82 = scmp.eq.s32.totalorder %s34, 1
    %p83 = por %p81, %p82
    %p85 = scmp.ne.s32.totalorder %s68, %s84
    %p86 = scmp.eq.s32.totalorder %s34, 0
    %p87 = por %p85, %p86
    %s89 = sadd.s32 %s88, 1
    %p92 = scmp.eq.s32.totalorder %s28, 1
    %p93 = scmp.ne.s32.totalorder %s88, %s90
    %p94 = scmp.eq.s32.totalorder %s28, 0
    %p95 = por %p93, %p94
    %p96 = scmp.ne.s32.totalorder %s88, %s90
    %p97 = scmp.eq.s32.totalorder %s33, 1
    %p98 = por %p96, %p97
    %p99 = scmp.ne.s32.totalorder %s90, %s91
    %p100 = scmp.eq.s32.totalorder %s33, 0
    %p101 = por %p99, %p100
    %p102 = scmp.ne.s32.totalorder %s90, %s91
    %p103 = scmp.eq.s32.totalorder %s34, 1
    %p104 = por %p102, %p103
    %p106 = scmp.ne.s32.totalorder %s91, %s105
    %p107 = scmp.eq.s32.totalorder %s34, 0
    %p108 = por %p106, %p107
    %s110 = sadd.s32 %s109, 1
    %p113 = scmp.eq.s32.totalorder %s28, 1
    %p114 = scmp.ne.s32.totalorder %s109, %s111
    %p115 = scmp.eq.s32.totalorder %s28, 0
    %p116 = por %p114, %p115
    %p117 = scmp.ne.s32.totalorder %s109, %s111
    %p118 = scmp.eq.s32.totalorder %s33, 1
    %p119 = por %p117, %p118
    %p120 = scmp.ne.s32.totalorder %s111, %s112
    %p121 = scmp.eq.s32.totalorder %s33, 0
    %p122 = por %p120, %p121
    %p123 = scmp.ne.s32.totalorder %s111, %s112
    %p124 = scmp.eq.s32.totalorder %s34, 1
    %p125 = por %p123, %p124
    %p127 = scmp.ne.s32.totalorder %s112, %s126
    %p128 = scmp.eq.s32.totalorder %s34, 0
    %p129 = por %p127, %p128
    %s131 = sadd.s32 %s130, 1
    %p134 = scmp.eq.s32.totalorder %s28, 1
    %p135 = scmp.ne.s32.totalorder %s130, %s132
    %p136 = scmp.eq.s32.totalorder %s28, 0
    %p137 = por %p135, %p136
    %p138 = scmp.ne.s32.totalorder %s130, %s132
    %p139 = scmp.eq.s32.totalorder %s33, 1
    %p140 = por %p138, %p139
    %p141 = scmp.ne.s32.totalorder %s132, %s133
    %p142 = scmp.eq.s32.totalorder %s33, 0
    %p143 = por %p141, %p142
    %p144 = scmp.ne.s32.totalorder %s132, %s133
    %p145 = scmp.eq.s32.totalorder %s34, 1
    %p146 = por %p144, %p145
    %p148 = scmp.ne.s32.totalorder %s133, %s147
    %p149 = scmp.eq.s32.totalorder %s34, 0
    %p150 = por %p148, %p149
    %s152 = sadd.s32 %s151, 1
    %p155 = scmp.eq.s32.totalorder %s28, 1
    %p156 = scmp.ne.s32.totalorder %s151, %s153
    %p157 = scmp.eq.s32.totalorder %s28, 0
    %p158 = por %p156, %p157
    %p159 = scmp.ne.s32.totalorder %s151, %s153
    %p160 = scmp.eq.s32.totalorder %s33, 1
    %p161 = por %p159, %p160
    %p162 = scmp.ne.s32.totalorder %s153, %s154
    %p163 = scmp.eq.s32.totalorder %s33, 0
    %p164 = por %p162, %p163
    %p165 = scmp.ne.s32.totalorder %s153, %s154
    %p166 = scmp.eq.s32.totalorder %s34, 1
    %p167 = por %p165, %p166
    %p169 = scmp.ne.s32.totalorder %s154, %s168
    %p170 = scmp.eq.s32.totalorder %s34, 0
    %p171 = por %p169, %p170
    %s173 = sadd.s32 %s172, 1
    %p176 = scmp.eq.s32.totalorder %s28, 1
    %p177 = scmp.ne.s32.totalorder %s172, %s174
    %p178 = scmp.eq.s32.totalorder %s28, 0
    %p179 = por %p177, %p178
    %p180 = scmp.ne.s32.totalorder %s172, %s174
    %p181 = scmp.eq.s32.totalorder %s33, 1
    %p182 = por %p180, %p181
    %p183 = scmp.ne.s32.totalorder %s174, %s175
    %p184 = scmp.eq.s32.totalorder %s33, 0
    %p185 = por %p183, %p184
    %p186 = scmp.ne.s32.totalorder %s174, %s175
    %p187 = scmp.eq.s32.totalorder %s34, 1
    %p188 = por %p186, %p187
    %p190 = scmp.ne.s32.totalorder %s175, %s189
    %p191 = scmp.eq.s32.totalorder %s34, 0
    %p192 = por %p190, %p191
    %s194 = sadd.s32 %s193, 1
    %p197 = scmp.eq.s32.totalorder %s28, 1
    %p198 = scmp.ne.s32.totalorder %s193, %s195
    %p199 = scmp.eq.s32.totalorder %s28, 0
    %p200 = por %p198, %p199
    %p201 = scmp.ne.s32.totalorder %s193, %s195
    %p202 = scmp.eq.s32.totalorder %s33, 1
    %p203 = por %p201, %p202
    %p204 = scmp.ne.s32.totalorder %s195, %s196
    %p205 = scmp.eq.s32.totalorder %s33, 0
    %p206 = por %p204, %p205
    %p207 = scmp.ne.s32.totalorder %s195, %s196
    %p208 = scmp.eq.s32.totalorder %s34, 1
    %p209 = por %p207, %p208
    %p211 = scmp.ne.s32.totalorder %s196, %s210
    %p212 = scmp.eq.s32.totalorder %s34, 0
    %p213 = por %p211, %p212
    %s215 = sadd.s32 %s214, 1
    %p218 = scmp.eq.s32.totalorder %s28, 1
    %p219 = scmp.ne.s32.totalorder %s214, %s216
    %p220 = scmp.eq.s32.totalorder %s28, 0
    %p221 = por %p219, %p220
    %p222 = scmp.ne.s32.totalorder %s214, %s216
    %p223 = scmp.eq.s32.totalorder %s33, 1
    %p224 = por %p222, %p223
    %p225 = scmp.ne.s32.totalorder %s216, %s217
    %p226 = scmp.eq.s32.totalorder %s33, 0
    %p227 = por %p225, %p226
    %p228 = scmp.ne.s32.totalorder %s216, %s217
    %p229 = scmp.eq.s32.totalorder %s34, 1
    %p230 = por %p228, %p229
    %p232 = scmp.ne.s32.totalorder %s217, %s231
    %p233 = scmp.eq.s32.totalorder %s34, 0
    %p234 = por %p232, %p233
    %s236 = sadd.s32 %s235, 1
    %p239 = scmp.eq.s32.totalorder %s28, 1
    %p240 = scmp.ne.s32.totalorder %s235, %s237
    %p241 = scmp.eq.s32.totalorder %s28, 0
    %p242 = por %p240, %p241
    %p243 = scmp.ne.s32.totalorder %s235, %s237
    %p244 = scmp.eq.s32.totalorder %s33, 1
    %p245 = por %p243, %p244
    %p246 = scmp.ne.s32.totalorder %s237, %s238
    %p247 = scmp.eq.s32.totalorder %s33, 0
    %p248 = por %p246, %p247
    %p249 = scmp.ne.s32.totalorder %s237, %s238
    %p250 = scmp.eq.s32.totalorder %s34, 1
    %p251 = por %p249, %p250
    %p253 = scmp.ne.s32.totalorder %s238, %s252
    %p254 = scmp.eq.s32.totalorder %s34, 0
    %p255 = por %p253, %p254
    %s257 = sadd.s32 %s256, 1
    %p260 = scmp.eq.s32.totalorder %s28, 1
    %p261 = scmp.ne.s32.totalorder %s256, %s258
    %p262 = scmp.eq.s32.totalorder %s28, 0
    %p263 = por %p261, %p262
    %p264 = scmp.ne.s32.totalorder %s256, %s258
    %p265 = scmp.eq.s32.totalorder %s33, 1
    %p266 = por %p264, %p265
    %p267 = scmp.ne.s32.totalorder %s258, %s259
    %p268 = scmp.eq.s32.totalorder %s33, 0
    %p269 = por %p267, %p268
    %p270 = scmp.ne.s32.totalorder %s258, %s259
    %p271 = scmp.eq.s32.totalorder %s34, 1
    %p272 = por %p270, %p271
    %p274 = scmp.ne.s32.totalorder %s259, %s273
    %p275 = scmp.eq.s32.totalorder %s34, 0
    %p276 = por %p274, %p275
    %s278 = sadd.s32 %s277, 1
    %p281 = scmp.eq.s32.totalorder %s28, 1
    %p282 = scmp.ne.s32.totalorder %s277, %s279
    %p283 = scmp.eq.s32.totalorder %s28, 0
    %p284 = por %p282, %p283
    %p285 = scmp.ne.s32.totalorder %s277, %s279
    %p286 = scmp.eq.s32.totalorder %s33, 1
    %p287 = por %p285, %p286
    %p288 = scmp.ne.s32.totalorder %s279, %s280
    %p289 = scmp.eq.s32.totalorder %s33, 0
    %p290 = por %p288, %p289
    %p291 = scmp.ne.s32.totalorder %s279, %s280
    %p292 = scmp.eq.s32.totalorder %s34, 1
    %p293 = por %p291, %p292
    %p295 = scmp.ne.s32.totalorder %s280, %s294
    %p296 = scmp.eq.s32.totalorder %s34, 0
    %p297 = por %p295, %p296
    %s299 = sadd.s32 %s298, 1
    %p302 = scmp.eq.s32.totalorder %s28, 1
    %p303 = scmp.ne.s32.totalorder %s298, %s300
    %p304 = scmp.eq.s32.totalorder %s28, 0
    %p305 = por %p303, %p304
    %p306 = scmp.ne.s32.totalorder %s298, %s300
    %p307 = scmp.eq.s32.totalorder %s33, 1
    %p308 = por %p306, %p307
    %p309 = scmp.ne.s32.totalorder %s300, %s301
    %p310 = scmp.eq.s32.totalorder %s33, 0
    %p311 = por %p309, %p310
    %p312 = scmp.ne.s32.totalorder %s300, %s301
    %p313 = scmp.eq.s32.totalorder %s34, 1
    %p314 = por %p312, %p313
    %p316 = scmp.ne.s32.totalorder %s301, %s315
    %p317 = scmp.eq.s32.totalorder %s34, 0
    %p318 = por %p316, %p317
    %s320 = sadd.s32 %s319, 1
    %p323 = scmp.eq.s32.totalorder %s28, 1
    %p324 = scmp.ne.s32.totalorder %s319, %s321
    %p325 = scmp.eq.s32.totalorder %s28, 0
    %p326 = por %p324, %p325
    %p327 = scmp.ne.s32.totalorder %s319, %s321
    %p328 = scmp.eq.s32.totalorder %s33, 1
    %p329 = por %p327, %p328
    %p330 = scmp.ne.s32.totalorder %s321, %s322
    %p331 = scmp.eq.s32.totalorder %s33, 0
    %p332 = por %p330, %p331
    %p333 = scmp.ne.s32.totalorder %s321, %s322
    %p334 = scmp.eq.s32.totalorder %s34, 1
    %p335 = por %p333, %p334
    %p337 = scmp.ne.s32.totalorder %s322, %s336
    %p338 = scmp.eq.s32.totalorder %s34, 0
    %p339 = por %p337, %p338
    %s341 = sadd.s32 %s340, 1
    %p344 = scmp.eq.s32.totalorder %s28, 1
    %p345 = scmp.ne.s32.totalorder %s340, %s342
    %p346 = scmp.eq.s32.totalorder %s28, 0
    %p347 = por %p345, %p346
    %p348 = scmp.ne.s32.totalorder %s340, %s342
    %p349 = scmp.eq.s32.totalorder %s33, 1
    %p350 = por %p348, %p349
    %p351 = scmp.ne.s32.totalorder %s342, %s343
    %p352 = scmp.eq.s32.totalorder %s33, 0
    %p353 = por %p351, %p352
    %p354 = scmp.ne.s32.totalorder %s342, %s343
    %p355 = scmp.eq.s32.totalorder %s34, 1
    %p356 = por %p354, %p355
    %p358 = scmp.ne.s32.totalorder %s343, %s357
    %p359 = scmp.eq.s32.totalorder %s34, 0
    %p360 = por %p358, %p359
    %s362 = sadd.s32 %s361, 1
    %p365 = scmp.eq.s32.totalorder %s28, 1
    %p366 = scmp.ne.s32.totalorder %s361, %s363
    %p367 = scmp.eq.s32.totalorder %s28, 0
    %p368 = por %p366, %p367
    %p369 = scmp.ne.s32.totalorder %s361, %s363
    %p370 = scmp.eq.s32.totalorder %s33, 1
    %p371 = por %p369, %p370
    %p372 = scmp.ne.s32.totalorder %s363, %s364
    %p373 = scmp.eq.s32.totalorder %s33, 0
    %p374 = por %p372, %p373
    %p375 = scmp.ne.s32.totalorder %s363, %s364
    %p376 = scmp.eq.s32.totalorder %s34, 1
    %p377 = por %p375, %p376
    %p379 = scmp.ne.s32.totalorder %s364, %s378
    %p380 = scmp.eq.s32.totalorder %s34, 0
    %p381 = por %p379, %p380
    %s383 = sadd.s32 %s382, 1
    %p386 = scmp.eq.s32.totalorder %s28, 1
    %p387 = scmp.ne.s32.totalorder %s382, %s384
    %p388 = scmp.eq.s32.totalorder %s28, 0
    %p389 = por %p387, %p388
    %p390 = scmp.ne.s32.totalorder %s382, %s384
    %p391 = scmp.eq.s32.totalorder %s33, 1
    %p392 = por %p390, %p391
    %p393 = scmp.ne.s32.totalorder %s384, %s385
    %p394 = scmp.eq.s32.totalorder %s33, 0
    %p395 = por %p393, %p394
    %p396 = scmp.ne.s32.totalorder %s384, %s385
    %p397 = scmp.eq.s32.totalorder %s34, 1
    %p398 = por %p396, %p397
    %p400 = scmp.ne.s32.totalorder %s385, %s399
    %p401 = scmp.eq.s32.totalorder %s34, 0
    %p402 = por %p400, %p401
    %s404 = sadd.s32 %s403, 1
    %p407 = scmp.eq.s32.totalorder %s28, 1
    %p408 = scmp.ne.s32.totalorder %s403, %s405
    %p409 = scmp.eq.s32.totalorder %s28, 0
    %p410 = por %p408, %p409
    %p411 = scmp.ne.s32.totalorder %s403, %s405
    %p412 = scmp.eq.s32.totalorder %s33, 1
    %p413 = por %p411, %p412
    %p414 = scmp.ne.s32.totalorder %s405, %s406
    %p415 = scmp.eq.s32.totalorder %s33, 0
    %p416 = por %p414, %p415
    %p417 = scmp.ne.s32.totalorder %s405, %s406
    %p418 = scmp.eq.s32.totalorder %s34, 1
    %p419 = por %p417, %p418
    %p421 = scmp.ne.s32.totalorder %s406, %s420
    %p422 = scmp.eq.s32.totalorder %s34, 0
    %p423 = por %p421, %p422
    %s425 = sadd.s32 %s424, 1
    %p428 = scmp.eq.s32.totalorder %s28, 1
    %p429 = scmp.ne.s32.totalorder %s424, %s426
    %p430 = scmp.eq.s32.totalorder %s28, 0
    %p431 = por %p429, %p430
    %p432 = scmp.ne.s32.totalorder %s424, %s426
    %p433 = scmp.eq.s32.totalorder %s33, 1
    %p434 = por %p432, %p433
    %p435 = scmp.ne.s32.totalorder %s426, %s427
    %p436 = scmp.eq.s32.totalorder %s33, 0
    %p437 = por %p435, %p436
    %p438 = scmp.ne.s32.totalorder %s426, %s427
    %p439 = scmp.eq.s32.totalorder %s34, 1
    %p440 = por %p438, %p439
    %p442 = scmp.ne.s32.totalorder %s427, %s441
    %p443 = scmp.eq.s32.totalorder %s34, 0
    %p444 = por %p442, %p443
    %s446 = sadd.s32 %s445, 1
    %p449 = scmp.eq.s32.totalorder %s28, 1
    %p450 = scmp.ne.s32.totalorder %s445, %s447
    %p451 = scmp.eq.s32.totalorder %s28, 0
    %p452 = por %p450, %p451
    %p453 = scmp.ne.s32.totalorder %s445, %s447
    %p454 = scmp.eq.s32.totalorder %s33, 1
    %p455 = por %p453, %p454
    %p456 = scmp.ne.s32.totalorder %s447, %s448
    %p457 = scmp.eq.s32.totalorder %s33, 0
    %p458 = por %p456, %p457
    %p459 = scmp.ne.s32.totalorder %s447, %s448
    %p460 = scmp.eq.s32.totalorder %s34, 1
    %p461 = por %p459, %p460
    %p463 = scmp.ne.s32.totalorder %s448, %s462
    %p464 = scmp.eq.s32.totalorder %s34, 0
    %p465 = por %p463, %p464
    %s467 = sadd.s32 %s466, 1
    %p470 = scmp.eq.s32.totalorder %s28, 1
    %p471 = scmp.ne.s32.totalorder %s466, %s468
    %p472 = scmp.eq.s32.totalorder %s28, 0
    %p473 = por %p471, %p472
    %p474 = scmp.ne.s32.totalorder %s466, %s468
    %p475 = scmp.eq.s32.totalorder %s33, 1
    %p476 = por %p474, %p475
    %p477 = scmp.ne.s32.totalorder %s468, %s469
    %p478 = scmp.eq.s32.totalorder %s33, 0
    %p479 = por %p477, %p478
    %p480 = scmp.ne.s32.totalorder %s468, %s469
    %p481 = scmp.eq.s32.totalorder %s34, 1
    %p482 = por %p480, %p481
    %p484 = scmp.ne.s32.totalorder %s469, %s483
    %p485 = scmp.eq.s32.totalorder %s34, 0
    %p486 = por %p484, %p485
    %s488 = sadd.s32 %s487, 1
    %p491 = scmp.eq.s32.totalorder %s28, 1
    %p492 = scmp.ne.s32.totalorder %s487, %s489
    %p493 = scmp.eq.s32.totalorder %s28, 0
    %p494 = por %p492, %p493
    %p495 = scmp.ne.s32.totalorder %s487, %s489
    %p496 = scmp.eq.s32.totalorder %s33, 1
    %p497 = por %p495, %p496
    %p498 = scmp.ne.s32.totalorder %s489, %s490
    %p499 = scmp.eq.s32.totalorder %s33, 0
    %p500 = por %p498, %p499
    %p501 = scmp.ne.s32.totalorder %s489, %s490
    %p502 = scmp.eq.s32.totalorder %s34, 1
    %p503 = por %p501, %p502
    %p505 = scmp.ne.s32.totalorder %s490, %s504
    %p506 = scmp.eq.s32.totalorder %s34, 0
    %p507 = por %p505, %p506
    %s508 = ssub.s32 %s28, %s35
    %p509 = scmp.eq.s32.totalorder %s508, 0
    %s511 = sadd.s32 %s510, 1
    %s512 = scalar_select %p509, %s510, %s511
    %p515 = pneg %p509
    %p516 = scmp.eq.s32.totalorder %s28, 1
    %p517 = por %p515, %p516
    %p518 = scmp.ne.s32.totalorder %s510, %s513
    %p519 = scmp.eq.s32.totalorder %s28, 0
    %p520 = por %p518, %p519
    %p521 = scmp.ne.s32.totalorder %s510, %s513
    %p522 = scmp.eq.s32.totalorder %s33, 1
    %p523 = por %p521, %p522
    %p524 = scmp.ne.s32.totalorder %s513, %s514
    %p525 = scmp.eq.s32.totalorder %s33, 0
    %p526 = por %p524, %p525
    %p527 = scmp.ne.s32.totalorder %s513, %s514
    %p528 = scmp.eq.s32.totalorder %s34, 1
    %p529 = por %p527, %p528
    %p531 = scmp.ne.s32.totalorder %s514, %s530
    %p532 = scmp.eq.s32.totalorder %s34, 0
    %p533 = por %p531, %p532
    %p534 = scmp.le.s32.totalorder 1, %s28
    %p535 = scmp.lt.s32.totalorder %s28, 3
    %p536 = pnand %p534, %p535
    %p537 = pneg %p536
    // Predicated region
    $region9: #{_lambda_.9} parent=5 // pred_check
      _
    $region10: #{_lambda_.9} parent=5 // pred_check_branch
      %539 = sbr.rel (%p536) target = $region12
    $region11: #{_lambda_.9} parent=5 // pred_region
      %s540 = ssub.s32 %s28, 1
      // Predicated region
      $region13: #{_lambda_.9} parent=11 // pred_check
        %p541 = pneg %p101
      $region14: #{_lambda_.9} parent=11 // pred_check_branch
        %543 = sbr.rel (%p541) target = $region16
      $region15: #{_lambda_.9} parent=11 // pred_region
        _
      $region16: #{_lambda_.9} parent=11 // pred_fallthru
        _
      // Predicated region
      $region17: #{_lambda_.9} parent=11 // pred_check
        %p544 = pneg %p122
      $region18: #{_lambda_.9} parent=11 // pred_check_branch
        %546 = sbr.rel (%p544) target = $region20
      $region19: #{_lambda_.9} parent=11 // pred_region
        _
      $region20: #{_lambda_.9} parent=11 // pred_fallthru
        _
      // Predicated region
      $region21: #{_lambda_.9} parent=11 // pred_check
        %p547 = pneg %p143
      $region22: #{_lambda_.9} parent=11 // pred_check_branch
        %549 = sbr.rel (%p547) target = $region24
      $region23: #{_lambda_.9} parent=11 // pred_region
        _
      $region24: #{_lambda_.9} parent=11 // pred_fallthru
        _
      // Predicated region
      $region25: #{_lambda_.9} parent=11 // pred_check
        %p550 = pneg %p164
      $region26: #{_lambda_.9} parent=11 // pred_check_branch
        %552 = sbr.rel (%p550) target = $region28
      $region27: #{_lambda_.9} parent=11 // pred_region
        _
      $region28: #{_lambda_.9} parent=11 // pred_fallthru
        _
      // Predicated region
      $region29: #{_lambda_.9} parent=11 // pred_check
        %p553 = pneg %p185
      $region30: #{_lambda_.9} parent=11 // pred_check_branch
        %555 = sbr.rel (%p553) target = $region32
      $region31: #{_lambda_.9} parent=11 // pred_region
        _
      $region32: #{_lambda_.9} parent=11 // pred_fallthru
        _
      // Predicated region
      $region33: #{_lambda_.9} parent=11 // pred_check
        %p556 = pneg %p206
      $region34: #{_lambda_.9} parent=11 // pred_check_branch
        %558 = sbr.rel (%p556) target = $region36
      $region35: #{_lambda_.9} parent=11 // pred_region
        _
      $region36: #{_lambda_.9} parent=11 // pred_fallthru
        _
      // Predicated region
      $region37: #{_lambda_.9} parent=11 // pred_check
        %p559 = pneg %p227
      $region38: #{_lambda_.9} parent=11 // pred_check_branch
        %561 = sbr.rel (%p559) target = $region40
      $region39: #{_lambda_.9} parent=11 // pred_region
        _
      $region40: #{_lambda_.9} parent=11 // pred_fallthru
        _
      // Predicated region
      $region41: #{_lambda_.9} parent=11 // pred_check
        %p562 = pneg %p248
      $region42: #{_lambda_.9} parent=11 // pred_check_branch
        %564 = sbr.rel (%p562) target = $region44
      $region43: #{_lambda_.9} parent=11 // pred_region
        _
      $region44: #{_lambda_.9} parent=11 // pred_fallthru
        _
      // Predicated region
      $region45: #{_lambda_.9} parent=11 // pred_check
        %p565 = pneg %p269
      $region46: #{_lambda_.9} parent=11 // pred_check_branch
        %567 = sbr.rel (%p565) target = $region48
      $region47: #{_lambda_.9} parent=11 // pred_region
        _
      $region48: #{_lambda_.9} parent=11 // pred_fallthru
        _
      // Predicated region
      $region49: #{_lambda_.9} parent=11 // pred_check
        %p568 = pneg %p290
      $region50: #{_lambda_.9} parent=11 // pred_check_branch
        %570 = sbr.rel (%p568) target = $region52
      $region51: #{_lambda_.9} parent=11 // pred_region
        _
      $region52: #{_lambda_.9} parent=11 // pred_fallthru
        _
      // Predicated region
      $region53: #{_lambda_.9} parent=11 // pred_check
        %p571 = pneg %p311
      $region54: #{_lambda_.9} parent=11 // pred_check_branch
        %573 = sbr.rel (%p571) target = $region56
      $region55: #{_lambda_.9} parent=11 // pred_region
        _
      $region56: #{_lambda_.9} parent=11 // pred_fallthru
        _
      // Predicated region
      $region57: #{_lambda_.9} parent=11 // pred_check
        %p574 = pneg %p332
      $region58: #{_lambda_.9} parent=11 // pred_check_branch
        %576 = sbr.rel (%p574) target = $region60
      $region59: #{_lambda_.9} parent=11 // pred_region
        _
      $region60: #{_lambda_.9} parent=11 // pred_fallthru
        _
      // Predicated region
      $region61: #{_lambda_.9} parent=11 // pred_check
        %p577 = pneg %p353
      $region62: #{_lambda_.9} parent=11 // pred_check_branch
        %579 = sbr.rel (%p577) target = $region64
      $region63: #{_lambda_.9} parent=11 // pred_region
        _
      $region64: #{_lambda_.9} parent=11 // pred_fallthru
        _
      // Predicated region
      $region65: #{_lambda_.9} parent=11 // pred_check
        %p580 = pneg %p374
      $region66: #{_lambda_.9} parent=11 // pred_check_branch
        %582 = sbr.rel (%p580) target = $region68
      $region67: #{_lambda_.9} parent=11 // pred_region
        _
      $region68: #{_lambda_.9} parent=11 // pred_fallthru
        _
      // Predicated region
      $region69: #{_lambda_.9} parent=11 // pred_check
        %p583 = pneg %p395
      $region70: #{_lambda_.9} parent=11 // pred_check_branch
        %585 = sbr.rel (%p583) target = $region72
      $region71: #{_lambda_.9} parent=11 // pred_region
        _
      $region72: #{_lambda_.9} parent=11 // pred_fallthru
        _
      // Predicated region
      $region73: #{_lambda_.9} parent=11 // pred_check
        %p586 = pneg %p416
      $region74: #{_lambda_.9} parent=11 // pred_check_branch
        %588 = sbr.rel (%p586) target = $region76
      $region75: #{_lambda_.9} parent=11 // pred_region
        _
      $region76: #{_lambda_.9} parent=11 // pred_fallthru
        _
      // Predicated region
      $region77: #{_lambda_.9} parent=11 // pred_check
        %p589 = pneg %p437
      $region78: #{_lambda_.9} parent=11 // pred_check_branch
        %591 = sbr.rel (%p589) target = $region80
      $region79: #{_lambda_.9} parent=11 // pred_region
        _
      $region80: #{_lambda_.9} parent=11 // pred_fallthru
        _
      // Predicated region
      $region81: #{_lambda_.9} parent=11 // pred_check
        %p592 = pneg %p458
      $region82: #{_lambda_.9} parent=11 // pred_check_branch
        %594 = sbr.rel (%p592) target = $region84
      $region83: #{_lambda_.9} parent=11 // pred_region
        _
      $region84: #{_lambda_.9} parent=11 // pred_fallthru
        _
      // Predicated region
      $region85: #{_lambda_.9} parent=11 // pred_check
        %p595 = pneg %p479
      $region86: #{_lambda_.9} parent=11 // pred_check_branch
        %597 = sbr.rel (%p595) target = $region88
      $region87: #{_lambda_.9} parent=11 // pred_region
        _
      $region88: #{_lambda_.9} parent=11 // pred_fallthru
        _
      // Predicated region
      $region89: #{_lambda_.9} parent=11 // pred_check
        %p598 = pneg %p500
      $region90: #{_lambda_.9} parent=11 // pred_check_branch
        %600 = sbr.rel (%p598) target = $region92
      $region91: #{_lambda_.9} parent=11 // pred_region
        _
      $region92: #{_lambda_.9} parent=11 // pred_fallthru
        _
    $region12: #{_lambda_.9} parent=5 // pred_fallthru
      _
    %p601 = scmp.lt.s32.totalorder %s28, 2
    // Predicated region
    $region93: #{_lambda_.9} parent=5 // pred_check
      %p602 = pneg %p601
    $region94: #{_lambda_.9} parent=5 // pred_check_branch
      %604 = sbr.rel (%p602) target = $region96
    $region95: #{_lambda_.9} parent=5 // pred_region
      // Predicated region
      $region97: #{_lambda_.9} parent=95 // pred_check
        %p605 = pneg %p48
      $region98: #{_lambda_.9} parent=95 // pred_check_branch
        %607 = sbr.rel (%p605) target = $region100
      $region99: #{_lambda_.9} parent=95 // pred_region
        %p608 = scmp.lt.s32.totalorder %s28, 1
        %s609 = scalar_select %p608, %s28, 1
        %s610 = smul.addr %s609, 2
        %s611 = smul.addr %s610, 8
        %s612 = scalar_lea.vmem %s0, %s611
      $region100: #{_lambda_.9} parent=95 // pred_fallthru
        _
      // Predicated region
      $region101: #{_lambda_.9} parent=95 // pred_check
        %p613 = pneg %p74
      $region102: #{_lambda_.9} parent=95 // pred_check_branch
        %615 = sbr.rel (%p613) target = $region104
      $region103: #{_lambda_.9} parent=95 // pred_region
        %p616 = scmp.lt.s32.totalorder %s28, 1
        %s617 = scalar_select %p616, %s28, 1
        %s618 = smul.addr %s617, 3
        %s619 = smul.addr %s618, 8
        %s620 = scalar_lea.vmem %s1, %s619
      $region104: #{_lambda_.9} parent=95 // pred_fallthru
        _
    $region96: #{_lambda_.9} parent=5 // pred_fallthru
      _
    %p621 = scmp.le.s32.totalorder 1, %s28
    %p622 = scmp.lt.s32.totalorder %s28, 3
    %p623 = pnand %p621, %p622
    %p624 = pneg %p623
    // Predicated region
    $region105: #{_lambda_.9} parent=5 // pred_check
      _
    $region106: #{_lambda_.9} parent=5 // pred_check_branch
      %626 = sbr.rel (%p623) target = $region108
    $region107: #{_lambda_.9} parent=5 // pred_region
      %s627 = ssub.s32 %s28, 1
      %p628 = scmp.lt.s32.totalorder %s33, 1
      %s629 = scalar_select %p628, %s33, 1
      %s630 = smul.addr %s629, 2
      %s631 = smul.addr %s630, 8
      %s632 = scalar_lea.vmem %s0, %s631
      %p633 = pneg %p54
      %p634 = pneg %p51
      %p635 = scmp.lt.s32.totalorder %s33, 1
      %s636 = scalar_select %p635, %s33, 1
      %s637 = smul.addr %s636, 3
      %s638 = smul.addr %s637, 8
      %s639 = scalar_lea.vmem %s1, %s638
      %p640 = pneg %p80
      %p641 = pneg %p77
      %p642 = pneg %p101
      %p643 = pneg %p98
      %p644 = pneg %p122
      %p645 = pneg %p119
      %p646 = pneg %p143
      %p647 = pneg %p140
      %p648 = pneg %p164
      %p649 = pneg %p161
      %p650 = pneg %p185
      %p651 = pneg %p182
      %p652 = pneg %p206
      %p653 = pneg %p203
      %p654 = pneg %p227
      %p655 = pneg %p224
      %p656 = pneg %p248
      %p657 = pneg %p245
      %p658 = pneg %p269
      %p659 = pneg %p266
      %p660 = pneg %p290
      %p661 = pneg %p287
      %p662 = pneg %p311
      %p663 = pneg %p308
      %p664 = pneg %p332
      %p665 = pneg %p329
      %p666 = pneg %p353
      %p667 = pneg %p350
      %p668 = pneg %p374
      %p669 = pneg %p371
      %p670 = pneg %p395
      %p671 = pneg %p392
      %p672 = pneg %p416
      %p673 = pneg %p413
      %p674 = pneg %p437
      %p675 = pneg %p434
      %p676 = pneg %p458
      %p677 = pneg %p455
      %p678 = pneg %p479
      %p679 = pneg %p476
      %p680 = pneg %p500
      %p681 = pneg %p497
      %p682 = pneg %p526
      %p683 = pneg %p523
      %p684 = scmp.lt.s32.totalorder %s33, 1
      %s685 = scalar_select %p684, %s33, 1
      %s686 = smul.addr %s685, 2
      %s687 = smul.addr %s686, 8
      %s688 = scalar_lea.vmem %s22, %s687
      %p689 = scmp.lt.s32.totalorder %s33, 1
      %s690 = scalar_select %p689, %s33, 1
      %s691 = smul.addr %s690, 2
      %s692 = smul.addr %s691, 8
      %s693 = scalar_lea.vmem %s0, %s692
      %p694 = scmp.lt.s32.totalorder %s33, 1
      %s695 = scalar_select %p694, %s33, 1
      %s696 = smul.addr %s695, 3
      %s697 = smul.addr %s696, 8
      %s698 = scalar_lea.vmem %s1, %s697
      %p699 = scmp.lt.s32.totalorder %s33, 1
      %s700 = scalar_select %p699, %s33, 1
      %s701 = smul.addr %s700, 2
      %s702 = smul.addr %s701, 8
      %s703 = scalar_lea.vmem %s22, %s702
      %v705 = vld [vmem:[%s693] sm:$0xff]
      %v706 = vld [vmem:[%s693 + $0x8] sm:$0xff]
      %v707 = vld [vmem:[%s698] sm:$0xff]
      %v708 = vld [vmem:[%s698 + $0x8] sm:$0xff]
      %v709 = vld [vmem:[%s698 + $0x10] sm:$0x1]
      %v710 = vld [vmem:[%s2] sm:$0x1]
      %v711 = vld [vmem:[%s3] sm:$0x1]
      %vm712 = vcmask 261120
      %v713 = vsel %vm712, %v705, 0.0
      %714 = vadd.xlane.f32.xlu0 %v713
      %v715 = vpop.xlane.xlu0 %714
      %v716 = vsel %vm712, %v706, 0.0
      %717 = vadd.xlane.f32.xlu0 %v716
      %v718 = vpop.xlane.xlu0 %717
      %v719 = vrcp.pop 32.0
      %v720 = vmul.f32 32.0, %v719
      %v721 = vsub.f32 1.0, %v720
      %v722 = vmul.f32 %v719, %v721
      %v723 = vadd.f32 %v719, %v722
      %vm724 = vweird.f32 %v719
      %v725 = vsel %vm724, %v719, %v723
      %v726 = vmul.f32 %v715, %v725
      %v727 = vmul.f32 %v718, %v725
      %v728 = vsub.f32 %v705, %v726
      %v729 = vsub.f32 %v706, %v727
      %v730 = vmul.f32 %v728, %v728
      %v731 = vmul.f32 %v729, %v729
      %v732 = vsel %vm712, %v730, 0.0
      %733 = vadd.xlane.f32.xlu0 %v732
      %v734 = vpop.xlane.xlu0 %733
      %v735 = vsel %vm712, %v731, 0.0
      %736 = vadd.xlane.f32.xlu0 %v735
      %v737 = vpop.xlane.xlu0 %736
      %v738 = vmul.f32 %v734, %v725
      %v739 = vmul.f32 %v737, %v725
      %v740 = vadd.f32 %v738, 1e-05
      %v741 = vadd.f32 %v739, 1e-05
      %v742 = vrsqrt.pop %v740
      %v743 = vmul.f32 %v742, %v740
      %v744 = vmul.f32 %v743, %v742
      %v745 = vmul.f32 0.5, %v744
      %v746 = vsub.f32 1.5, %v745
      %v747 = vmul.f32 %v742, %v746
      %vm748 = vweird.f32 %v740
      %vm749 = vweird.f32 %v742
      %vm750 = vmor %vm748, %vm749
      %v751 = vsel %vm750, %v742, %v747
      %v752 = vrsqrt.pop %v741
      %v753 = vmul.f32 %v752, %v741
      %v754 = vmul.f32 %v753, %v752
      %v755 = vmul.f32 0.5, %v754
      %v756 = vsub.f32 1.5, %v755
      %v757 = vmul.f32 %v752, %v756
      %vm758 = vweird.f32 %v741
      %vm759 = vweird.f32 %v752
      %vm760 = vmor %vm758, %vm759
      %v761 = vsel %vm760, %v752, %v757
      %v762 = vmul.f32 %v728, %v751
      %v763 = vmul.f32 %v729, %v761
      %v765 = vperm.slane %v710, 0
      %v767 = vmul.f32 %v762, %v765
      %v768 = vmul.f32 %v763, %v765
      %v770 = vperm.slane %v711, 0
      %v772 = vadd.f32 %v767, %v770
      %v773 = vadd.f32 %v768, %v770
      %v774 = vpack.c.bf16 %v773, %v772
      %v775 = vld [vmem:[%s4] sm:$0xf]
      %v776 = vld [vmem:[%s4 + $0x4] sm:$0xf]
      %v777 = vld [vmem:[%s4 + $0x8] sm:$0xf]
      %v778 = vld [vmem:[%s4 + $0xc] sm:$0xf]
      %v779 = vld [vmem:[%s5] sm:$0x1]
      %v781 = vperm.slane %v779, 0
      %v787 = vunpack.c.l.b16 %v775
      %v788 = vunpack.c.l.b16 %v776
      %v789 = vunpack.c.l.b16 %v777
      %v790 = vunpack.c.l.b16 %v778
      %v791 = vpack.c.b16 %v788, %v787
      %v792 = vpack.c.b16 %v790, %v789
      %v796 = vsel %vm712, %v774, 0
      %798 = vmatpush.bf16.msra.mxu0 0
      %799 = vmatpush.bf16.msra.mxu0 0
      %800 = vmatpush.bf16.msra.mxu0 0
      %801 = vmatpush.bf16.msra.mxu0 0
      %802 = vmatpush.bf16.msra.mxu0 0
      %803 = vmatpush.bf16.msra.mxu0 0
      %804 = vmatpush.bf16.msra.mxu0 %v792
      %805 = vmatpush.bf16.msra.mxu0 %v791
      %806 = vmatmul.bf16.gmra.mxu0 %v796
      %v807 = vpop.f32.mrf.mxu0
      %v808 = vadd.f32 %v781, %v807
      %v809 = vpop.f32.mrf.mxu0
      %v810 = vadd.f32 %v781, %v809
      %811 = vdwg.mxu0
      %v812 = vpack.c.bf16 %v708, %v707
      %v813 = vpack.c.bf16 %v709, %v709
      %v814 = vld [vmem:[%s6] sm:$0xf]
      %v815 = vld [vmem:[%s6 + $0x4] sm:$0xf]
      %v816 = vld [vmem:[%s6 + $0x8] sm:$0xf]
      %v817 = vld [vmem:[%s6 + $0xc] sm:$0xf]
      %v818 = vld [vmem:[%s7] sm:$0x1]
      %v820 = vperm.slane %v818, 0
      %v826 = vunpack.c.l.b16 %v814
      %v827 = vunpack.c.l.b16 %v815
      %v828 = vunpack.c.l.b16 %v816
      %v829 = vunpack.c.l.b16 %v817
      %v830 = vpack.c.b16 %v827, %v826
      %v831 = vpack.c.b16 %v829, %v828
      %v835 = vsel %vm712, %v812, 0
      %v838 = vsel %vm712, %v813, 0
      %840 = vmatpush.bf16.msra.mxu0 0
      %841 = vmatpush.bf16.msra.mxu0 0
      %842 = vmatpush.bf16.msra.mxu0 0
      %843 = vmatpush.bf16.msra.mxu0 0
      %844 = vmatpush.bf16.msra.mxu0 0
      %845 = vmatpush.bf16.msra.mxu0 0
      %846 = vmatpush.bf16.msra.mxu0 %v831
      %847 = vmatpush.bf16.msra.mxu0 %v830
      %848 = vmatmul.bf16.gmra.mxu0 %v835
      %v849 = vpop.f32.mrf.mxu0
      %v850 = vadd.f32 %v820, %v849
      %v851 = vpop.f32.mrf.mxu0
      %v852 = vadd.f32 %v820, %v851
      %853 = vmatmul.bf16.gmra.mxu0 %v838
      %v854 = vpop.f32.mrf.mxu0
      %v855 = vadd.f32 %v820, %v854
      %v856 = vpop.f32.mrf.mxu0
      %857 = vdwg.mxu0
      %v858 = vld [vmem:[%s8] sm:$0xf]
      %v859 = vld [vmem:[%s8 + $0x4] sm:$0xf]
      %v860 = vld [vmem:[%s8 + $0x8] sm:$0xf]
      %v861 = vld [vmem:[%s8 + $0xc] sm:$0xf]
      %v862 = vld [vmem:[%s9] sm:$0x1]
      %v863 = vpack.c.bf16 %v808, %v808
      %v864 = vpack.c.bf16 %v810, %v810
      %v865 = vpack.c.bf16 %v850, %v850
      %v866 = vpack.c.bf16 %v852, %v852
      %v867 = vpack.c.bf16 %v855, %v855
      %v870 = vunpack.c.l.b16 %v863
      %v871 = vunpack.c.l.b16 %v864
      %v872 = vpack.c.b16 %v871, %v870
      %v876 = vunpack.c.l.b16 %v865
      %v877 = vunpack.c.l.b16 %v866
      %v878 = vunpack.c.l.b16 %v867
      %v879 = vpack.c.b16 %v877, %v876
      %v880 = vpack.c.b16 %v878, %v878
      %vm881 = vcmask 64512
      %v883 = vsel %vm881, %v872, 0
      %v886 = vsel %vm881, %v879, 0
      %v889 = vsel %vm881, %v880, 0
      %891 = vmatpush.bf16.xpose.msra.mxu0 0
      %892 = vmatpush.bf16.xpose.msra.mxu0 0
      %893 = vmatpush.bf16.xpose.msra.mxu0 0
      %894 = vmatpush.bf16.xpose.msra.mxu0 0
      %895 = vmatpush.bf16.xpose.msra.mxu0 0
      %896 = vmatpush.bf16.xpose.msra.mxu0 0
      %897 = vmatpush.bf16.xpose.msra.mxu0 %v889
      %898 = vmatpush.bf16.xpose.msra.mxu0 %v886
      %899 = vmatmul.bf16.gmra.mxu0 %v883
      %v900 = vpop.f32.mrf.mxu0
      %v901 = vadd.f32 0.0, %v900
      %v902 = vpop.f32.mrf.mxu0
      %v903 = vadd.f32 0.0, %v902
      %904 = vdwg.mxu0
      %v905 = vmul.f32 %v901, 0.35355338
      %v906 = vmul.f32 %v903, 0.35355338
      %vm907 = vcmask 138240
      %v908 = vsel %vm907, %v905, -inf
      %909 = vmax.xlane.f32.xlu0 %v908
      %v910 = vpop.xlane.xlu0 %909
      %v911 = vsel %vm907, %v906, -inf
      %912 = vmax.xlane.f32.xlu0 %v911
      %v913 = vpop.xlane.xlu0 %912
      %v914 = vsub.f32 %v905, %v910
      %v915 = vsub.f32 %v906, %v913
      %v916 = vmul.f32 %v914, 1.442695
      %v917 = vpow.pop %v916
      %v918 = vmul.f32 %v915, 1.442695
      %v919 = vpow.pop %v918
      %v920 = vsel %vm907, %v917, 0.0
      %921 = vadd.xlane.f32.xlu0 %v920
      %v922 = vpop.xlane.xlu0 %921
      %v923 = vsel %vm907, %v919, 0.0
      %924 = vadd.xlane.f32.xlu0 %v923
      %v925 = vpop.xlane.xlu0 %924
      %v926 = vrcp.pop %v922
      %v927 = vrcp.pop %v925
      %v928 = vmul.f32 %v917, %v926
      %v929 = vmul.f32 %v919, %v927
      %v930 = vpack.c.bf16 %v929, %v928
      %931 = vrot.lane.b32.xlu0 %v879, 96
      %v932 = vpop.permute.xlu0 %931
      %933 = vrot.lane.b32.xlu0 %v880, 96
      %v934 = vpop.permute.xlu0 %933
      %v937 = vsel %vm907, %v930, 0
      %vm939 = vcmask 1040384
      %v940 = vsel 0, 4294967295, 65535
      %v941 = vsel %vm939, %v940, 0
      %v943 = vand.u32 %v934, %v941
      %945 = vmatpush.bf16.msra.mxu0 0
      %946 = vmatpush.bf16.msra.mxu0 0
      %947 = vmatpush.bf16.msra.mxu0 0
      %948 = vmatpush.bf16.msra.mxu0 0
      %949 = vmatpush.bf16.msra.mxu0 0
      %950 = vmatpush.bf16.msra.mxu0 0
      %951 = vmatpush.bf16.msra.mxu0 %v943
      %952 = vmatpush.bf16.msra.mxu0 %v932
      %953 = vmatmul.bf16.gmra.mxu0 %v937
      %v954 = vpop.f32.mrf.mxu0
      %v955 = vadd.f32 0.0, %v954
      %v956 = vpop.f32.mrf.mxu0
      %v957 = vadd.f32 0.0, %v956
      %958 = vdwg.mxu0
      %959 = vrot.lane.b32.xlu0 %v872, 120
      %v960 = vpop.permute.xlu0 %959
      %961 = vrot.lane.b32.xlu0 %v879, 120
      %v962 = vpop.permute.xlu0 %961
      %963 = vrot.lane.b32.xlu0 %v880, 120
      %v964 = vpop.permute.xlu0 %963
      %v966 = vsel %vm881, %v960, 0
      %v969 = vsel %vm881, %v962, 0
      %v972 = vsel %vm881, %v964, 0
      %974 = vmatpush.bf16.xpose.msra.mxu0 0
      %975 = vmatpush.bf16.xpose.msra.mxu0 0
      %976 = vmatpush.bf16.xpose.msra.mxu0 0
      %977 = vmatpush.bf16.xpose.msra.mxu0 0
      %978 = vmatpush.bf16.xpose.msra.mxu0 0
      %979 = vmatpush.bf16.xpose.msra.mxu0 0
      %980 = vmatpush.bf16.xpose.msra.mxu0 %v972
      %981 = vmatpush.bf16.xpose.msra.mxu0 %v969
      %982 = vmatmul.bf16.gmra.mxu0 %v966
      %v983 = vpop.f32.mrf.mxu0
      %v984 = vadd.f32 0.0, %v983
      %v985 = vpop.f32.mrf.mxu0
      %v986 = vadd.f32 0.0, %v985
      %987 = vdwg.mxu0
      %v988 = vmul.f32 %v984, 0.35355338
      %v989 = vmul.f32 %v986, 0.35355338
      %v990 = vsel %vm907, %v988, -inf
      %991 = vmax.xlane.f32.xlu0 %v990
      %v992 = vpop.xlane.xlu0 %991
      %v993 = vsel %vm907, %v989, -inf
      %994 = vmax.xlane.f32.xlu0 %v993
      %v995 = vpop.xlane.xlu0 %994
      %v996 = vsub.f32 %v988, %v992
      %v997 = vsub.f32 %v989, %v995
      %v998 = vmul.f32 %v996, 1.442695
      %v999 = vpow.pop %v998
      %v1000 = vmul.f32 %v997, 1.442695
      %v1001 = vpow.pop %v1000
      %v1002 = vsel %vm907, %v999, 0.0
      %1003 = vadd.xlane.f32.xlu0 %v1002
      %v1004 = vpop.xlane.xlu0 %1003
      %v1005 = vsel %vm907, %v1001, 0.0
      %1006 = vadd.xlane.f32.xlu0 %v1005
      %v1007 = vpop.xlane.xlu0 %1006
      %v1008 = vrcp.pop %v1004
      %v1009 = vrcp.pop %v1007
      %v1010 = vmul.f32 %v999, %v1008
      %v1011 = vmul.f32 %v1001, %v1009
      %v1012 = vpack.c.bf16 %v1011, %v1010
      %1013 = vrot.lane.b32.xlu0 %v879, 88
      %v1014 = vpop.permute.xlu0 %1013
      %1015 = vrot.lane.b32.xlu0 %v880, 88
      %v1016 = vpop.permute.xlu0 %1015
      %v1019 = vsel %vm907, %v1012, 0
      %v1022 = vand.u32 %v1016, %v941
      %1024 = vmatpush.bf16.msra.mxu0 0
      %1025 = vmatpush.bf16.msra.mxu0 0
      %1026 = vmatpush.bf16.msra.mxu0 0
      %1027 = vmatpush.bf16.msra.mxu0 0
      %1028 = vmatpush.bf16.msra.mxu0 0
      %1029 = vmatpush.bf16.msra.mxu0 0
      %1030 = vmatpush.bf16.msra.mxu0 %v1022
      %1031 = vmatpush.bf16.msra.mxu0 %v1014
      %1032 = vmatmul.bf16.gmra.mxu0 %v1019
      %v1033 = vpop.f32.mrf.mxu0
      %v1034 = vadd.f32 0.0, %v1033
      %v1035 = vpop.f32.mrf.mxu0
      %v1036 = vadd.f32 0.0, %v1035
      %1037 = vdwg.mxu0
      %1038 = vrot.lane.b32.xlu0 %v872, 112
      %v1039 = vpop.permute.xlu0 %1038
      %1040 = vrot.lane.b32.xlu0 %v879, 112
      %v1041 = vpop.permute.xlu0 %1040
      %1042 = vrot.lane.b32.xlu0 %v880, 112
      %v1043 = vpop.permute.xlu0 %1042
      %v1045 = vsel %vm881, %v1039, 0
      %v1048 = vsel %vm881, %v1041, 0
      %v1051 = vsel %vm881, %v1043, 0
      %1053 = vmatpush.bf16.xpose.msra.mxu0 0
      %1054 = vmatpush.bf16.xpose.msra.mxu0 0
      %1055 = vmatpush.bf16.xpose.msra.mxu0 0
      %1056 = vmatpush.bf16.xpose.msra.mxu0 0
      %1057 = vmatpush.bf16.xpose.msra.mxu0 0
      %1058 = vmatpush.bf16.xpose.msra.mxu0 0
      %1059 = vmatpush.bf16.xpose.msra.mxu0 %v1051
      %1060 = vmatpush.bf16.xpose.msra.mxu0 %v1048
      %1061 = vmatmul.bf16.gmra.mxu0 %v1045
      %v1062 = vpop.f32.mrf.mxu0
      %v1063 = vadd.f32 0.0, %v1062
      %v1064 = vpop.f32.mrf.mxu0
      %v1065 = vadd.f32 0.0, %v1064
      %1066 = vdwg.mxu0
      %v1067 = vmul.f32 %v1063, 0.35355338
      %v1068 = vmul.f32 %v1065, 0.35355338
      %v1069 = vsel %vm907, %v1067, -inf
      %1070 = vmax.xlane.f32.xlu0 %v1069
      %v1071 = vpop.xlane.xlu0 %1070
      %v1072 = vsel %vm907, %v1068, -inf
      %1073 = vmax.xlane.f32.xlu0 %v1072
      %v1074 = vpop.xlane.xlu0 %1073
      %v1075 = vsub.f32 %v1067, %v1071
      %v1076 = vsub.f32 %v1068, %v1074
      %v1077 = vmul.f32 %v1075, 1.442695
      %v1078 = vpow.pop %v1077
      %v1079 = vmul.f32 %v1076, 1.442695
      %v1080 = vpow.pop %v1079
      %v1081 = vsel %vm907, %v1078, 0.0
      %1082 = vadd.xlane.f32.xlu0 %v1081
      %v1083 = vpop.xlane.xlu0 %1082
      %v1084 = vsel %vm907, %v1080, 0.0
      %1085 = vadd.xlane.f32.xlu0 %v1084
      %v1086 = vpop.xlane.xlu0 %1085
      %v1087 = vrcp.pop %v1083
      %v1088 = vrcp.pop %v1086
      %v1089 = vmul.f32 %v1078, %v1087
      %v1090 = vmul.f32 %v1080, %v1088
      %v1091 = vpack.c.bf16 %v1090, %v1089
      %1092 = vrot.lane.b32.xlu0 %v879, 80
      %v1093 = vpop.permute.xlu0 %1092
      %1094 = vrot.lane.b32.xlu0 %v880, 80
      %v1095 = vpop.permute.xlu0 %1094
      %v1098 = vsel %vm907, %v1091, 0
      %v1101 = vand.u32 %v1095, %v941
      %1103 = vmatpush.bf16.msra.mxu0 0
      %1104 = vmatpush.bf16.msra.mxu0 0
      %1105 = vmatpush.bf16.msra.mxu0 0
      %1106 = vmatpush.bf16.msra.mxu0 0
      %1107 = vmatpush.bf16.msra.mxu0 0
      %1108 = vmatpush.bf16.msra.mxu0 0
      %1109 = vmatpush.bf16.msra.mxu0 %v1101
      %1110 = vmatpush.bf16.msra.mxu0 %v1093
      %1111 = vmatmul.bf16.gmra.mxu0 %v1098
      %v1112 = vpop.f32.mrf.mxu0
      %v1113 = vadd.f32 0.0, %v1112
      %v1114 = vpop.f32.mrf.mxu0
      %v1115 = vadd.f32 0.0, %v1114
      %1116 = vdwg.mxu0
      %1117 = vrot.lane.b32.xlu0 %v872, 104
      %v1118 = vpop.permute.xlu0 %1117
      %1119 = vrot.lane.b32.xlu0 %v879, 104
      %v1120 = vpop.permute.xlu0 %1119
      %1121 = vrot.lane.b32.xlu0 %v880, 104
      %v1122 = vpop.permute.xlu0 %1121
      %v1124 = vsel %vm881, %v1118, 0
      %v1127 = vsel %vm881, %v1120, 0
      %v1130 = vsel %vm881, %v1122, 0
      %1132 = vmatpush.bf16.xpose.msra.mxu0 0
      %1133 = vmatpush.bf16.xpose.msra.mxu0 0
      %1134 = vmatpush.bf16.xpose.msra.mxu0 0
      %1135 = vmatpush.bf16.xpose.msra.mxu0 0
      %1136 = vmatpush.bf16.xpose.msra.mxu0 0
      %1137 = vmatpush.bf16.xpose.msra.mxu0 0
      %1138 = vmatpush.bf16.xpose.msra.mxu0 %v1130
      %1139 = vmatpush.bf16.xpose.msra.mxu0 %v1127
      %1140 = vmatmul.bf16.gmra.mxu0 %v1124
      %v1141 = vpop.f32.mrf.mxu0
      %v1142 = vadd.f32 0.0, %v1141
      %v1143 = vpop.f32.mrf.mxu0
      %v1144 = vadd.f32 0.0, %v1143
      %1145 = vdwg.mxu0
      %v1146 = vmul.f32 %v1142, 0.35355338
      %v1147 = vmul.f32 %v1144, 0.35355338
      %v1148 = vsel %vm907, %v1146, -inf
      %1149 = vmax.xlane.f32.xlu0 %v1148
      %v1150 = vpop.xlane.xlu0 %1149
      %v1151 = vsel %vm907, %v1147, -inf
      %1152 = vmax.xlane.f32.xlu0 %v1151
      %v1153 = vpop.xlane.xlu0 %1152
      %v1154 = vsub.f32 %v1146, %v1150
      %v1155 = vsub.f32 %v1147, %v1153
      %v1156 = vmul.f32 %v1154, 1.442695
      %v1157 = vpow.pop %v1156
      %v1158 = vmul.f32 %v1155, 1.442695
      %v1159 = vpow.pop %v1158
      %v1160 = vsel %vm907, %v1157, 0.0
      %1161 = vadd.xlane.f32.xlu0 %v1160
      %v1162 = vpop.xlane.xlu0 %1161
      %v1163 = vsel %vm907, %v1159, 0.0
      %1164 = vadd.xlane.f32.xlu0 %v1163
      %v1165 = vpop.xlane.xlu0 %1164
      %v1166 = vrcp.pop %v1162
      %v1167 = vrcp.pop %v1165
      %v1168 = vmul.f32 %v1157, %v1166
      %v1169 = vmul.f32 %v1159, %v1167
      %v1170 = vpack.c.bf16 %v1169, %v1168
      %1171 = vrot.lane.b32.xlu0 %v879, 72
      %v1172 = vpop.permute.xlu0 %1171
      %1173 = vrot.lane.b32.xlu0 %v880, 72
      %v1174 = vpop.permute.xlu0 %1173
      %v1177 = vsel %vm907, %v1170, 0
      %v1180 = vand.u32 %v1174, %v941
      %1182 = vmatpush.bf16.msra.mxu0 0
      %1183 = vmatpush.bf16.msra.mxu0 0
      %1184 = vmatpush.bf16.msra.mxu0 0
      %1185 = vmatpush.bf16.msra.mxu0 0
      %1186 = vmatpush.bf16.msra.mxu0 0
      %1187 = vmatpush.bf16.msra.mxu0 0
      %1188 = vmatpush.bf16.msra.mxu0 %v1180
      %1189 = vmatpush.bf16.msra.mxu0 %v1172
      %1190 = vmatmul.bf16.gmra.mxu0 %v1177
      %v1191 = vpop.f32.mrf.mxu0
      %v1192 = vadd.f32 0.0, %v1191
      %v1193 = vpop.f32.mrf.mxu0
      %v1194 = vadd.f32 0.0, %v1193
      %1195 = vdwg.mxu0
      %1198 = vrot.lane.b32.xlu0 %v1034, 8
      %v1199 = vpop.permute.xlu0 %1198
      %1200 = vrot.lane.b32.xlu0 %v1036, 8
      %v1201 = vpop.permute.xlu0 %1200
      %1206 = vrot.lane.b32.xlu0 %v1113, 16
      %v1207 = vpop.permute.xlu0 %1206
      %1208 = vrot.lane.b32.xlu0 %v1115, 16
      %v1209 = vpop.permute.xlu0 %1208
      %1214 = vrot.lane.b32.xlu0 %v1192, 24
      %v1215 = vpop.permute.xlu0 %1214
      %1216 = vrot.lane.b32.xlu0 %v1194, 24
      %v1217 = vpop.permute.xlu0 %1216
      %v1220 = vsel %vm881, %v955, %v1199
      %v1221 = vsel %vm881, %v957, %v1201
      %vm1222 = vcmask 130048
      %v1223 = vsel %vm1222, %v1220, %v1207
      %v1224 = vsel %vm1222, %v1221, %v1209
      %vm1225 = vcmask 195584
      %v1226 = vsel %vm1225, %v1223, %v1215
      %v1227 = vsel %vm1225, %v1224, %v1217
      %v1228 = vpack.c.bf16 %v1227, %v1226
      %v1230 = vperm.slane %v862, 0
      %v1236 = vunpack.c.l.b16 %v858
      %v1237 = vunpack.c.l.b16 %v859
      %v1238 = vunpack.c.l.b16 %v860
      %v1239 = vunpack.c.l.b16 %v861
      %v1240 = vpack.c.b16 %v1237, %v1236
      %v1241 = vpack.c.b16 %v1239, %v1238
      %v1245 = vsel %vm712, %v1228, 0
      %1247 = vmatpush.bf16.msra.mxu0 0
      %1248 = vmatpush.bf16.msra.mxu0 0
      %1249 = vmatpush.bf16.msra.mxu0 0
      %1250 = vmatpush.bf16.msra.mxu0 0
      %1251 = vmatpush.bf16.msra.mxu0 0
      %1252 = vmatpush.bf16.msra.mxu0 0
      %1253 = vmatpush.bf16.msra.mxu0 %v1241
      %1254 = vmatpush.bf16.msra.mxu0 %v1240
      %1255 = vmatmul.bf16.gmra.mxu0 %v1245
      %v1256 = vpop.f32.mrf.mxu0
      %v1257 = vadd.f32 %v1230, %v1256
      %v1258 = vpop.f32.mrf.mxu0
      %v1259 = vadd.f32 %v1230, %v1258
      %1260 = vdwg.mxu0
      %v1261 = vadd.f32 %v705, %v1257
      %v1262 = vadd.f32 %v706, %v1259
      %v1263 = vld [vmem:[%s10] sm:$0x1]
      %v1264 = vld [vmem:[%s11] sm:$0x1]
      %v1265 = vsel %vm712, %v1261, 0.0
      %1266 = vadd.xlane.f32.xlu0 %v1265
      %v1267 = vpop.xlane.xlu0 %1266
      %v1268 = vsel %vm712, %v1262, 0.0
      %1269 = vadd.xlane.f32.xlu0 %v1268
      %v1270 = vpop.xlane.xlu0 %1269
      %v1271 = vmul.f32 %v1267, %v725
      %v1272 = vmul.f32 %v1270, %v725
      %v1273 = vsub.f32 %v1261, %v1271
      %v1274 = vsub.f32 %v1262, %v1272
      %v1275 = vmul.f32 %v1273, %v1273
      %v1276 = vmul.f32 %v1274, %v1274
      %v1277 = vsel %vm712, %v1275, 0.0
      %1278 = vadd.xlane.f32.xlu0 %v1277
      %v1279 = vpop.xlane.xlu0 %1278
      %v1280 = vsel %vm712, %v1276, 0.0
      %1281 = vadd.xlane.f32.xlu0 %v1280
      %v1282 = vpop.xlane.xlu0 %1281
      %v1283 = vmul.f32 %v1279, %v725
      %v1284 = vmul.f32 %v1282, %v725
      %v1285 = vadd.f32 %v1283, 1e-05
      %v1286 = vadd.f32 %v1284, 1e-05
      %v1287 = vrsqrt.pop %v1285
      %v1288 = vmul.f32 %v1287, %v1285
      %v1289 = vmul.f32 %v1288, %v1287
      %v1290 = vmul.f32 0.5, %v1289
      %v1291 = vsub.f32 1.5, %v1290
      %v1292 = vmul.f32 %v1287, %v1291
      %vm1293 = vweird.f32 %v1285
      %vm1294 = vweird.f32 %v1287
      %vm1295 = vmor %vm1293, %vm1294
      %v1296 = vsel %vm1295, %v1287, %v1292
      %v1297 = vrsqrt.pop %v1286
      %v1298 = vmul.f32 %v1297, %v1286
      %v1299 = vmul.f32 %v1298, %v1297
      %v1300 = vmul.f32 0.5, %v1299
      %v1301 = vsub.f32 1.5, %v1300
      %v1302 = vmul.f32 %v1297, %v1301
      %vm1303 = vweird.f32 %v1286
      %vm1304 = vweird.f32 %v1297
      %vm1305 = vmor %vm1303, %vm1304
      %v1306 = vsel %vm1305, %v1297, %v1302
      %v1307 = vmul.f32 %v1273, %v1296
      %v1308 = vmul.f32 %v1274, %v1306
      %v1310 = vperm.slane %v1263, 0
      %v1312 = vmul.f32 %v1307, %v1310
      %v1313 = vmul.f32 %v1308, %v1310
      %v1315 = vperm.slane %v1264, 0
      %v1317 = vadd.f32 %v1312, %v1315
      %v1318 = vadd.f32 %v1313, %v1315
      %v1319 = vpack.c.bf16 %v1318, %v1317
      %v1320 = vld [vmem:[%s12] sm:$0xf]
      %v1321 = vld [vmem:[%s12 + $0x4] sm:$0xf]
      %v1322 = vld [vmem:[%s12 + $0x8] sm:$0xf]
      %v1323 = vld [vmem:[%s12 + $0xc] sm:$0xf]
      %v1324 = vld [vmem:[%s13] sm:$0x1]
      %v1326 = vperm.slane %v1324, 0
      %v1332 = vunpack.c.l.b16 %v1320
      %v1333 = vunpack.c.l.b16 %v1321
      %v1334 = vunpack.c.l.b16 %v1322
      %v1335 = vunpack.c.l.b16 %v1323
      %v1336 = vpack.c.b16 %v1333, %v1332
      %v1337 = vpack.c.b16 %v1335, %v1334
      %v1341 = vsel %vm712, %v1319, 0
      %1343 = vmatpush.bf16.msra.mxu0 0
      %1344 = vmatpush.bf16.msra.mxu0 0
      %1345 = vmatpush.bf16.msra.mxu0 0
      %1346 = vmatpush.bf16.msra.mxu0 0
      %1347 = vmatpush.bf16.msra.mxu0 0
      %1348 = vmatpush.bf16.msra.mxu0 0
      %1349 = vmatpush.bf16.msra.mxu0 %v1337
      %1350 = vmatpush.bf16.msra.mxu0 %v1336
      %1351 = vmatmul.bf16.gmra.mxu0 %v1341
      %v1352 = vpop.f32.mrf.mxu0
      %v1353 = vadd.f32 %v1326, %v1352
      %v1354 = vpop.f32.mrf.mxu0
      %v1355 = vadd.f32 %v1326, %v1354
      %1356 = vdwg.mxu0
      %v1357 = vld [vmem:[%s14] sm:$0xf]
      %v1358 = vld [vmem:[%s14 + $0x4] sm:$0xf]
      %v1359 = vld [vmem:[%s14 + $0x8] sm:$0xf]
      %v1360 = vld [vmem:[%s14 + $0xc] sm:$0xf]
      %v1361 = vld [vmem:[%s15] sm:$0x1]
      %v1362 = vpack.c.bf16 %v1353, %v1353
      %v1363 = vpack.c.bf16 %v1355, %v1355
      %v1366 = vunpack.c.l.b16 %v1362
      %v1367 = vunpack.c.l.b16 %v1363
      %v1368 = vpack.c.b16 %v1367, %v1366
      %1369 = vrot.lane.b32.xlu0 %v1368, 96
      %v1370 = vpop.permute.xlu0 %1369
      %v1372 = vsel %vm881, %v1368, 0
      %v1375 = vsel %vm881, %v1370, 0
      %1377 = vmatpush.bf16.xpose.msra.mxu0 0
      %1378 = vmatpush.bf16.xpose.msra.mxu0 0
      %1379 = vmatpush.bf16.xpose.msra.mxu0 0
      %1380 = vmatpush.bf16.xpose.msra.mxu0 0
      %1381 = vmatpush.bf16.xpose.msra.mxu0 0
      %1382 = vmatpush.bf16.xpose.msra.mxu0 0
      %1383 = vmatpush.bf16.xpose.msra.mxu0 0
      %1384 = vmatpush.bf16.xpose.msra.mxu0 %v1375
      %1385 = vmatmul.bf16.gmra.mxu0 %v1372
      %v1386 = vpop.f32.mrf.mxu0
      %v1387 = vadd.f32 0.0, %v1386
      %v1388 = vpop.f32.mrf.mxu0
      %v1389 = vadd.f32 0.0, %v1388
      %1390 = vdwg.mxu0
      %v1391 = vmul.f32 %v1387, 0.35355338
      %v1392 = vmul.f32 %v1389, 0.35355338
      %v1393 = vsel %vm1222, %v1391, -inf
      %1394 = vmax.xlane.f32.xlu0 %v1393
      %v1395 = vpop.xlane.xlu0 %1394
      %v1396 = vsel %vm1222, %v1392, -inf
      %1397 = vmax.xlane.f32.xlu0 %v1396
      %v1398 = vpop.xlane.xlu0 %1397
      %v1399 = vsub.f32 %v1391, %v1395
      %v1400 = vsub.f32 %v1392, %v1398
      %v1401 = vmul.f32 %v1399, 1.442695
      %v1402 = vpow.pop %v1401
      %v1403 = vmul.f32 %v1400, 1.442695
      %v1404 = vpow.pop %v1403
      %v1405 = vsel %vm1222, %v1402, 0.0
      %1406 = vadd.xlane.f32.xlu0 %v1405
      %v1407 = vpop.xlane.xlu0 %1406
      %v1408 = vsel %vm1222, %v1404, 0.0
      %1409 = vadd.xlane.f32.xlu0 %v1408
      %v1410 = vpop.xlane.xlu0 %1409
      %v1411 = vrcp.pop %v1407
      %v1412 = vrcp.pop %v1410
      %v1413 = vmul.f32 %v1402, %v1411
      %v1414 = vmul.f32 %v1404, %v1412
      %v1415 = vpack.c.bf16 %v1414, %v1413
      %1416 = vrot.lane.b32.xlu0 %v1368, 64
      %v1417 = vpop.permute.xlu0 %1416
      %v1420 = vsel %vm1222, %v1415, 0
      %1422 = vmatpush.bf16.msra.mxu0 0
      %1423 = vmatpush.bf16.msra.mxu0 0
      %1424 = vmatpush.bf16.msra.mxu0 0
      %1425 = vmatpush.bf16.msra.mxu0 0
      %1426 = vmatpush.bf16.msra.mxu0 0
      %1427 = vmatpush.bf16.msra.mxu0 0
      %1428 = vmatpush.bf16.msra.mxu0 0
      %1429 = vmatpush.bf16.msra.mxu0 %v1417
      %1430 = vmatmul.bf16.gmra.mxu0 %v1420
      %v1431 = vpop.f32.mrf.mxu0
      %v1432 = vadd.f32 0.0, %v1431
      %v1433 = vpop.f32.mrf.mxu0
      %v1434 = vadd.f32 0.0, %v1433
      %1435 = vdwg.mxu0
      %1436 = vrot.lane.b32.xlu0 %v1368, 120
      %v1437 = vpop.permute.xlu0 %1436
      %1438 = vrot.lane.b32.xlu0 %v1368, 88
      %v1439 = vpop.permute.xlu0 %1438
      %v1441 = vsel %vm881, %v1437, 0
      %v1444 = vsel %vm881, %v1439, 0
      %1446 = vmatpush.bf16.xpose.msra.mxu0 0
      %1447 = vmatpush.bf16.xpose.msra.mxu0 0
      %1448 = vmatpush.bf16.xpose.msra.mxu0 0
      %1449 = vmatpush.bf16.xpose.msra.mxu0 0
      %1450 = vmatpush.bf16.xpose.msra.mxu0 0
      %1451 = vmatpush.bf16.xpose.msra.mxu0 0
      %1452 = vmatpush.bf16.xpose.msra.mxu0 0
      %1453 = vmatpush.bf16.xpose.msra.mxu0 %v1444
      %1454 = vmatmul.bf16.gmra.mxu0 %v1441
      %v1455 = vpop.f32.mrf.mxu0
      %v1456 = vadd.f32 0.0, %v1455
      %v1457 = vpop.f32.mrf.mxu0
      %v1458 = vadd.f32 0.0, %v1457
      %1459 = vdwg.mxu0
      %v1460 = vmul.f32 %v1456, 0.35355338
      %v1461 = vmul.f32 %v1458, 0.35355338
      %v1462 = vsel %vm1222, %v1460, -inf
      %1463 = vmax.xlane.f32.xlu0 %v1462
      %v1464 = vpop.xlane.xlu0 %1463
      %v1465 = vsel %vm1222, %v1461, -inf
      %1466 = vmax.xlane.f32.xlu0 %v1465
      %v1467 = vpop.xlane.xlu0 %1466
      %v1468 = vsub.f32 %v1460, %v1464
      %v1469 = vsub.f32 %v1461, %v1467
      %v1470 = vmul.f32 %v1468, 1.442695
      %v1471 = vpow.pop %v1470
      %v1472 = vmul.f32 %v1469, 1.442695
      %v1473 = vpow.pop %v1472
      %v1474 = vsel %vm1222, %v1471, 0.0
      %1475 = vadd.xlane.f32.xlu0 %v1474
      %v1476 = vpop.xlane.xlu0 %1475
      %v1477 = vsel %vm1222, %v1473, 0.0
      %1478 = vadd.xlane.f32.xlu0 %v1477
      %v1479 = vpop.xlane.xlu0 %1478
      %v1480 = vrcp.pop %v1476
      %v1481 = vrcp.pop %v1479
      %v1482 = vmul.f32 %v1471, %v1480
      %v1483 = vmul.f32 %v1473, %v1481
      %v1484 = vpack.c.bf16 %v1483, %v1482
      %1485 = vrot.lane.b32.xlu0 %v1368, 56
      %v1486 = vpop.permute.xlu0 %1485
      %v1489 = vsel %vm1222, %v1484, 0
      %1491 = vmatpush.bf16.msra.mxu0 0
      %1492 = vmatpush.bf16.msra.mxu0 0
      %1493 = vmatpush.bf16.msra.mxu0 0
      %1494 = vmatpush.bf16.msra.mxu0 0
      %1495 = vmatpush.bf16.msra.mxu0 0
      %1496 = vmatpush.bf16.msra.mxu0 0
      %1497 = vmatpush.bf16.msra.mxu0 0
      %1498 = vmatpush.bf16.msra.mxu0 %v1486
      %1499 = vmatmul.bf16.gmra.mxu0 %v1489
      %v1500 = vpop.f32.mrf.mxu0
      %v1501 = vadd.f32 0.0, %v1500
      %v1502 = vpop.f32.mrf.mxu0
      %v1503 = vadd.f32 0.0, %v1502
      %1504 = vdwg.mxu0
      %1505 = vrot.lane.b32.xlu0 %v1368, 112
      %v1506 = vpop.permute.xlu0 %1505
      %1507 = vrot.lane.b32.xlu0 %v1368, 80
      %v1508 = vpop.permute.xlu0 %1507
      %v1510 = vsel %vm881, %v1506, 0
      %v1513 = vsel %vm881, %v1508, 0
      %1515 = vmatpush.bf16.xpose.msra.mxu0 0
      %1516 = vmatpush.bf16.xpose.msra.mxu0 0
      %1517 = vmatpush.bf16.xpose.msra.mxu0 0
      %1518 = vmatpush.bf16.xpose.msra.mxu0 0
      %1519 = vmatpush.bf16.xpose.msra.mxu0 0
      %1520 = vmatpush.bf16.xpose.msra.mxu0 0
      %1521 = vmatpush.bf16.xpose.msra.mxu0 0
      %1522 = vmatpush.bf16.xpose.msra.mxu0 %v1513
      %1523 = vmatmul.bf16.gmra.mxu0 %v1510
      %v1524 = vpop.f32.mrf.mxu0
      %v1525 = vadd.f32 0.0, %v1524
      %v1526 = vpop.f32.mrf.mxu0
      %v1527 = vadd.f32 0.0, %v1526
      %1528 = vdwg.mxu0
      %v1529 = vmul.f32 %v1525, 0.35355338
      %v1530 = vmul.f32 %v1527, 0.35355338
      %v1531 = vsel %vm1222, %v1529, -inf
      %1532 = vmax.xlane.f32.xlu0 %v1531
      %v1533 = vpop.xlane.xlu0 %1532
      %v1534 = vsel %vm1222, %v1530, -inf
      %1535 = vmax.xlane.f32.xlu0 %v1534
      %v1536 = vpop.xlane.xlu0 %1535
      %v1537 = vsub.f32 %v1529, %v1533
      %v1538 = vsub.f32 %v1530, %v1536
      %v1539 = vmul.f32 %v1537, 1.442695
      %v1540 = vpow.pop %v1539
      %v1541 = vmul.f32 %v1538, 1.442695
      %v1542 = vpow.pop %v1541
      %v1543 = vsel %vm1222, %v1540, 0.0
      %1544 = vadd.xlane.f32.xlu0 %v1543
      %v1545 = vpop.xlane.xlu0 %1544
      %v1546 = vsel %vm1222, %v1542, 0.0
      %1547 = vadd.xlane.f32.xlu0 %v1546
      %v1548 = vpop.xlane.xlu0 %1547
      %v1549 = vrcp.pop %v1545
      %v1550 = vrcp.pop %v1548
      %v1551 = vmul.f32 %v1540, %v1549
      %v1552 = vmul.f32 %v1542, %v1550
      %v1553 = vpack.c.bf16 %v1552, %v1551
      %1554 = vrot.lane.b32.xlu0 %v1368, 48
      %v1555 = vpop.permute.xlu0 %1554
      %v1558 = vsel %vm1222, %v1553, 0
      %1560 = vmatpush.bf16.msra.mxu0 0
      %1561 = vmatpush.bf16.msra.mxu0 0
      %1562 = vmatpush.bf16.msra.mxu0 0
      %1563 = vmatpush.bf16.msra.mxu0 0
      %1564 = vmatpush.bf16.msra.mxu0 0
      %1565 = vmatpush.bf16.msra.mxu0 0
      %1566 = vmatpush.bf16.msra.mxu0 0
      %1567 = vmatpush.bf16.msra.mxu0 %v1555
      %1568 = vmatmul.bf16.gmra.mxu0 %v1558
      %v1569 = vpop.f32.mrf.mxu0
      %v1570 = vadd.f32 0.0, %v1569
      %v1571 = vpop.f32.mrf.mxu0
      %v1572 = vadd.f32 0.0, %v1571
      %1573 = vdwg.mxu0
      %1574 = vrot.lane.b32.xlu0 %v1368, 104
      %v1575 = vpop.permute.xlu0 %1574
      %1576 = vrot.lane.b32.xlu0 %v1368, 72
      %v1577 = vpop.permute.xlu0 %1576
      %v1579 = vsel %vm881, %v1575, 0
      %v1582 = vsel %vm881, %v1577, 0
      %1584 = vmatpush.bf16.xpose.msra.mxu0 0
      %1585 = vmatpush.bf16.xpose.msra.mxu0 0
      %1586 = vmatpush.bf16.xpose.msra.mxu0 0
      %1587 = vmatpush.bf16.xpose.msra.mxu0 0
      %1588 = vmatpush.bf16.xpose.msra.mxu0 0
      %1589 = vmatpush.bf16.xpose.msra.mxu0 0
      %1590 = vmatpush.bf16.xpose.msra.mxu0 0
      %1591 = vmatpush.bf16.xpose.msra.mxu0 %v1582
      %1592 = vmatmul.bf16.gmra.mxu0 %v1579
      %v1593 = vpop.f32.mrf.mxu0
      %v1594 = vadd.f32 0.0, %v1593
      %v1595 = vpop.f32.mrf.mxu0
      %v1596 = vadd.f32 0.0, %v1595
      %1597 = vdwg.mxu0
      %v1598 = vmul.f32 %v1594, 0.35355338
      %v1599 = vmul.f32 %v1596, 0.35355338
      %v1600 = vsel %vm1222, %v1598, -inf
      %1601 = vmax.xlane.f32.xlu0 %v1600
      %v1602 = vpop.xlane.xlu0 %1601
      %v1603 = vsel %vm1222, %v1599, -inf
      %1604 = vmax.xlane.f32.xlu0 %v1603
      %v1605 = vpop.xlane.xlu0 %1604
      %v1606 = vsub.f32 %v1598, %v1602
      %v1607 = vsub.f32 %v1599, %v1605
      %v1608 = vmul.f32 %v1606, 1.442695
      %v1609 = vpow.pop %v1608
      %v1610 = vmul.f32 %v1607, 1.442695
      %v1611 = vpow.pop %v1610
      %v1612 = vsel %vm1222, %v1609, 0.0
      %1613 = vadd.xlane.f32.xlu0 %v1612
      %v1614 = vpop.xlane.xlu0 %1613
      %v1615 = vsel %vm1222, %v1611, 0.0
      %1616 = vadd.xlane.f32.xlu0 %v1615
      %v1617 = vpop.xlane.xlu0 %1616
      %v1618 = vrcp.pop %v1614
      %v1619 = vrcp.pop %v1617
      %v1620 = vmul.f32 %v1609, %v1618
      %v1621 = vmul.f32 %v1611, %v1619
      %v1622 = vpack.c.bf16 %v1621, %v1620
      %1623 = vrot.lane.b32.xlu0 %v1368, 40
      %v1624 = vpop.permute.xlu0 %1623
      %v1627 = vsel %vm1222, %v1622, 0
      %1629 = vmatpush.bf16.msra.mxu0 0
      %1630 = vmatpush.bf16.msra.mxu0 0
      %1631 = vmatpush.bf16.msra.mxu0 0
      %1632 = vmatpush.bf16.msra.mxu0 0
      %1633 = vmatpush.bf16.msra.mxu0 0
      %1634 = vmatpush.bf16.msra.mxu0 0
      %1635 = vmatpush.bf16.msra.mxu0 0
      %1636 = vmatpush.bf16.msra.mxu0 %v1624
      %1637 = vmatmul.bf16.gmra.mxu0 %v1627
      %v1638 = vpop.f32.mrf.mxu0
      %v1639 = vadd.f32 0.0, %v1638
      %v1640 = vpop.f32.mrf.mxu0
      %v1641 = vadd.f32 0.0, %v1640
      %1642 = vdwg.mxu0
      %1645 = vrot.lane.b32.xlu0 %v1501, 8
      %v1646 = vpop.permute.xlu0 %1645
      %1647 = vrot.lane.b32.xlu0 %v1503, 8
      %v1648 = vpop.permute.xlu0 %1647
      %1653 = vrot.lane.b32.xlu0 %v1570, 16
      %v1654 = vpop.permute.xlu0 %1653
      %1655 = vrot.lane.b32.xlu0 %v1572, 16
      %v1656 = vpop.permute.xlu0 %1655
      %1661 = vrot.lane.b32.xlu0 %v1639, 24
      %v1662 = vpop.permute.xlu0 %1661
      %1663 = vrot.lane.b32.xlu0 %v1641, 24
      %v1664 = vpop.permute.xlu0 %1663
      %v1667 = vsel %vm881, %v1432, %v1646
      %v1668 = vsel %vm881, %v1434, %v1648
      %v1669 = vsel %vm1222, %v1667, %v1654
      %v1670 = vsel %vm1222, %v1668, %v1656
      %v1671 = vsel %vm1225, %v1669, %v1662
      %v1672 = vsel %vm1225, %v1670, %v1664
      %v1673 = vpack.c.bf16 %v1672, %v1671
      %v1675 = vperm.slane %v1361, 0
      %v1681 = vunpack.c.l.b16 %v1357
      %v1682 = vunpack.c.l.b16 %v1358
      %v1683 = vunpack.c.l.b16 %v1359
      %v1684 = vunpack.c.l.b16 %v1360
      %v1685 = vpack.c.b16 %v1682, %v1681
      %v1686 = vpack.c.b16 %v1684, %v1683
      %v1690 = vsel %vm712, %v1673, 0
      %1692 = vmatpush.bf16.msra.mxu0 0
      %1693 = vmatpush.bf16.msra.mxu0 0
      %1694 = vmatpush.bf16.msra.mxu0 0
      %1695 = vmatpush.bf16.msra.mxu0 0
      %1696 = vmatpush.bf16.msra.mxu0 0
      %1697 = vmatpush.bf16.msra.mxu0 0
      %1698 = vmatpush.bf16.msra.mxu0 %v1686
      %1699 = vmatpush.bf16.msra.mxu0 %v1685
      %1700 = vmatmul.bf16.gmra.mxu0 %v1690
      %v1701 = vpop.f32.mrf.mxu0
      %v1702 = vadd.f32 %v1675, %v1701
      %v1703 = vpop.f32.mrf.mxu0
      %v1704 = vadd.f32 %v1675, %v1703
      %1705 = vdwg.mxu0
      %v1706 = vadd.f32 %v1261, %v1702
      %v1707 = vadd.f32 %v1262, %v1704
      %v1708 = vld [vmem:[%s16] sm:$0x1]
      %v1709 = vld [vmem:[%s17] sm:$0x1]
      %v1710 = vsel %vm712, %v1706, 0.0
      %1711 = vadd.xlane.f32.xlu0 %v1710
      %v1712 = vpop.xlane.xlu0 %1711
      %v1713 = vsel %vm712, %v1707, 0.0
      %1714 = vadd.xlane.f32.xlu0 %v1713
      %v1715 = vpop.xlane.xlu0 %1714
      %v1716 = vmul.f32 %v1712, %v725
      %v1717 = vmul.f32 %v1715, %v725
      %v1718 = vsub.f32 %v1706, %v1716
      %v1719 = vsub.f32 %v1707, %v1717
      %v1720 = vmul.f32 %v1718, %v1718
      %v1721 = vmul.f32 %v1719, %v1719
      %v1722 = vsel %vm712, %v1720, 0.0
      %1723 = vadd.xlane.f32.xlu0 %v1722
      %v1724 = vpop.xlane.xlu0 %1723
      %v1725 = vsel %vm712, %v1721, 0.0
      %1726 = vadd.xlane.f32.xlu0 %v1725
      %v1727 = vpop.xlane.xlu0 %1726
      %v1728 = vmul.f32 %v1724, %v725
      %v1729 = vmul.f32 %v1727, %v725
      %v1730 = vadd.f32 %v1728, 1e-05
      %v1731 = vadd.f32 %v1729, 1e-05
      %v1732 = vrsqrt.pop %v1730
      %v1733 = vmul.f32 %v1732, %v1730
      %v1734 = vmul.f32 %v1733, %v1732
      %v1735 = vmul.f32 0.5, %v1734
      %v1736 = vsub.f32 1.5, %v1735
      %v1737 = vmul.f32 %v1732, %v1736
      %vm1738 = vweird.f32 %v1730
      %vm1739 = vweird.f32 %v1732
      %vm1740 = vmor %vm1738, %vm1739
      %v1741 = vsel %vm1740, %v1732, %v1737
      %v1742 = vrsqrt.pop %v1731
      %v1743 = vmul.f32 %v1742, %v1731
      %v1744 = vmul.f32 %v1743, %v1742
      %v1745 = vmul.f32 0.5, %v1744
      %v1746 = vsub.f32 1.5, %v1745
      %v1747 = vmul.f32 %v1742, %v1746
      %vm1748 = vweird.f32 %v1731
      %vm1749 = vweird.f32 %v1742
      %vm1750 = vmor %vm1748, %vm1749
      %v1751 = vsel %vm1750, %v1742, %v1747
      %v1752 = vmul.f32 %v1718, %v1741
      %v1753 = vmul.f32 %v1719, %v1751
      %v1755 = vperm.slane %v1708, 0
      %v1757 = vmul.f32 %v1752, %v1755
      %v1758 = vmul.f32 %v1753, %v1755
      %v1760 = vperm.slane %v1709, 0
      %v1762 = vadd.f32 %v1757, %v1760
      %v1763 = vadd.f32 %v1758, %v1760
      %v1764 = vpack.c.bf16 %v1763, %v1762
      %v1765 = vld [vmem:[%s18] sm:$0xf]
      %v1766 = vld [vmem:[%s18 + $0x4] sm:$0xf]
      %v1767 = vld [vmem:[%s18 + $0x8] sm:$0xf]
      %v1768 = vld [vmem:[%s18 + $0xc] sm:$0xf]
      %v1769 = vld [vmem:[%s19] sm:$0x1]
      %v1771 = vperm.slane %v1769, 0
      %v1777 = vunpack.c.l.b16 %v1765
      %v1778 = vunpack.c.l.b16 %v1766
      %v1779 = vunpack.c.l.b16 %v1767
      %v1780 = vunpack.c.l.b16 %v1768
      %v1781 = vpack.c.b16 %v1778, %v1777
      %v1782 = vpack.c.b16 %v1780, %v1779
      %v1786 = vsel %vm712, %v1764, 0
      %1788 = vmatpush.bf16.msra.mxu0 0
      %1789 = vmatpush.bf16.msra.mxu0 0
      %1790 = vmatpush.bf16.msra.mxu0 0
      %1791 = vmatpush.bf16.msra.mxu0 0
      %1792 = vmatpush.bf16.msra.mxu0 0
      %1793 = vmatpush.bf16.msra.mxu0 0
      %1794 = vmatpush.bf16.msra.mxu0 %v1782
      %1795 = vmatpush.bf16.msra.mxu0 %v1781
      %1796 = vmatmul.bf16.gmra.mxu0 %v1786
      %v1797 = vpop.f32.mrf.mxu0
      %v1798 = vadd.f32 %v1771, %v1797
      %v1799 = vpop.f32.mrf.mxu0
      %v1800 = vadd.f32 %v1771, %v1799
      %1801 = vdwg.mxu0
      %v1802 = vmul.f32 %v1798, 0.5
      %v1803 = vmul.f32 %v1800, 0.5
      %v1804 = vmul.f32 %v1798, 0.044715
      %v1805 = vmul.f32 %v1800, 0.044715
      %v1806 = vmul.f32 %v1804, %v1798
      %v1807 = vmul.f32 %v1805, %v1800
      %v1808 = vmul.f32 %v1806, %v1798
      %v1809 = vmul.f32 %v1807, %v1800
      %v1810 = vadd.f32 %v1798, %v1808
      %v1811 = vadd.f32 %v1800, %v1809
      %v1812 = vmul.f32 %v1810, 0.7978846
      %v1813 = vmul.f32 %v1811, 0.7978846
      %v1814 = vtanh.pop %v1812
      %v1815 = vtanh.pop %v1813
      %v1816 = vadd.f32 %v1814, 1.0
      %v1817 = vadd.f32 %v1815, 1.0
      %v1818 = vmul.f32 %v1802, %v1816
      %v1819 = vmul.f32 %v1803, %v1817
      %v1820 = vpack.c.bf16 %v1819, %v1818
      %v1821 = vld [vmem:[%s20] sm:$0xf]
      %v1822 = vld [vmem:[%s20 + $0x4] sm:$0xf]
      %v1823 = vld [vmem:[%s20 + $0x8] sm:$0xf]
      %v1824 = vld [vmem:[%s20 + $0xc] sm:$0xf]
      %v1825 = vld [vmem:[%s20 + $0x10] sm:$0xf]
      %v1826 = vld [vmem:[%s20 + $0x14] sm:$0xf]
      %v1827 = vld [vmem:[%s20 + $0x18] sm:$0xf]
      %v1828 = vld [vmem:[%s20 + $0x1c] sm:$0xf]
      %v1829 = vld [vmem:[%s20 + $0x20] sm:$0xf]
      %v1830 = vld [vmem:[%s20 + $0x24] sm:$0xf]
      %v1831 = vld [vmem:[%s20 + $0x28] sm:$0xf]
      %v1832 = vld [vmem:[%s20 + $0x2c] sm:$0xf]
      %v1833 = vld [vmem:[%s20 + $0x30] sm:$0xf]
      %v1834 = vld [vmem:[%s20 + $0x34] sm:$0xf]
      %v1835 = vld [vmem:[%s20 + $0x38] sm:$0xf]
      %v1836 = vld [vmem:[%s20 + $0x3c] sm:$0xf]
      %v1837 = vld [vmem:[%s21] sm:$0x1]
      %v1839 = vperm.slane %v1837, 0
      %v1857 = vunpack.c.l.b16 %v1821
      %v1858 = vunpack.c.l.b16 %v1822
      %v1859 = vunpack.c.l.b16 %v1823
      %v1860 = vunpack.c.l.b16 %v1824
      %v1861 = vunpack.c.l.b16 %v1825
      %v1862 = vunpack.c.l.b16 %v1826
      %v1863 = vunpack.c.l.b16 %v1827
      %v1864 = vunpack.c.l.b16 %v1828
      %v1865 = vunpack.c.l.b16 %v1829
      %v1866 = vunpack.c.l.b16 %v1830
      %v1867 = vunpack.c.l.b16 %v1831
      %v1868 = vunpack.c.l.b16 %v1832
      %v1869 = vunpack.c.l.b16 %v1833
      %v1870 = vunpack.c.l.b16 %v1834
      %v1871 = vunpack.c.l.b16 %v1835
      %v1872 = vunpack.c.l.b16 %v1836
      %v1873 = vpack.c.b16 %v1858, %v1857
      %v1874 = vpack.c.b16 %v1860, %v1859
      %v1875 = vpack.c.b16 %v1862, %v1861
      %v1876 = vpack.c.b16 %v1864, %v1863
      %v1877 = vpack.c.b16 %v1866, %v1865
      %v1878 = vpack.c.b16 %v1868, %v1867
      %v1879 = vpack.c.b16 %v1870, %v1869
      %v1880 = vpack.c.b16 %v1872, %v1871
      %1889 = vmatpush.bf16.msra.mxu0 %v1880
      %1890 = vmatpush.bf16.msra.mxu0 %v1879
      %1891 = vmatpush.bf16.msra.mxu0 %v1878
      %1892 = vmatpush.bf16.msra.mxu0 %v1877
      %1893 = vmatpush.bf16.msra.mxu0 %v1876
      %1894 = vmatpush.bf16.msra.mxu0 %v1875
      %1895 = vmatpush.bf16.msra.mxu0 %v1874
      %1896 = vmatpush.bf16.msra.mxu0 %v1873
      %1897 = vmatmul.bf16.gmra.mxu0 %v1820
      %v1898 = vpop.f32.mrf.mxu0
      %v1899 = vadd.f32 %v1839, %v1898
      %v1900 = vpop.f32.mrf.mxu0
      %v1901 = vadd.f32 %v1839, %v1900
      %1902 = vdwg.mxu0
      %v1903 = vadd.f32 %v1706, %v1899
      %v1904 = vadd.f32 %v1707, %v1901
      %1905 = vst.msk [vmem:[%s703] sm:$0xff] %vm712, %v1903
      %1906 = vst.msk [vmem:[%s703 + $0x8] sm:$0xff] %vm712, %v1904
      %p1907 = scmp.lt.s32.totalorder %s33, 1
      %s1908 = scalar_select %p1907, %s33, 1
      %s1909 = smul.addr %s1908, 2
      %s1910 = smul.addr %s1909, 8
      %s1911 = scalar_lea.vmem %s22, %s1910
      // Predicated region
      $region109: #{_lambda_.9} parent=107 // pred_check
        %p1912 = pneg %p523
      $region110: #{_lambda_.9} parent=107 // pred_check_branch
        %1914 = sbr.rel (%p1912) target = $region112
      $region111: #{_lambda_.9} parent=107 // pred_region
        _
      $region112: #{_lambda_.9} parent=107 // pred_fallthru
        _
    $region108: #{_lambda_.9} parent=5 // pred_fallthru
      _
    %p1915 = scmp.le.s32.totalorder 2, %s28
    // Predicated region
    $region113: #{_lambda_.9} parent=5 // pred_check
      %p1916 = pneg %p1915
    $region114: #{_lambda_.9} parent=5 // pred_check_branch
      %1918 = sbr.rel (%p1916) target = $region116
    $region115: #{_lambda_.9} parent=5 // pred_region
      %s1919 = ssub.s32 %s28, 2
      // Predicated region
      $region117: #{_lambda_.9} parent=115 // pred_check
        %p1920 = pneg %p529
      $region118: #{_lambda_.9} parent=115 // pred_check_branch
        %1922 = sbr.rel (%p1920) target = $region120
      $region119: #{_lambda_.9} parent=115 // pred_region
        %p1923 = scmp.lt.s32.totalorder %s34, 1
        %s1924 = scalar_select %p1923, %s34, 1
        %s1925 = smul.addr %s1924, 2
        %s1926 = smul.addr %s1925, 8
        %s1927 = scalar_lea.vmem %s22, %s1926
      $region120: #{_lambda_.9} parent=115 // pred_fallthru
        _
    $region116: #{_lambda_.9} parent=5 // pred_fallthru
      _
  $region6: #{_lambda_.9} parent=0 // loop_footer
    %s32 = sadd.s32 1, %s28
  $region7: #{_lambda_.9} parent=0 // loop_footer_branch
    %27 = sbr.rel target = $region3
  $region8: #{_lambda_.9} parent=0 // loop_exit
    _

// kernel: _lambda_.11
$region0: #{_lambda_.11}
  #allocation0 [shape = 'u32[]', space=smem, size = 0x4, offset = 0x4, fixed_abs, tag = 'smem constant byte address 0x4 - core index']
  #allocation1 [shape = 'u32[72,128]{1,0:T(1,128)}', space=vmem, size = 0x9000, scoped, tag = 'internal scratch']
  %s0 = inlined_call_operand.vmem [shape: f32[2,8,4,4], index: 0, kind: input, shape index: {}]
  %s1 = inlined_call_operand.vmem [shape: f32[16,4], index: 1, kind: input, shape index: {}]
  %s2 = inlined_call_operand.vmem [shape: f32[4,16], index: 2, kind: input, shape index: {}]
  %s3 = inlined_call_operand.hbm [shape: f32[2,8,16,16], index: 3, kind: output, shape index: {}]
  %s4 = sld [smem:[#allocation0]]
  $region45: #{_lambda_.11} parent=0
    _
  %s6 = ssub.s32 1, %s4
  %s7 = scalar_select 0, %s6, %s4
  $region1: #{_lambda_.11} parent=0
    #allocation2 [shape = 'u8[131072]{0}', space=vmem, size = 0x20000, scoped, tag = 'output window, operand 0']
    #allocation3 [shape = 's32[2]{0}', space=sflag, size = 0x8, scoped, tag = 'scoped memory for _lambda_.11']
    %8 = vsyncpa [#allocation3], 0
    %s9 = scalar_lea.sflag [#allocation3], 1
    %10 = vsyncpa %s9, 0
    loop: start=0, step=1, limit=4
    $region2: #{_lambda_.11} parent=1 // loop_pre_header
      _
    $region3: #{_lambda_.11} parent=1 // loop_header
      %s12 = sphi 0, %s16
      %p13 = scmp.ge.s32.totalorder %s12, 4
      %s22 = sphi 0, %s24
      %s25 = sphi 0, %s22
      %s26 = sphi 0, %s25
      %s42 = sphi 0, %s26
      %s46 = sphi 0, %s46
      %s48 = sphi 0, %s46
      %s49 = sphi 0, %s48
      %s63 = sphi 0, %s49
      %s67 = sphi 0, %s67
      %s69 = sphi 0, %s67
      %s70 = sphi 0, %s69
      %s84 = sphi 0, %s70
      %s90 = sphi 0, %s92
      %s93 = sphi 0, %s90
      %s94 = sphi 0, %s93
      %s110 = sphi 0, %s94
    $region4: #{_lambda_.11} parent=1 // loop_header_branch
      %15 = sbr.rel (%p13) target = $region8
    $region5: #{_lambda_.11} parent=1 // loop_body
      %s17 = ssub.s32 %s12, 1
      %s18 = ssub.s32 %s12, 2
      %s19 = sadd.s32 %s12, 1
      %s20 = ssub.s32 %s12, %s19
      %p21 = scmp.eq.s32.totalorder %s20, 0
      %s23 = sadd.s32 %s22, 1
      %s24 = scalar_select %p21, %s22, %s23
      %p27 = pneg %p21
      %p28 = scmp.eq.s32.totalorder %s12, 1
      %p29 = por %p27, %p28
      %p30 = scmp.ne.s32.totalorder %s22, %s25
      %p31 = scmp.eq.s32.totalorder %s12, 0
      %p32 = por %p30, %p31
      %p33 = scmp.ne.s32.totalorder %s22, %s25
      %p34 = scmp.eq.s32.totalorder %s17, 1
      %p35 = por %p33, %p34
      %p36 = scmp.ne.s32.totalorder %s25, %s26
      %p37 = scmp.eq.s32.totalorder %s17, 0
      %p38 = por %p36, %p37
      %p39 = scmp.ne.s32.totalorder %s25, %s26
      %p40 = scmp.eq.s32.totalorder %s18, 1
      %p41 = por %p39, %p40
      %p43 = scmp.ne.s32.totalorder %s26, %s42
      %p44 = scmp.eq.s32.totalorder %s18, 0
      %p45 = por %p43, %p44
      %s47 = sadd.s32 %s46, 1
      %p50 = scmp.eq.s32.totalorder %s12, 1
      %p51 = scmp.ne.s32.totalorder %s46, %s48
      %p52 = scmp.eq.s32.totalorder %s12, 0
      %p53 = por %p51, %p52
      %p54 = scmp.ne.s32.totalorder %s46, %s48
      %p55 = scmp.eq.s32.totalorder %s17, 1
      %p56 = por %p54, %p55
      %p57 = scmp.ne.s32.totalorder %s48, %s49
      %p58 = scmp.eq.s32.totalorder %s17, 0
      %p59 = por %p57, %p58
      %p60 = scmp.ne.s32.totalorder %s48, %s49
      %p61 = scmp.eq.s32.totalorder %s18, 1
      %p62 = por %p60, %p61
      %p64 = scmp.ne.s32.totalorder %s49, %s63
      %p65 = scmp.eq.s32.totalorder %s18, 0
      %p66 = por %p64, %p65
      %s68 = sadd.s32 %s67, 1
      %p71 = scmp.eq.s32.totalorder %s12, 1
      %p72 = scmp.ne.s32.totalorder %s67, %s69
      %p73 = scmp.eq.s32.totalorder %s12, 0
      %p74 = por %p72, %p73
      %p75 = scmp.ne.s32.totalorder %s67, %s69
      %p76 = scmp.eq.s32.totalorder %s17, 1
      %p77 = por %p75, %p76
      %p78 = scmp.ne.s32.totalorder %s69, %s70
      %p79 = scmp.eq.s32.totalorder %s17, 0
      %p80 = por %p78, %p79
      %p81 = scmp.ne.s32.totalorder %s69, %s70
      %p82 = scmp.eq.s32.totalorder %s18, 1
      %p83 = por %p81, %p82
      %p85 = scmp.ne.s32.totalorder %s70, %s84
      %p86 = scmp.eq.s32.totalorder %s18, 0
      %p87 = por %p85, %p86
      %s88 = ssub.s32 %s12, %s19
      %p89 = scmp.eq.s32.totalorder %s88, 0
      %s91 = sadd.s32 %s90, 1
      %s92 = scalar_select %p89, %s90, %s91
      %p95 = pneg %p89
      %p96 = scmp.eq.s32.totalorder %s12, 1
      %p97 = por %p95, %p96
      %p98 = scmp.ne.s32.totalorder %s90, %s93
      %p99 = scmp.eq.s32.totalorder %s12, 0
      %p100 = por %p98, %p99
      %p101 = scmp.ne.s32.totalorder %s90, %s93
      %p102 = scmp.eq.s32.totalorder %s17, 1
      %p103 = por %p101, %p102
      %p104 = scmp.ne.s32.totalorder %s93, %s94
      %p105 = scmp.eq.s32.totalorder %s17, 0
      %p106 = por %p104, %p105
      %p107 = scmp.ne.s32.totalorder %s93, %s94
      %p108 = scmp.eq.s32.totalorder %s18, 1
      %p109 = por %p107, %p108
      %p111 = scmp.ne.s32.totalorder %s94, %s110
      %p112 = scmp.eq.s32.totalorder %s18, 0
      %p113 = por %p111, %p112
      %p114 = scmp.le.s32.totalorder 1, %s12
      %p115 = scmp.lt.s32.totalorder %s12, 3
      %p116 = pnand %p114, %p115
      %p117 = pneg %p116
      // Predicated region
      $region9: #{_lambda_.11} parent=5 // pred_check
        _
      $region10: #{_lambda_.11} parent=5 // pred_check_branch
        %119 = sbr.rel (%p116) target = $region12
      $region11: #{_lambda_.11} parent=5 // pred_region
        %s120 = ssub.s32 %s12, 1
        // Predicated region
        $region13: #{_lambda_.11} parent=11 // pred_check
          %p121 = pneg %p59
        $region14: #{_lambda_.11} parent=11 // pred_check_branch
          %123 = sbr.rel (%p121) target = $region16
        $region15: #{_lambda_.11} parent=11 // pred_region
          _
        $region16: #{_lambda_.11} parent=11 // pred_fallthru
          _
        // Predicated region
        $region17: #{_lambda_.11} parent=11 // pred_check
          %p124 = pneg %p80
        $region18: #{_lambda_.11} parent=11 // pred_check_branch
          %126 = sbr.rel (%p124) target = $region20
        $region19: #{_lambda_.11} parent=11 // pred_region
          _
        $region20: #{_lambda_.11} parent=11 // pred_fallthru
          _
      $region12: #{_lambda_.11} parent=5 // pred_fallthru
        _
      %p127 = scmp.lt.s32.totalorder %s12, 2
      // Predicated region
      $region21: #{_lambda_.11} parent=5 // pred_check
        %p128 = pneg %p127
      $region22: #{_lambda_.11} parent=5 // pred_check_branch
        %130 = sbr.rel (%p128) target = $region24
      $region23: #{_lambda_.11} parent=5 // pred_region
        // Predicated region
        $region25: #{_lambda_.11} parent=23 // pred_check
          %p131 = pneg %p32
        $region26: #{_lambda_.11} parent=23 // pred_check_branch
          %133 = sbr.rel (%p131) target = $region28
        $region27: #{_lambda_.11} parent=23 // pred_region
          %p134 = scmp.lt.s32.totalorder %s12, 1
          %s135 = scalar_select %p134, %s12, 1
          %s136 = smul.addr %s135, 8
          %s137 = smul.addr %s136, 4
          %s138 = scalar_lea.vmem %s0, %s137
        $region28: #{_lambda_.11} parent=23 // pred_fallthru
          _
      $region24: #{_lambda_.11} parent=5 // pred_fallthru
        _
      %p139 = scmp.le.s32.totalorder 1, %s12
      %p140 = scmp.lt.s32.totalorder %s12, 3
      %p141 = pnand %p139, %p140
      %p142 = pneg %p141
      // Predicated region
      $region29: #{_lambda_.11} parent=5 // pred_check
        _
      $region30: #{_lambda_.11} parent=5 // pred_check_branch
        %144 = sbr.rel (%p141) target = $region32
      $region31: #{_lambda_.11} parent=5 // pred_region
        %s145 = ssub.s32 %s12, 1
        %p146 = scmp.lt.s32.totalorder %s17, 1
        %s147 = scalar_select %p146, %s17, 1
        %s148 = smul.addr %s147, 8
        %s149 = smul.addr %s148, 4
        %s150 = scalar_lea.vmem %s0, %s149
        %p151 = pneg %p38
        %p152 = pneg %p35
        %p153 = pneg %p59
        %p154 = pneg %p56
        %p155 = pneg %p80
        %p156 = pneg %p77
        %p157 = pneg %p106
        %p158 = pneg %p103
        %s159 = sand.u32 %s93, 1
        %s160 = scalar_lea.sflag [#allocation3], %s159
        %s161 = sand.u32 %s93, 1
        %s162 = smul.addr %s161, 128
        %s163 = scalar_lea.vmem [#allocation2], %s162
        %p164 = scmp.lt.s32.totalorder %s17, 1
        %s165 = scalar_select %p164, %s17, 1
        %s166 = smul.addr %s165, 8
        %s167 = smul.addr %s166, 4
        %s168 = scalar_lea.vmem %s0, %s167
        %v169 = vld [vmem:[%s168] sm:$0xf]
        %v170 = vld [vmem:[%s168 + $0x4] sm:$0xf]
        %v171 = vld [vmem:[%s168 + $0x8] sm:$0xf]
        %v172 = vld [vmem:[%s168 + $0xc] sm:$0xf]
        %v173 = vld [vmem:[%s168 + $0x10] sm:$0xf]
        %v174 = vld [vmem:[%s168 + $0x14] sm:$0xf]
        %v175 = vld [vmem:[%s168 + $0x18] sm:$0xf]
        %v176 = vld [vmem:[%s168 + $0x1c] sm:$0xf]
        %v177 = vld [vmem:[%s1] sm:$0xff]
        %v178 = vld [vmem:[%s1 + $0x8] sm:$0xff]
        %vm179 = vcmask 31744
        %v181 = vsel %vm179, %v177, 0
        %v184 = vsel %vm179, %v178, 0
        %vm186 = vcmask 1043456
        %v188 = vsel %vm186, %v169, 0
        %190 = vmatpush.msra.mxu0 0.0
        %191 = vmatpush.msra.mxu0 0.0
        %192 = vmatpush.msra.mxu0 0.0
        %193 = vmatpush.msra.mxu0 0.0
        %194 = vmatpush.msra.mxu0 0.0
        %195 = vmatpush.msra.mxu0 0.0
        %196 = vmatpush.msra.mxu0 0.0
        %197 = vmatpush.msra.mxu0 0.0
        %198 = vmatpush.msra.mxu0 0.0
        %199 = vmatpush.msra.mxu0 0.0
        %200 = vmatpush.msra.mxu0 0.0
        %201 = vmatpush.msra.mxu0 0.0
        %202 = vmatpush.msra.mxu0 0.0
        %203 = vmatpush.msra.mxu0 0.0
        %204 = vmatpush.msra.mxu0 0.0
        %205 = vmatpush.msra.mxu0 %v188
        %206 = vmatmul.f32.gmra.mxu0 %v181
        %v207 = vpop.f32.mrf.mxu0
        %v208 = vadd.f32 0.0, %v207
        %209 = vmatmul.f32.gmra.mxu0 %v184
        %v210 = vpop.f32.mrf.mxu0
        %v211 = vadd.f32 0.0, %v210
        %212 = vdwg.mxu0
        %v214 = vsel %vm186, %v170, 0
        %216 = vmatpush.msra.mxu0 0.0
        %217 = vmatpush.msra.mxu0 0.0
        %218 = vmatpush.msra.mxu0 0.0
        %219 = vmatpush.msra.mxu0 0.0
        %220 = vmatpush.msra.mxu0 0.0
        %221 = vmatpush.msra.mxu0 0.0
        %222 = vmatpush.msra.mxu0 0.0
        %223 = vmatpush.msra.mxu0 0.0
        %224 = vmatpush.msra.mxu0 0.0
        %225 = vmatpush.msra.mxu0 0.0
        %226 = vmatpush.msra.mxu0 0.0
        %227 = vmatpush.msra.mxu0 0.0
        %228 = vmatpush.msra.mxu0 0.0
        %229 = vmatpush.msra.mxu0 0.0
        %230 = vmatpush.msra.mxu0 0.0
        %231 = vmatpush.msra.mxu0 %v214
        %232 = vmatmul.f32.gmra.mxu0 %v181
        %v233 = vpop.f32.mrf.mxu0
        %v234 = vadd.f32 0.0, %v233
        %235 = vmatmul.f32.gmra.mxu0 %v184
        %v236 = vpop.f32.mrf.mxu0
        %v237 = vadd.f32 0.0, %v236
        %238 = vdwg.mxu0
        %v240 = vsel %vm186, %v171, 0
        %242 = vmatpush.msra.mxu0 0.0
        %243 = vmatpush.msra.mxu0 0.0
        %244 = vmatpush.msra.mxu0 0.0
        %245 = vmatpush.msra.mxu0 0.0
        %246 = vmatpush.msra.mxu0 0.0
        %247 = vmatpush.msra.mxu0 0.0
        %248 = vmatpush.msra.mxu0 0.0
        %249 = vmatpush.msra.mxu0 0.0
        %250 = vmatpush.msra.mxu0 0.0
        %251 = vmatpush.msra.mxu0 0.0
        %252 = vmatpush.msra.mxu0 0.0
        %253 = vmatpush.msra.mxu0 0.0
        %254 = vmatpush.msra.mxu0 0.0
        %255 = vmatpush.msra.mxu0 0.0
        %256 = vmatpush.msra.mxu0 0.0
        %257 = vmatpush.msra.mxu0 %v240
        %258 = vmatmul.f32.gmra.mxu0 %v181
        %v259 = vpop.f32.mrf.mxu0
        %v260 = vadd.f32 0.0, %v259
        %261 = vmatmul.f32.gmra.mxu0 %v184
        %v262 = vpop.f32.mrf.mxu0
        %v263 = vadd.f32 0.0, %v262
        %264 = vdwg.mxu0
        %v266 = vsel %vm186, %v172, 0
        %268 = vmatpush.msra.mxu0 0.0
        %269 = vmatpush.msra.mxu0 0.0
        %270 = vmatpush.msra.mxu0 0.0
        %271 = vmatpush.msra.mxu0 0.0
        %272 = vmatpush.msra.mxu0 0.0
        %273 = vmatpush.msra.mxu0 0.0
        %274 = vmatpush.msra.mxu0 0.0
        %275 = vmatpush.msra.mxu0 0.0
        %276 = vmatpush.msra.mxu0 0.0
        %277 = vmatpush.msra.mxu0 0.0
        %278 = vmatpush.msra.mxu0 0.0
        %279 = vmatpush.msra.mxu0 0.0
        %280 = vmatpush.msra.mxu0 0.0
        %281 = vmatpush.msra.mxu0 0.0
        %282 = vmatpush.msra.mxu0 0.0
        %283 = vmatpush.msra.mxu0 %v266
        %284 = vmatmul.f32.gmra.mxu0 %v181
        %v285 = vpop.f32.mrf.mxu0
        %v286 = vadd.f32 0.0, %v285
        %287 = vmatmul.f32.gmra.mxu0 %v184
        %v288 = vpop.f32.mrf.mxu0
        %v289 = vadd.f32 0.0, %v288
        %290 = vdwg.mxu0
        %v292 = vsel %vm186, %v173, 0
        %294 = vmatpush.msra.mxu0 0.0
        %295 = vmatpush.msra.mxu0 0.0
        %296 = vmatpush.msra.mxu0 0.0
        %297 = vmatpush.msra.mxu0 0.0
        %298 = vmatpush.msra.mxu0 0.0
        %299 = vmatpush.msra.mxu0 0.0
        %300 = vmatpush.msra.mxu0 0.0
        %301 = vmatpush.msra.mxu0 0.0
        %302 = vmatpush.msra.mxu0 0.0
        %303 = vmatpush.msra.mxu0 0.0
        %304 = vmatpush.msra.mxu0 0.0
        %305 = vmatpush.msra.mxu0 0.0
        %306 = vmatpush.msra.mxu0 0.0
        %307 = vmatpush.msra.mxu0 0.0
        %308 = vmatpush.msra.mxu0 0.0
        %309 = vmatpush.msra.mxu0 %v292
        %310 = vmatmul.f32.gmra.mxu0 %v181
        %v311 = vpop.f32.mrf.mxu0
        %v312 = vadd.f32 0.0, %v311
        %313 = vmatmul.f32.gmra.mxu0 %v184
        %v314 = vpop.f32.mrf.mxu0
        %v315 = vadd.f32 0.0, %v314
        %316 = vdwg.mxu0
        %v318 = vsel %vm186, %v174, 0
        %320 = vmatpush.msra.mxu0 0.0
        %321 = vmatpush.msra.mxu0 0.0
        %322 = vmatpush.msra.mxu0 0.0
        %323 = vmatpush.msra.mxu0 0.0
        %324 = vmatpush.msra.mxu0 0.0
        %325 = vmatpush.msra.mxu0 0.0
        %326 = vmatpush.msra.mxu0 0.0
        %327 = vmatpush.msra.mxu0 0.0
        %328 = vmatpush.msra.mxu0 0.0
        %329 = vmatpush.msra.mxu0 0.0
        %330 = vmatpush.msra.mxu0 0.0
        %331 = vmatpush.msra.mxu0 0.0
        %332 = vmatpush.msra.mxu0 0.0
        %333 = vmatpush.msra.mxu0 0.0
        %334 = vmatpush.msra.mxu0 0.0
        %335 = vmatpush.msra.mxu0 %v318
        %336 = vmatmul.f32.gmra.mxu0 %v181
        %v337 = vpop.f32.mrf.mxu0
        %v338 = vadd.f32 0.0, %v337
        %339 = vmatmul.f32.gmra.mxu0 %v184
        %v340 = vpop.f32.mrf.mxu0
        %v341 = vadd.f32 0.0, %v340
        %342 = vdwg.mxu0
        %v344 = vsel %vm186, %v175, 0
        %346 = vmatpush.msra.mxu0 0.0
        %347 = vmatpush.msra.mxu0 0.0
        %348 = vmatpush.msra.mxu0 0.0
        %349 = vmatpush.msra.mxu0 0.0
        %350 = vmatpush.msra.mxu0 0.0
        %351 = vmatpush.msra.mxu0 0.0
        %352 = vmatpush.msra.mxu0 0.0
        %353 = vmatpush.msra.mxu0 0.0
        %354 = vmatpush.msra.mxu0 0.0
        %355 = vmatpush.msra.mxu0 0.0
        %356 = vmatpush.msra.mxu0 0.0
        %357 = vmatpush.msra.mxu0 0.0
        %358 = vmatpush.msra.mxu0 0.0
        %359 = vmatpush.msra.mxu0 0.0
        %360 = vmatpush.msra.mxu0 0.0
        %361 = vmatpush.msra.mxu0 %v344
        %362 = vmatmul.f32.gmra.mxu0 %v181
        %v363 = vpop.f32.mrf.mxu0
        %v364 = vadd.f32 0.0, %v363
        %365 = vmatmul.f32.gmra.mxu0 %v184
        %v366 = vpop.f32.mrf.mxu0
        %v367 = vadd.f32 0.0, %v366
        %368 = vdwg.mxu0
        %v370 = vsel %vm186, %v176, 0
        %372 = vmatpush.msra.mxu0 0.0
        %373 = vmatpush.msra.mxu0 0.0
        %374 = vmatpush.msra.mxu0 0.0
        %375 = vmatpush.msra.mxu0 0.0
        %376 = vmatpush.msra.mxu0 0.0
        %377 = vmatpush.msra.mxu0 0.0
        %378 = vmatpush.msra.mxu0 0.0
        %379 = vmatpush.msra.mxu0 0.0
        %380 = vmatpush.msra.mxu0 0.0
        %381 = vmatpush.msra.mxu0 0.0
        %382 = vmatpush.msra.mxu0 0.0
        %383 = vmatpush.msra.mxu0 0.0
        %384 = vmatpush.msra.mxu0 0.0
        %385 = vmatpush.msra.mxu0 0.0
        %386 = vmatpush.msra.mxu0 0.0
        %387 = vmatpush.msra.mxu0 %v370
        %388 = vmatmul.f32.gmra.mxu0 %v181
        %v389 = vpop.f32.mrf.mxu0
        %v390 = vadd.f32 0.0, %v389
        %391 = vmatmul.f32.gmra.mxu0 %v184
        %v392 = vpop.f32.mrf.mxu0
        %v393 = vadd.f32 0.0, %v392
        %394 = vdwg.mxu0
        %v395 = vld [vmem:[%s2] sm:$0xf]
        %v397 = vsel %vm179, %v208, 0
        %v400 = vsel %vm179, %v211, 0
        %v403 = vsel %vm186, %v395, 0
        %405 = vmatpush.msra.mxu0 0.0
        %406 = vmatpush.msra.mxu0 0.0
        %407 = vmatpush.msra.mxu0 0.0
        %408 = vmatpush.msra.mxu0 0.0
        %409 = vmatpush.msra.mxu0 0.0
        %410 = vmatpush.msra.mxu0 0.0
        %411 = vmatpush.msra.mxu0 0.0
        %412 = vmatpush.msra.mxu0 0.0
        %413 = vmatpush.msra.mxu0 0.0
        %414 = vmatpush.msra.mxu0 0.0
        %415 = vmatpush.msra.mxu0 0.0
        %416 = vmatpush.msra.mxu0 0.0
        %417 = vmatpush.msra.mxu0 0.0
        %418 = vmatpush.msra.mxu0 0.0
        %419 = vmatpush.msra.mxu0 0.0
        %420 = vmatpush.msra.mxu0 %v403
        %421 = vmatmul.f32.gmra.mxu0 %v397
        %v422 = vpop.f32.mrf.mxu0
        %v423 = vadd.f32 0.0, %v422
        %424 = vmatmul.f32.gmra.mxu0 %v400
        %v425 = vpop.f32.mrf.mxu0
        %v426 = vadd.f32 0.0, %v425
        %427 = vdwg.mxu0
        %v429 = vsel %vm179, %v234, 0
        %v432 = vsel %vm179, %v237, 0
        %434 = vmatpush.msra.mxu0 0.0
        %435 = vmatpush.msra.mxu0 0.0
        %436 = vmatpush.msra.mxu0 0.0
        %437 = vmatpush.msra.mxu0 0.0
        %438 = vmatpush.msra.mxu0 0.0
        %439 = vmatpush.msra.mxu0 0.0
        %440 = vmatpush.msra.mxu0 0.0
        %441 = vmatpush.msra.mxu0 0.0
        %442 = vmatpush.msra.mxu0 0.0
        %443 = vmatpush.msra.mxu0 0.0
        %444 = vmatpush.msra.mxu0 0.0
        %445 = vmatpush.msra.mxu0 0.0
        %446 = vmatpush.msra.mxu0 0.0
        %447 = vmatpush.msra.mxu0 0.0
        %448 = vmatpush.msra.mxu0 0.0
        %449 = vmatpush.msra.mxu0 %v403
        %450 = vmatmul.f32.gmra.mxu0 %v429
        %v451 = vpop.f32.mrf.mxu0
        %v452 = vadd.f32 0.0, %v451
        %453 = vmatmul.f32.gmra.mxu0 %v432
        %v454 = vpop.f32.mrf.mxu0
        %v455 = vadd.f32 0.0, %v454
        %456 = vdwg.mxu0
        %v458 = vsel %vm179, %v260, 0
        %v461 = vsel %vm179, %v263, 0
        %463 = vmatpush.msra.mxu0 0.0
        %464 = vmatpush.msra.mxu0 0.0
        %465 = vmatpush.msra.mxu0 0.0
        %466 = vmatpush.msra.mxu0 0.0
        %467 = vmatpush.msra.mxu0 0.0
        %468 = vmatpush.msra.mxu0 0.0
        %469 = vmatpush.msra.mxu0 0.0
        %470 = vmatpush.msra.mxu0 0.0
        %471 = vmatpush.msra.mxu0 0.0
        %472 = vmatpush.msra.mxu0 0.0
        %473 = vmatpush.msra.mxu0 0.0
        %474 = vmatpush.msra.mxu0 0.0
        %475 = vmatpush.msra.mxu0 0.0
        %476 = vmatpush.msra.mxu0 0.0
        %477 = vmatpush.msra.mxu0 0.0
        %478 = vmatpush.msra.mxu0 %v403
        %479 = vmatmul.f32.gmra.mxu0 %v458
        %v480 = vpop.f32.mrf.mxu0
        %v481 = vadd.f32 0.0, %v480
        %482 = vmatmul.f32.gmra.mxu0 %v461
        %v483 = vpop.f32.mrf.mxu0
        %v484 = vadd.f32 0.0, %v483
        %485 = vdwg.mxu0
        %v487 = vsel %vm179, %v286, 0
        %v490 = vsel %vm179, %v289, 0
        %492 = vmatpush.msra.mxu0 0.0
        %493 = vmatpush.msra.mxu0 0.0
        %494 = vmatpush.msra.mxu0 0.0
        %495 = vmatpush.msra.mxu0 0.0
        %496 = vmatpush.msra.mxu0 0.0
        %497 = vmatpush.msra.mxu0 0.0
        %498 = vmatpush.msra.mxu0 0.0
        %499 = vmatpush.msra.mxu0 0.0
        %500 = vmatpush.msra.mxu0 0.0
        %501 = vmatpush.msra.mxu0 0.0
        %502 = vmatpush.msra.mxu0 0.0
        %503 = vmatpush.msra.mxu0 0.0
        %504 = vmatpush.msra.mxu0 0.0
        %505 = vmatpush.msra.mxu0 0.0
        %506 = vmatpush.msra.mxu0 0.0
        %507 = vmatpush.msra.mxu0 %v403
        %508 = vmatmul.f32.gmra.mxu0 %v487
        %v509 = vpop.f32.mrf.mxu0
        %v510 = vadd.f32 0.0, %v509
        %511 = vmatmul.f32.gmra.mxu0 %v490
        %v512 = vpop.f32.mrf.mxu0
        %v513 = vadd.f32 0.0, %v512
        %514 = vdwg.mxu0
        %v516 = vsel %vm179, %v312, 0
        %v519 = vsel %vm179, %v315, 0
        %521 = vmatpush.msra.mxu0 0.0
        %522 = vmatpush.msra.mxu0 0.0
        %523 = vmatpush.msra.mxu0 0.0
        %524 = vmatpush.msra.mxu0 0.0
        %525 = vmatpush.msra.mxu0 0.0
        %526 = vmatpush.msra.mxu0 0.0
        %527 = vmatpush.msra.mxu0 0.0
        %528 = vmatpush.msra.mxu0 0.0
        %529 = vmatpush.msra.mxu0 0.0
        %530 = vmatpush.msra.mxu0 0.0
        %531 = vmatpush.msra.mxu0 0.0
        %532 = vmatpush.msra.mxu0 0.0
        %533 = vmatpush.msra.mxu0 0.0
        %534 = vmatpush.msra.mxu0 0.0
        %535 = vmatpush.msra.mxu0 0.0
        %536 = vmatpush.msra.mxu0 %v403
        %537 = vmatmul.f32.gmra.mxu0 %v516
        %v538 = vpop.f32.mrf.mxu0
        %v539 = vadd.f32 0.0, %v538
        %540 = vmatmul.f32.gmra.mxu0 %v519
        %v541 = vpop.f32.mrf.mxu0
        %v542 = vadd.f32 0.0, %v541
        %543 = vdwg.mxu0
        %v545 = vsel %vm179, %v338, 0
        %v548 = vsel %vm179, %v341, 0
        %550 = vmatpush.msra.mxu0 0.0
        %551 = vmatpush.msra.mxu0 0.0
        %552 = vmatpush.msra.mxu0 0.0
        %553 = vmatpush.msra.mxu0 0.0
        %554 = vmatpush.msra.mxu0 0.0
        %555 = vmatpush.msra.mxu0 0.0
        %556 = vmatpush.msra.mxu0 0.0
        %557 = vmatpush.msra.mxu0 0.0
        %558 = vmatpush.msra.mxu0 0.0
        %559 = vmatpush.msra.mxu0 0.0
        %560 = vmatpush.msra.mxu0 0.0
        %561 = vmatpush.msra.mxu0 0.0
        %562 = vmatpush.msra.mxu0 0.0
        %563 = vmatpush.msra.mxu0 0.0
        %564 = vmatpush.msra.mxu0 0.0
        %565 = vmatpush.msra.mxu0 %v403
        %566 = vmatmul.f32.gmra.mxu0 %v545
        %v567 = vpop.f32.mrf.mxu0
        %v568 = vadd.f32 0.0, %v567
        %569 = vmatmul.f32.gmra.mxu0 %v548
        %v570 = vpop.f32.mrf.mxu0
        %v571 = vadd.f32 0.0, %v570
        %572 = vdwg.mxu0
        %v574 = vsel %vm179, %v364, 0
        %v577 = vsel %vm179, %v367, 0
        %579 = vmatpush.msra.mxu0 0.0
        %580 = vmatpush.msra.mxu0 0.0
        %581 = vmatpush.msra.mxu0 0.0
        %582 = vmatpush.msra.mxu0 0.0
        %583 = vmatpush.msra.mxu0 0.0
        %584 = vmatpush.msra.mxu0 0.0
        %585 = vmatpush.msra.mxu0 0.0
        %586 = vmatpush.msra.mxu0 0.0
        %587 = vmatpush.msra.mxu0 0.0
        %588 = vmatpush.msra.mxu0 0.0
        %589 = vmatpush.msra.mxu0 0.0
        %590 = vmatpush.msra.mxu0 0.0
        %591 = vmatpush.msra.mxu0 0.0
        %592 = vmatpush.msra.mxu0 0.0
        %593 = vmatpush.msra.mxu0 0.0
        %594 = vmatpush.msra.mxu0 %v403
        %595 = vmatmul.f32.gmra.mxu0 %v574
        %v596 = vpop.f32.mrf.mxu0
        %v597 = vadd.f32 0.0, %v596
        %598 = vmatmul.f32.gmra.mxu0 %v577
        %v599 = vpop.f32.mrf.mxu0
        %v600 = vadd.f32 0.0, %v599
        %601 = vdwg.mxu0
        %v603 = vsel %vm179, %v390, 0
        %v606 = vsel %vm179, %v393, 0
        %608 = vmatpush.msra.mxu0 0.0
        %609 = vmatpush.msra.mxu0 0.0
        %610 = vmatpush.msra.mxu0 0.0
        %611 = vmatpush.msra.mxu0 0.0
        %612 = vmatpush.msra.mxu0 0.0
        %613 = vmatpush.msra.mxu0 0.0
        %614 = vmatpush.msra.mxu0 0.0
        %615 = vmatpush.msra.mxu0 0.0
        %616 = vmatpush.msra.mxu0 0.0
        %617 = vmatpush.msra.mxu0 0.0
        %618 = vmatpush.msra.mxu0 0.0
        %619 = vmatpush.msra.mxu0 0.0
        %620 = vmatpush.msra.mxu0 0.0
        %621 = vmatpush.msra.mxu0 0.0
        %622 = vmatpush.msra.mxu0 0.0
        %623 = vmatpush.msra.mxu0 %v403
        %624 = vmatmul.f32.gmra.mxu0 %v603
        %v625 = vpop.f32.mrf.mxu0
        %v626 = vadd.f32 0.0, %v625
        %627 = vmatmul.f32.gmra.mxu0 %v606
        %v628 = vpop.f32.mrf.mxu0
        %v629 = vadd.f32 0.0, %v628
        %630 = vdwg.mxu0
        %vm631 = vcmask 130048
        %632 = vst.msk [vmem:[%s163] sm:$0xff] %vm631, %v423
        %633 = vst.msk [vmem:[%s163 + $0x8] sm:$0xff] %vm631, %v426
        %634 = vst.msk [vmem:[%s163 + $0x10] sm:$0xff] %vm631, %v452
        %635 = vst.msk [vmem:[%s163 + $0x18] sm:$0xff] %vm631, %v455
        %636 = vst.msk [vmem:[%s163 + $0x20] sm:$0xff] %vm631, %v481
        %637 = vst.msk [vmem:[%s163 + $0x28] sm:$0xff] %vm631, %v484
        %638 = vst.msk [vmem:[%s163 + $0x30] sm:$0xff] %vm631, %v510
        %639 = vst.msk [vmem:[%s163 + $0x38] sm:$0xff] %vm631, %v513
        %640 = vst.msk [vmem:[%s163 + $0x40] sm:$0xff] %vm631, %v539
        %641 = vst.msk [vmem:[%s163 + $0x48] sm:$0xff] %vm631, %v542
        %642 = vst.msk [vmem:[%s163 + $0x50] sm:$0xff] %vm631, %v568
        %643 = vst.msk [vmem:[%s163 + $0x58] sm:$0xff] %vm631, %v571
        %644 = vst.msk [vmem:[%s163 + $0x60] sm:$0xff] %vm631, %v597
        %645 = vst.msk [vmem:[%s163 + $0x68] sm:$0xff] %vm631, %v600
        %646 = vst.msk [vmem:[%s163 + $0x70] sm:$0xff] %vm631, %v626
        %647 = vst.msk [vmem:[%s163 + $0x78] sm:$0xff] %vm631, %v629
        %s648 = sand.u32 %s93, 1
        %s649 = scalar_lea.sflag [#allocation3], %s648
        %s650 = sand.u32 %s93, 1
        %s651 = smul.addr %s650, 128
        %s652 = scalar_lea.vmem [#allocation2], %s651
        // Predicated region
        $region33: #{_lambda_.11} parent=31 // pred_check
          %p653 = pneg %p103
        $region34: #{_lambda_.11} parent=31 // pred_check_branch
          %655 = sbr.rel (%p653) target = $region36
        $region35: #{_lambda_.11} parent=31 // pred_region
          %657 = vsyncadd %s649, 0
          %s658 = smul.addr %s17, 16
          %s659 = smul.addr %s658, 8
          %s660 = scalar_lea.hbm %s3, %s659
          %s661 = sshll.u32 %s652, 4
          %s662 = int_to_ptr.vmem [resolvable:$true] %s661
          %s663 = sshll.u32 %s660, 4
          %s664 = int_to_ptr.hbm [resolvable:$true] %s663
          %669 = dma.vmem_to_hbm [thread:$0]  %s662, 2048, %s664, %s649, 128, 128, 8
        $region36: #{_lambda_.11} parent=31 // pred_fallthru
          _
      $region32: #{_lambda_.11} parent=5 // pred_fallthru
        _
      %p670 = scmp.le.s32.totalorder 2, %s12
      // Predicated region
      $region37: #{_lambda_.11} parent=5 // pred_check
        %p671 = pneg %p670
      $region38: #{_lambda_.11} parent=5 // pred_check_branch
        %673 = sbr.rel (%p671) target = $region40
      $region39: #{_lambda_.11} parent=5 // pred_region
        %s674 = ssub.s32 %s12, 2
        // Predicated region
        $region41: #{_lambda_.11} parent=39 // pred_check
          %p675 = pneg %p109
        $region42: #{_lambda_.11} parent=39 // pred_check_branch
          %677 = sbr.rel (%p675) target = $region44
        $region43: #{_lambda_.11} parent=39 // pred_region
          %s678 = sand.u32 %s94, 1
          %s679 = scalar_lea.sflag [#allocation3], %s678
          %s680 = sand.u32 %s94, 1
          %s681 = smul.addr %s680, 128
          %s682 = scalar_lea.vmem [#allocation2], %s681
          %684 = dma.done %s679, 2048
        $region44: #{_lambda_.11} parent=39 // pred_fallthru
          _
      $region40: #{_lambda_.11} parent=5 // pred_fallthru
        _
    $region6: #{_lambda_.11} parent=1 // loop_footer
      %s16 = sadd.s32 1, %s12
    $region7: #{_lambda_.11} parent=1 // loop_footer_branch
      %11 = sbr.rel target = $region3
    $region8: #{_lambda_.11} parent=1 // loop_exit
      _
    %685 = vsyncpa [#allocation3], 1
    %s686 = scalar_lea.sflag [#allocation3], 1
    %687 = vsyncpa %s686, 1

</llo_original>
